<compile_context>
chip_gen: v6e
topology: v6e:2x2x1
jax: 0.10.0
libtpu: 0.0.40
codegen_flags: <defaults>
</compile_context>

<pallas_src>
import functools

import numpy as np
import jax
import jax.numpy as jnp
from jax.experimental import pallas as pl
from jax.experimental.pallas import tpu as pltpu


def _round_up(x, m):
    return (x + m - 1) // m * m


# --------------------------------------------------------------------------
# Pallas kernels
# --------------------------------------------------------------------------

def _matmul_affine_kernel(a_ref, w_ref, scale_ref, shift_ref, o_ref, *, apply_relu):
    # out = maybe_relu((a @ w) * scale + shift); bf16 operands, f32 accumulation,
    # f32 epilogue (scale/shift broadcast over rows).
    acc = jnp.dot(a_ref[...], w_ref[...], preferred_element_type=jnp.float32)
    out = acc * scale_ref[...] + shift_ref[...]
    if apply_relu:
        out = jnp.maximum(out, 0.0)
    o_ref[...] = out.astype(o_ref.dtype)


_TM_CANDIDATES = (512, 448, 384, 320, 256, 224, 192, 160, 128, 112, 96, 80, 64, 48, 32, 16)


def matmul_affine(a, w, scale, shift, *, apply_relu):
    """maybe_relu((a:[M,K] @ w:[K,N]) * scale:[1,N] + shift:[1,N]) -> [M,N] float32.

    N is padded to a multiple of 128 internally (lane-dense, unmasked stores) and M is
    tiled with a parallel grid (padded if no exact-divisor tile exists). Operands are
    cast to bf16; accumulation and the affine/ReLU epilogue stay in f32.
    """
    M, K = a.shape
    _, N = w.shape

    # ---- lane-dense output: pad N up to a multiple of 128 ----
    Np = _round_up(max(N, 128), 128)
    if Np != N:
        w = jnp.pad(w, ((0, 0), (0, Np - N)))
        scale = jnp.pad(scale, ((0, 0), (0, Np - N)))
        shift = jnp.pad(shift, ((0, 0), (0, Np - N)))

    # ---- M tiling: prefer an exact divisor (multiple of 16 for bf16 sublane
    #      packing); otherwise pad M so the grid divides evenly (no grid-of-one
    #      full-M fallback). ----
    tm = None
    for cand in _TM_CANDIDATES:
        if cand <= M and M % cand == 0:
            tm = cand
            break
    if tm is None:
        tm = min(256, _round_up(M, 16))
    Mp = _round_up(M, tm)
    if Mp != M:
        a = jnp.pad(a, ((0, Mp - M), (0, 0)))

    # bf16 operands for the MXU; epilogue params stay f32.
    a = a.astype(jnp.bfloat16)
    w = w.astype(jnp.bfloat16)
    scale = scale.astype(jnp.float32)
    shift = shift.astype(jnp.float32)

    # Explicit VMEM budget: double-buffered a/out tiles + resident (double-buffered)
    # weight + scale/shift, with headroom; clamped to the v7x-safe range.
    vmem_bytes = (2 * tm * K * 2) + (2 * K * Np * 2) + (2 * tm * Np * 4) + (4 * Np * 4)
    vmem_limit = int(min(64 << 20, max(32 << 20, 2 * vmem_bytes)))

    kernel = functools.partial(_matmul_affine_kernel, apply_relu=apply_relu)
    out = pl.pallas_call(
        kernel,
        out_shape=jax.ShapeDtypeStruct((Mp, Np), jnp.float32),
        grid_spec=pltpu.PrefetchScalarGridSpec(
            num_scalar_prefetch=0,
            grid=(Mp // tm,),
            in_specs=[
                pl.BlockSpec((tm, K), lambda i: (i, 0)),
                pl.BlockSpec((K, Np), lambda i: (0, 0)),
                pl.BlockSpec((1, Np), lambda i: (0, 0)),
                pl.BlockSpec((1, Np), lambda i: (0, 0)),
            ],
            out_specs=pl.BlockSpec((tm, Np), lambda i: (i, 0)),
        ),
        compiler_params=pltpu.CompilerParams(
            dimension_semantics=("parallel",),
            vmem_limit_bytes=vmem_limit,
        ),
    )(a, w, scale, shift)
    return out[:M, :N]


def _max4_kernel(a_ref, b_ref, c_ref, d_ref, o_ref):
    # MaxPool2d(2,2) reduction: elementwise max over the four shifted views.
    o_ref[...] = jnp.maximum(
        jnp.maximum(a_ref[...], b_ref[...]),
        jnp.maximum(c_ref[...], d_ref[...]),
    )


def max4(a, b, c, d):
    """Elementwise max of four identically shaped 2-D arrays (gridded, parallel)."""
    R, C = a.shape
    tr = None
    for cand in (512, 256, 128, 64, 32, 16, 8):
        if cand <= R and R % cand == 0:
            tr = cand
            break
    if tr is None:
        if R <= 2048:
            tr = R                      # full-extent block (always legal)
        else:
            tr = 256                    # pad rows below
    Rp = _round_up(R, tr)
    if Rp != R:
        pad = ((0, Rp - R), (0, 0))
        a, b, c, d = (jnp.pad(v, pad) for v in (a, b, c, d))

    spec = pl.BlockSpec((tr, C), lambda i: (i, 0))
    out = pl.pallas_call(
        _max4_kernel,
        out_shape=jax.ShapeDtypeStruct((Rp, C), a.dtype),
        grid_spec=pltpu.PrefetchScalarGridSpec(
            num_scalar_prefetch=0,
            grid=(Rp // tr,),
            in_specs=[spec, spec, spec, spec],
            out_specs=spec,
        ),
        compiler_params=pltpu.CompilerParams(dimension_semantics=("parallel",)),
    )(a, b, c, d)
    return out[:R]


# --------------------------------------------------------------------------
# Glue (plain JAX): im2col, BN folding, pooling views, FC weight permutation
# --------------------------------------------------------------------------

def im2col(x, k, pad):
    """x: NHWC -> patches [N*H*W, k*k*C] (same-padding, stride 1)."""
    N, H, W, C = x.shape
    xp = jnp.pad(x, ((0, 0), (pad, pad), (pad, pad), (0, 0)))
    cols = []
    for di in range(k):
        for dj in range(k):
            cols.append(xp[:, di:di + H, dj:dj + W, :])
    p = jnp.stack(cols, axis=3)            # [N, H, W, k*k, C]
    return p.reshape(N * H * W, k * k * C)


def bn_fold(gamma, beta, mean, var, conv_bias, eps=1e-5):
    """Fold Conv bias + BatchNorm (inference) into a per-channel scale/shift."""
    scale = gamma / jnp.sqrt(var + eps)
    shift = beta + scale * (conv_bias - mean)
    return scale[None, :].astype(jnp.float32), shift[None, :].astype(jnp.float32)


def maxpool2x2(x):
    """x: NHWC -> NHWC halved spatially (Pallas kernel does the max reduction)."""
    N, H, W, C = x.shape
    Ho, Wo = H // 2, W // 2
    views = (
        x[:, 0::2, 0::2, :],
        x[:, 0::2, 1::2, :],
        x[:, 1::2, 0::2, :],
        x[:, 1::2, 1::2, :],
    )
    # Lane-dense 2-D factorization of the flattened views (last dim a multiple of 128
    # whenever possible -> unmasked vector stores in the kernel).
    total = N * Ho * Wo * C
    cols = Wo * C
    for cand in (1024, 512, 256, 128):
        if total % cand == 0:
            cols = cand
            break
    shape2d = (total // cols, cols)
    a, b, c, d = (v.reshape(shape2d) for v in views)
    # TODO(synk): fuse the 2x2 pool into a single Pallas kernel that reads the pre-pool
    # NHWC tensor directly (avoids materializing the 4 strided HBM views).
    return max4(a, b, c, d).reshape(N, Ho, Wo, C)


def _fc_weight_nhwc(fc_w, H, W, C):
    """Permute Linear weight columns from PyTorch NCHW-flatten order to the NHWC-flatten
    order used by the kernels (one-time, weight-side shuffle)."""
    idx = np.arange(H * W * C)
    c = idx % C
    hw = idx // C
    h = hw // W
    w = hw % W
    chw = (c * H + h) * W + w          # NCHW flat index for NHWC flat position `idx`
    return fc_w[:, chw]                # [num_classes, H*W*C], columns in NHWC order


# --------------------------------------------------------------------------
# Model
# --------------------------------------------------------------------------

def init_params(key, num_classes=10):
    ks = jax.random.split(key, 8)
    p = {}
    # conv1: Conv2d(1, 32, k=5)  -- weights stored HWIO [5,5,1,32]
    p["w1"] = 0.1 * jax.random.normal(ks[0], (5, 5, 1, 32), jnp.float32)
    p["cb1"] = 0.05 * jax.random.normal(ks[1], (32,), jnp.float32)
    p["g1"] = 1.0 + 0.1 * jax.random.normal(ks[2], (32,), jnp.float32)
    p["be1"] = 0.05 * jax.random.normal(ks[3], (32,), jnp.float32)
    p["m1"] = jnp.zeros((32,), jnp.float32)
    p["v1"] = jnp.ones((32,), jnp.float32)
    # conv2: Conv2d(32, 64, k=5) -- HWIO [5,5,32,64]
    p["w2"] = 0.05 * jax.random.normal(ks[4], (5, 5, 32, 64), jnp.float32)
    p["cb2"] = 0.05 * jax.random.normal(ks[5], (64,), jnp.float32)
    p["g2"] = 1.0 + 0.1 * jax.random.normal(ks[6], (64,), jnp.float32)
    p["be2"] = 0.05 * jax.random.normal(ks[7], (64,), jnp.float32)
    p["m2"] = jnp.zeros((64,), jnp.float32)
    p["v2"] = jnp.ones((64,), jnp.float32)
    # fc: Linear(7*7*64, num_classes)  (PyTorch layout [out, in], NCHW-flatten order)
    kfc_w, kfc_b = jax.random.split(jax.random.fold_in(key, 123))
    p["fc_w"] = 0.02 * jax.random.normal(kfc_w, (num_classes, 7 * 7 * 64), jnp.float32)
    p["fc_b"] = 0.02 * jax.random.normal(kfc_b, (num_classes,), jnp.float32)
    return p


def simple_model_forward(x_nchw, params):
    # layout: input NCHW (PyTorch convention) -> NHWC for TPU kernels.
    x = jnp.transpose(x_nchw, (0, 2, 3, 1)).astype(jnp.float32)   # [N, 28, 28, 1]
    N = x.shape[0]

    # --- conv1 block: Conv(1->32,k5,p2) + BN + ReLU + MaxPool(2,2) ---
    p1 = im2col(x, 5, 2)                                          # [N*784, 25]
    w1 = params["w1"].reshape(-1, 32)                             # [25, 32]
    s1, b1 = bn_fold(params["g1"], params["be1"], params["m1"], params["v1"], params["cb1"])
    y1 = matmul_affine(p1, w1, s1, b1, apply_relu=True)           # [N*784, 32]
    y1 = y1.reshape(N, 28, 28, 32)
    y1 = maxpool2x2(y1)                                           # [N, 14, 14, 32]

    # --- conv2 block: Conv(32->64,k5,p2) + BN + ReLU + MaxPool(2,2) ---
    # TODO(synk): fuse im2col patch assembly into the matmul kernel via halo-band DMA
    # (manual make_async_copy) to avoid materializing the 25x-expanded patch matrix.
    p2 = im2col(y1, 5, 2)                                         # [N*196, 800]
    w2 = params["w2"].reshape(-1, 64)                             # [800, 64]
    s2, b2 = bn_fold(params["g2"], params["be2"], params["m2"], params["v2"], params["cb2"])
    y2 = matmul_affine(p2, w2, s2, b2, apply_relu=True)           # [N*196, 64]
    y2 = y2.reshape(N, 14, 14, 64)
    y2 = maxpool2x2(y2)                                           # [N, 7, 7, 64]

    # --- flatten + dropout (eval => identity) + fc ---
    # NHWC flatten of activations; PyTorch's NCHW flatten order is preserved by a
    # one-time column permutation of the FC weight (no per-batch activation transpose).
    flat = y2.reshape(N, 7 * 7 * 64)                              # [N, 3136]
    w_fc = _fc_weight_nhwc(params["fc_w"], 7, 7, 64).T            # [3136, num_classes]
    # Dropout(p=0.3): inference-mode identity (PyTorch eval semantics).
    ones = jnp.ones((1, params["fc_w"].shape[0]), jnp.float32)
    fc_b = params["fc_b"][None, :]
    out = matmul_affine(flat, w_fc, ones, fc_b, apply_relu=False)  # [N, 10]
    return out


# --------------------------------------------------------------------------
# Main
# --------------------------------------------------------------------------

if __name__ == "__main__":
    key = jax.random.PRNGKey(0)
    k_x, k_p = jax.random.split(key)
    # Small, shape-consistent input: MNIST-like 28x28 single channel, batch=2.
    x = jax.random.normal(k_x, (2, 1, 28, 28), jnp.float32)
    params = init_params(k_p, num_classes=10)

    fwd = jax.jit(simple_model_forward)
    out = fwd(x, params)
    out = jax.block_until_ready(out)

    assert out.shape == (2, 10), out.shape
    assert jnp.isfinite(out).all()
    print("KERNEL_OK")
</pallas_src>

<mosaic_0001>
module attributes {stable_mosaic.version = 11 : i64} {
  func.func @_matmul_affine_kernel(%arg0: i32, %arg1: memref<224x25xbf16, #tpu.memory_space<vmem>>, %arg2: memref<25x128xbf16, #tpu.memory_space<vmem>>, %arg3: memref<1x128xf32, #tpu.memory_space<vmem>>, %arg4: memref<1x128xf32, #tpu.memory_space<vmem>>, %arg5: memref<224x128xf32, #tpu.memory_space<vmem>>) attributes {dimension_semantics = [#tpu.dimension_semantics<parallel>], iteration_bounds = array<i64: 7>, scalar_prefetch = 0 : i64, scratch_operands = 0 : i64, tpu.core_type = #tpu.core_type<tc>, window_params = [{transform_indices = @transform_0, window_bounds = array<i64: 224, 25>}, {pipeline_mode = #tpu.pipeline_mode<synchronous>, transform_indices = @transform_1, window_bounds = array<i64: 25, 128>}, {pipeline_mode = #tpu.pipeline_mode<synchronous>, transform_indices = @transform_2, window_bounds = array<i64: 1, 128>}, {pipeline_mode = #tpu.pipeline_mode<synchronous>, transform_indices = @transform_3, window_bounds = array<i64: 1, 128>}, {transform_indices = @transform_4, window_bounds = array<i64: 224, 128>}]} {
    %c0 = arith.constant 0 : index
    %c0_0 = arith.constant 0 : index
    %0 = vector.load %arg1[%c0, %c0_0] : memref<224x25xbf16, #tpu.memory_space<vmem>>, vector<224x25xbf16>
    %c0_1 = arith.constant 0 : index
    %c0_2 = arith.constant 0 : index
    %1 = vector.load %arg2[%c0_1, %c0_2] : memref<25x128xbf16, #tpu.memory_space<vmem>>, vector<25x128xbf16>
    %cst = arith.constant dense<0.000000e+00> : vector<224x128xf32>
    %2 = tpu.matmul %0, %1, %cst {dimension_numbers = #tpu.dot_dimension_numbers<[1], [0], [0], [1], [0, 0, 1, 1], [], []>} : vector<224x25xbf16>, vector<25x128xbf16>, vector<224x128xf32> -> vector<224x128xf32>
    %c0_3 = arith.constant 0 : index
    %c0_4 = arith.constant 0 : index
    %3 = vector.load %arg3[%c0_3, %c0_4] : memref<1x128xf32, #tpu.memory_space<vmem>>, vector<1x128xf32>
    %4 = vector.broadcast %3 : vector<1x128xf32> to vector<224x128xf32>
    %5 = arith.mulf %2, %4 : vector<224x128xf32>
    %c0_5 = arith.constant 0 : index
    %c0_6 = arith.constant 0 : index
    %6 = vector.load %arg4[%c0_5, %c0_6] : memref<1x128xf32, #tpu.memory_space<vmem>>, vector<1x128xf32>
    %7 = vector.broadcast %6 : vector<1x128xf32> to vector<224x128xf32>
    %8 = arith.addf %5, %7 : vector<224x128xf32>
    %cst_7 = arith.constant 0.000000e+00 : f32
    %9 = vector.broadcast %cst_7 : f32 to vector<224x128xf32>
    %10 = arith.maximumf %8, %9 : vector<224x128xf32>
    %c0_8 = arith.constant 0 : index
    %c0_9 = arith.constant 0 : index
    %11 = vector.load %arg5[%c0_8, %c0_9] : memref<224x128xf32, #tpu.memory_space<vmem>>, vector<224x128xf32>
    tpu.vector_store %arg5[%c0_8, %c0_9], %10 {strides = array<i32>} : memref<224x128xf32, #tpu.memory_space<vmem>>, vector<224x128xf32>,
    return
  }
  func.func @transform_0(%arg0: i32) -> (i32, i32) {
    %c0_i32 = arith.constant 0 : i32
    %c0_i32_0 = arith.constant 0 : i32
    return %arg0, %c0_i32 : i32, i32
  }
  func.func @transform_1(%arg0: i32) -> (i32, i32) {
    %c0_i32 = arith.constant 0 : i32
    %c0_i32_0 = arith.constant 0 : i32
    %c0_i32_1 = arith.constant 0 : i32
    return %c0_i32, %c0_i32_0 : i32, i32
  }
  func.func @transform_2(%arg0: i32) -> (i32, i32) {
    %c0_i32 = arith.constant 0 : i32
    %c0_i32_0 = arith.constant 0 : i32
    %c0_i32_1 = arith.constant 0 : i32
    return %c0_i32, %c0_i32_0 : i32, i32
  }
  func.func @transform_3(%arg0: i32) -> (i32, i32) {
    %c0_i32 = arith.constant 0 : i32
    %c0_i32_0 = arith.constant 0 : i32
    %c0_i32_1 = arith.constant 0 : i32
    return %c0_i32, %c0_i32_0 : i32, i32
  }
  func.func @transform_4(%arg0: i32) -> (i32, i32) {
    %c0_i32 = arith.constant 0 : i32
    %c0_i32_0 = arith.constant 0 : i32
    return %arg0, %c0_i32 : i32, i32
  }
}

module attributes {stable_mosaic.version = 11 : i64} {
  func.func @_max4_kernel(%arg0: i32, %arg1: memref<49x256xf32, #tpu.memory_space<vmem>>, %arg2: memref<49x256xf32, #tpu.memory_space<vmem>>, %arg3: memref<49x256xf32, #tpu.memory_space<vmem>>, %arg4: memref<49x256xf32, #tpu.memory_space<vmem>>, %arg5: memref<49x256xf32, #tpu.memory_space<vmem>>) attributes {dimension_semantics = [#tpu.dimension_semantics<parallel>], iteration_bounds = array<i64: 1>, scalar_prefetch = 0 : i64, scratch_operands = 0 : i64, tpu.core_type = #tpu.core_type<tc>, window_params = [{transform_indices = @transform_0, window_bounds = array<i64: 49, 256>}, {transform_indices = @transform_1, window_bounds = array<i64: 49, 256>}, {transform_indices = @transform_2, window_bounds = array<i64: 49, 256>}, {transform_indices = @transform_3, window_bounds = array<i64: 49, 256>}, {transform_indices = @transform_4, window_bounds = array<i64: 49, 256>}]} {
    %c0 = arith.constant 0 : index
    %c0_0 = arith.constant 0 : index
    %0 = vector.load %arg1[%c0, %c0_0] : memref<49x256xf32, #tpu.memory_space<vmem>>, vector<49x256xf32>
    %c0_1 = arith.constant 0 : index
    %c0_2 = arith.constant 0 : index
    %1 = vector.load %arg2[%c0_1, %c0_2] : memref<49x256xf32, #tpu.memory_space<vmem>>, vector<49x256xf32>
    %2 = arith.maximumf %0, %1 : vector<49x256xf32>
    %c0_3 = arith.constant 0 : index
    %c0_4 = arith.constant 0 : index
    %3 = vector.load %arg3[%c0_3, %c0_4] : memref<49x256xf32, #tpu.memory_space<vmem>>, vector<49x256xf32>
    %c0_5 = arith.constant 0 : index
    %c0_6 = arith.constant 0 : index
    %4 = vector.load %arg4[%c0_5, %c0_6] : memref<49x256xf32, #tpu.memory_space<vmem>>, vector<49x256xf32>
    %5 = arith.maximumf %3, %4 : vector<49x256xf32>
    %6 = arith.maximumf %2, %5 : vector<49x256xf32>
    %c0_7 = arith.constant 0 : index
    %c0_8 = arith.constant 0 : index
    %7 = vector.load %arg5[%c0_7, %c0_8] : memref<49x256xf32, #tpu.memory_space<vmem>>, vector<49x256xf32>
    tpu.vector_store %arg5[%c0_7, %c0_8], %6 {strides = array<i32>} : memref<49x256xf32, #tpu.memory_space<vmem>>, vector<49x256xf32>,
    return
  }
  func.func @transform_0(%arg0: i32) -> (i32, i32) {
    %c0_i32 = arith.constant 0 : i32
    %c0_i32_0 = arith.constant 0 : i32
    return %arg0, %c0_i32 : i32, i32
  }
  func.func @transform_1(%arg0: i32) -> (i32, i32) {
    %c0_i32 = arith.constant 0 : i32
    %c0_i32_0 = arith.constant 0 : i32
    return %arg0, %c0_i32 : i32, i32
  }
  func.func @transform_2(%arg0: i32) -> (i32, i32) {
    %c0_i32 = arith.constant 0 : i32
    %c0_i32_0 = arith.constant 0 : i32
    return %arg0, %c0_i32 : i32, i32
  }
  func.func @transform_3(%arg0: i32) -> (i32, i32) {
    %c0_i32 = arith.constant 0 : i32
    %c0_i32_0 = arith.constant 0 : i32
    return %arg0, %c0_i32 : i32, i32
  }
  func.func @transform_4(%arg0: i32) -> (i32, i32) {
    %c0_i32 = arith.constant 0 : i32
    %c0_i32_0 = arith.constant 0 : i32
    return %arg0, %c0_i32 : i32, i32
  }
}

module attributes {stable_mosaic.version = 11 : i64} {
  func.func @_matmul_affine_kernel(%arg0: i32, %arg1: memref<256x800xbf16, #tpu.memory_space<vmem>>, %arg2: memref<800x128xbf16, #tpu.memory_space<vmem>>, %arg3: memref<1x128xf32, #tpu.memory_space<vmem>>, %arg4: memref<1x128xf32, #tpu.memory_space<vmem>>, %arg5: memref<256x128xf32, #tpu.memory_space<vmem>>) attributes {dimension_semantics = [#tpu.dimension_semantics<parallel>], iteration_bounds = array<i64: 2>, scalar_prefetch = 0 : i64, scratch_operands = 0 : i64, tpu.core_type = #tpu.core_type<tc>, window_params = [{transform_indices = @transform_0, window_bounds = array<i64: 256, 800>}, {pipeline_mode = #tpu.pipeline_mode<synchronous>, transform_indices = @transform_1, window_bounds = array<i64: 800, 128>}, {pipeline_mode = #tpu.pipeline_mode<synchronous>, transform_indices = @transform_2, window_bounds = array<i64: 1, 128>}, {pipeline_mode = #tpu.pipeline_mode<synchronous>, transform_indices = @transform_3, window_bounds = array<i64: 1, 128>}, {transform_indices = @transform_4, window_bounds = array<i64: 256, 128>}]} {
    %c0 = arith.constant 0 : index
    %c0_0 = arith.constant 0 : index
    %0 = vector.load %arg1[%c0, %c0_0] : memref<256x800xbf16, #tpu.memory_space<vmem>>, vector<256x800xbf16>
    %c0_1 = arith.constant 0 : index
    %c0_2 = arith.constant 0 : index
    %1 = vector.load %arg2[%c0_1, %c0_2] : memref<800x128xbf16, #tpu.memory_space<vmem>>, vector<800x128xbf16>
    %cst = arith.constant dense<0.000000e+00> : vector<256x128xf32>
    %2 = tpu.matmul %0, %1, %cst {dimension_numbers = #tpu.dot_dimension_numbers<[1], [0], [0], [1], [0, 0, 1, 1], [], []>} : vector<256x800xbf16>, vector<800x128xbf16>, vector<256x128xf32> -> vector<256x128xf32>
    %c0_3 = arith.constant 0 : index
    %c0_4 = arith.constant 0 : index
    %3 = vector.load %arg3[%c0_3, %c0_4] : memref<1x128xf32, #tpu.memory_space<vmem>>, vector<1x128xf32>
    %4 = vector.broadcast %3 : vector<1x128xf32> to vector<256x128xf32>
    %5 = arith.mulf %2, %4 : vector<256x128xf32>
    %c0_5 = arith.constant 0 : index
    %c0_6 = arith.constant 0 : index
    %6 = vector.load %arg4[%c0_5, %c0_6] : memref<1x128xf32, #tpu.memory_space<vmem>>, vector<1x128xf32>
    %7 = vector.broadcast %6 : vector<1x128xf32> to vector<256x128xf32>
    %8 = arith.addf %5, %7 : vector<256x128xf32>
    %cst_7 = arith.constant 0.000000e+00 : f32
    %9 = vector.broadcast %cst_7 : f32 to vector<256x128xf32>
    %10 = arith.maximumf %8, %9 : vector<256x128xf32>
    %c0_8 = arith.constant 0 : index
    %c0_9 = arith.constant 0 : index
    %11 = vector.load %arg5[%c0_8, %c0_9] : memref<256x128xf32, #tpu.memory_space<vmem>>, vector<256x128xf32>
    tpu.vector_store %arg5[%c0_8, %c0_9], %10 {strides = array<i32>} : memref<256x128xf32, #tpu.memory_space<vmem>>, vector<256x128xf32>,
    return
  }
  func.func @transform_0(%arg0: i32) -> (i32, i32) {
    %c0_i32 = arith.constant 0 : i32
    %c0_i32_0 = arith.constant 0 : i32
    return %arg0, %c0_i32 : i32, i32
  }
  func.func @transform_1(%arg0: i32) -> (i32, i32) {
    %c0_i32 = arith.constant 0 : i32
    %c0_i32_0 = arith.constant 0 : i32
    %c0_i32_1 = arith.constant 0 : i32
    return %c0_i32, %c0_i32_0 : i32, i32
  }
  func.func @transform_2(%arg0: i32) -> (i32, i32) {
    %c0_i32 = arith.constant 0 : i32
    %c0_i32_0 = arith.constant 0 : i32
    %c0_i32_1 = arith.constant 0 : i32
    return %c0_i32, %c0_i32_0 : i32, i32
  }
  func.func @transform_3(%arg0: i32) -> (i32, i32) {
    %c0_i32 = arith.constant 0 : i32
    %c0_i32_0 = arith.constant 0 : i32
    %c0_i32_1 = arith.constant 0 : i32
    return %c0_i32, %c0_i32_0 : i32, i32
  }
  func.func @transform_4(%arg0: i32) -> (i32, i32) {
    %c0_i32 = arith.constant 0 : i32
    %c0_i32_0 = arith.constant 0 : i32
    return %arg0, %c0_i32 : i32, i32
  }
}

module attributes {stable_mosaic.version = 11 : i64} {
  func.func @_max4_kernel(%arg0: i32, %arg1: memref<49x128xf32, #tpu.memory_space<vmem>>, %arg2: memref<49x128xf32, #tpu.memory_space<vmem>>, %arg3: memref<49x128xf32, #tpu.memory_space<vmem>>, %arg4: memref<49x128xf32, #tpu.memory_space<vmem>>, %arg5: memref<49x128xf32, #tpu.memory_space<vmem>>) attributes {dimension_semantics = [#tpu.dimension_semantics<parallel>], iteration_bounds = array<i64: 1>, scalar_prefetch = 0 : i64, scratch_operands = 0 : i64, tpu.core_type = #tpu.core_type<tc>, window_params = [{transform_indices = @transform_0, window_bounds = array<i64: 49, 128>}, {transform_indices = @transform_1, window_bounds = array<i64: 49, 128>}, {transform_indices = @transform_2, window_bounds = array<i64: 49, 128>}, {transform_indices = @transform_3, window_bounds = array<i64: 49, 128>}, {transform_indices = @transform_4, window_bounds = array<i64: 49, 128>}]} {
    %c0 = arith.constant 0 : index
    %c0_0 = arith.constant 0 : index
    %0 = vector.load %arg1[%c0, %c0_0] : memref<49x128xf32, #tpu.memory_space<vmem>>, vector<49x128xf32>
    %c0_1 = arith.constant 0 : index
    %c0_2 = arith.constant 0 : index
    %1 = vector.load %arg2[%c0_1, %c0_2] : memref<49x128xf32, #tpu.memory_space<vmem>>, vector<49x128xf32>
    %2 = arith.maximumf %0, %1 : vector<49x128xf32>
    %c0_3 = arith.constant 0 : index
    %c0_4 = arith.constant 0 : index
    %3 = vector.load %arg3[%c0_3, %c0_4] : memref<49x128xf32, #tpu.memory_space<vmem>>, vector<49x128xf32>
    %c0_5 = arith.constant 0 : index
    %c0_6 = arith.constant 0 : index
    %4 = vector.load %arg4[%c0_5, %c0_6] : memref<49x128xf32, #tpu.memory_space<vmem>>, vector<49x128xf32>
    %5 = arith.maximumf %3, %4 : vector<49x128xf32>
    %6 = arith.maximumf %2, %5 : vector<49x128xf32>
    %c0_7 = arith.constant 0 : index
    %c0_8 = arith.constant 0 : index
    %7 = vector.load %arg5[%c0_7, %c0_8] : memref<49x128xf32, #tpu.memory_space<vmem>>, vector<49x128xf32>
    tpu.vector_store %arg5[%c0_7, %c0_8], %6 {strides = array<i32>} : memref<49x128xf32, #tpu.memory_space<vmem>>, vector<49x128xf32>,
    return
  }
  func.func @transform_0(%arg0: i32) -> (i32, i32) {
    %c0_i32 = arith.constant 0 : i32
    %c0_i32_0 = arith.constant 0 : i32
    return %arg0, %c0_i32 : i32, i32
  }
  func.func @transform_1(%arg0: i32) -> (i32, i32) {
    %c0_i32 = arith.constant 0 : i32
    %c0_i32_0 = arith.constant 0 : i32
    return %arg0, %c0_i32 : i32, i32
  }
  func.func @transform_2(%arg0: i32) -> (i32, i32) {
    %c0_i32 = arith.constant 0 : i32
    %c0_i32_0 = arith.constant 0 : i32
    return %arg0, %c0_i32 : i32, i32
  }
  func.func @transform_3(%arg0: i32) -> (i32, i32) {
    %c0_i32 = arith.constant 0 : i32
    %c0_i32_0 = arith.constant 0 : i32
    return %arg0, %c0_i32 : i32, i32
  }
  func.func @transform_4(%arg0: i32) -> (i32, i32) {
    %c0_i32 = arith.constant 0 : i32
    %c0_i32_0 = arith.constant 0 : i32
    return %arg0, %c0_i32 : i32, i32
  }
}

module attributes {stable_mosaic.version = 11 : i64} {
  func.func @_matmul_affine_kernel(%arg0: i32, %arg1: memref<16x3136xbf16, #tpu.memory_space<vmem>>, %arg2: memref<3136x128xbf16, #tpu.memory_space<vmem>>, %arg3: memref<1x128xf32, #tpu.memory_space<vmem>>, %arg4: memref<1x128xf32, #tpu.memory_space<vmem>>, %arg5: memref<16x128xf32, #tpu.memory_space<vmem>>) attributes {dimension_semantics = [#tpu.dimension_semantics<parallel>], iteration_bounds = array<i64: 1>, scalar_prefetch = 0 : i64, scratch_operands = 0 : i64, tpu.core_type = #tpu.core_type<tc>, window_params = [{transform_indices = @transform_0, window_bounds = array<i64: 16, 3136>}, {pipeline_mode = #tpu.pipeline_mode<synchronous>, transform_indices = @transform_1, window_bounds = array<i64: 3136, 128>}, {pipeline_mode = #tpu.pipeline_mode<synchronous>, transform_indices = @transform_2, window_bounds = array<i64: 1, 128>}, {pipeline_mode = #tpu.pipeline_mode<synchronous>, transform_indices = @transform_3, window_bounds = array<i64: 1, 128>}, {transform_indices = @transform_4, window_bounds = array<i64: 16, 128>}]} {
    %c0 = arith.constant 0 : index
    %c0_0 = arith.constant 0 : index
    %0 = vector.load %arg1[%c0, %c0_0] : memref<16x3136xbf16, #tpu.memory_space<vmem>>, vector<16x3136xbf16>
    %c0_1 = arith.constant 0 : index
    %c0_2 = arith.constant 0 : index
    %1 = vector.load %arg2[%c0_1, %c0_2] : memref<3136x128xbf16, #tpu.memory_space<vmem>>, vector<3136x128xbf16>
    %cst = arith.constant dense<0.000000e+00> : vector<16x128xf32>
    %2 = tpu.matmul %0, %1, %cst {dimension_numbers = #tpu.dot_dimension_numbers<[1], [0], [0], [1], [0, 0, 1, 1], [], []>} : vector<16x3136xbf16>, vector<3136x128xbf16>, vector<16x128xf32> -> vector<16x128xf32>
    %c0_3 = arith.constant 0 : index
    %c0_4 = arith.constant 0 : index
    %3 = vector.load %arg3[%c0_3, %c0_4] : memref<1x128xf32, #tpu.memory_space<vmem>>, vector<1x128xf32>
    %4 = vector.broadcast %3 : vector<1x128xf32> to vector<16x128xf32>
    %5 = arith.mulf %2, %4 : vector<16x128xf32>
    %c0_5 = arith.constant 0 : index
    %c0_6 = arith.constant 0 : index
    %6 = vector.load %arg4[%c0_5, %c0_6] : memref<1x128xf32, #tpu.memory_space<vmem>>, vector<1x128xf32>
    %7 = vector.broadcast %6 : vector<1x128xf32> to vector<16x128xf32>
    %8 = arith.addf %5, %7 : vector<16x128xf32>
    %c0_7 = arith.constant 0 : index
    %c0_8 = arith.constant 0 : index
    %9 = vector.load %arg5[%c0_7, %c0_8] : memref<16x128xf32, #tpu.memory_space<vmem>>, vector<16x128xf32>
    tpu.vector_store %arg5[%c0_7, %c0_8], %8 {strides = array<i32>} : memref<16x128xf32, #tpu.memory_space<vmem>>, vector<16x128xf32>,
    return
  }
  func.func @transform_0(%arg0: i32) -> (i32, i32) {
    %c0_i32 = arith.constant 0 : i32
    %c0_i32_0 = arith.constant 0 : i32
    return %arg0, %c0_i32 : i32, i32
  }
  func.func @transform_1(%arg0: i32) -> (i32, i32) {
    %c0_i32 = arith.constant 0 : i32
    %c0_i32_0 = arith.constant 0 : i32
    %c0_i32_1 = arith.constant 0 : i32
    return %c0_i32, %c0_i32_0 : i32, i32
  }
  func.func @transform_2(%arg0: i32) -> (i32, i32) {
    %c0_i32 = arith.constant 0 : i32
    %c0_i32_0 = arith.constant 0 : i32
    %c0_i32_1 = arith.constant 0 : i32
    return %c0_i32, %c0_i32_0 : i32, i32
  }
  func.func @transform_3(%arg0: i32) -> (i32, i32) {
    %c0_i32 = arith.constant 0 : i32
    %c0_i32_0 = arith.constant 0 : i32
    %c0_i32_1 = arith.constant 0 : i32
    return %c0_i32, %c0_i32_0 : i32, i32
  }
  func.func @transform_4(%arg0: i32) -> (i32, i32) {
    %c0_i32 = arith.constant 0 : i32
    %c0_i32_0 = arith.constant 0 : i32
    return %arg0, %c0_i32 : i32, i32
  }
}

</mosaic_0001>

<llo_original>
// kernel: simple_model_forward.5
$region0: #{simple_model_forward.5}
  #allocation0 [shape = 'u32[]', space=smem, size = 0x4, offset = 0x4, fixed_abs, tag = 'smem constant byte address 0x4 - core index']
  #allocation1 [shape = 'u32[144,128]{1,0:T(1,128)}', space=vmem, size = 0x12000, scoped, tag = 'internal scratch']
  %s0 = inlined_call_operand.vmem [shape: bf16[1568,25], index: 0, kind: input, shape index: {}]
  %s1 = inlined_call_operand.vmem [shape: bf16[25,128], index: 1, kind: input, shape index: {}]
  %s2 = inlined_call_operand.vmem [shape: f32[1,128], index: 2, kind: input, shape index: {}]
  %s3 = inlined_call_operand.vmem [shape: f32[1,128], index: 3, kind: input, shape index: {}]
  %s4 = inlined_call_operand.vmem [shape: f32[1568,128], index: 4, kind: output, shape index: {}]
  %s5 = sld [smem:[#allocation0]]
  $region49: #{simple_model_forward.5} parent=0
    _
  %s7 = ssub.s32 1, %s5
  %s8 = scalar_select 0, %s7, %s5
  loop: start=0, step=1, limit=9
  $region2: #{simple_model_forward.5} parent=0 // loop_pre_header
    _
  $region3: #{simple_model_forward.5} parent=0 // loop_header
    %s10 = sphi 0, %s14
    %p11 = scmp.ge.s32.totalorder %s10, 9
    %s20 = sphi 0, %s22
    %s23 = sphi 0, %s20
    %s24 = sphi 0, %s23
    %s40 = sphi 0, %s24
    %s44 = sphi 0, %s44
    %s46 = sphi 0, %s44
    %s47 = sphi 0, %s46
    %s61 = sphi 0, %s47
    %s65 = sphi 0, %s65
    %s67 = sphi 0, %s65
    %s68 = sphi 0, %s67
    %s82 = sphi 0, %s68
    %s86 = sphi 0, %s86
    %s88 = sphi 0, %s86
    %s89 = sphi 0, %s88
    %s103 = sphi 0, %s89
    %s109 = sphi 0, %s111
    %s112 = sphi 0, %s109
    %s113 = sphi 0, %s112
    %s129 = sphi 0, %s113
  $region4: #{simple_model_forward.5} parent=0 // loop_header_branch
    %13 = sbr.rel (%p11) target = $region8
  $region5: #{simple_model_forward.5} parent=0 // loop_body
    %s15 = ssub.s32 %s10, 1
    %s16 = ssub.s32 %s10, 2
    %s17 = sadd.s32 %s10, 1
    %s18 = ssub.s32 %s10, %s17
    %p19 = scmp.eq.s32.totalorder %s18, 0
    %s21 = sadd.s32 %s20, 1
    %s22 = scalar_select %p19, %s20, %s21
    %p25 = pneg %p19
    %p26 = scmp.eq.s32.totalorder %s10, 6
    %p27 = por %p25, %p26
    %p28 = scmp.ne.s32.totalorder %s20, %s23
    %p29 = scmp.eq.s32.totalorder %s10, 0
    %p30 = por %p28, %p29
    %p31 = scmp.ne.s32.totalorder %s20, %s23
    %p32 = scmp.eq.s32.totalorder %s15, 6
    %p33 = por %p31, %p32
    %p34 = scmp.ne.s32.totalorder %s23, %s24
    %p35 = scmp.eq.s32.totalorder %s15, 0
    %p36 = por %p34, %p35
    %p37 = scmp.ne.s32.totalorder %s23, %s24
    %p38 = scmp.eq.s32.totalorder %s16, 6
    %p39 = por %p37, %p38
    %p41 = scmp.ne.s32.totalorder %s24, %s40
    %p42 = scmp.eq.s32.totalorder %s16, 0
    %p43 = por %p41, %p42
    %s45 = sadd.s32 %s44, 1
    %p48 = scmp.eq.s32.totalorder %s10, 6
    %p49 = scmp.ne.s32.totalorder %s44, %s46
    %p50 = scmp.eq.s32.totalorder %s10, 0
    %p51 = por %p49, %p50
    %p52 = scmp.ne.s32.totalorder %s44, %s46
    %p53 = scmp.eq.s32.totalorder %s15, 6
    %p54 = por %p52, %p53
    %p55 = scmp.ne.s32.totalorder %s46, %s47
    %p56 = scmp.eq.s32.totalorder %s15, 0
    %p57 = por %p55, %p56
    %p58 = scmp.ne.s32.totalorder %s46, %s47
    %p59 = scmp.eq.s32.totalorder %s16, 6
    %p60 = por %p58, %p59
    %p62 = scmp.ne.s32.totalorder %s47, %s61
    %p63 = scmp.eq.s32.totalorder %s16, 0
    %p64 = por %p62, %p63
    %s66 = sadd.s32 %s65, 1
    %p69 = scmp.eq.s32.totalorder %s10, 6
    %p70 = scmp.ne.s32.totalorder %s65, %s67
    %p71 = scmp.eq.s32.totalorder %s10, 0
    %p72 = por %p70, %p71
    %p73 = scmp.ne.s32.totalorder %s65, %s67
    %p74 = scmp.eq.s32.totalorder %s15, 6
    %p75 = por %p73, %p74
    %p76 = scmp.ne.s32.totalorder %s67, %s68
    %p77 = scmp.eq.s32.totalorder %s15, 0
    %p78 = por %p76, %p77
    %p79 = scmp.ne.s32.totalorder %s67, %s68
    %p80 = scmp.eq.s32.totalorder %s16, 6
    %p81 = por %p79, %p80
    %p83 = scmp.ne.s32.totalorder %s68, %s82
    %p84 = scmp.eq.s32.totalorder %s16, 0
    %p85 = por %p83, %p84
    %s87 = sadd.s32 %s86, 1
    %p90 = scmp.eq.s32.totalorder %s10, 6
    %p91 = scmp.ne.s32.totalorder %s86, %s88
    %p92 = scmp.eq.s32.totalorder %s10, 0
    %p93 = por %p91, %p92
    %p94 = scmp.ne.s32.totalorder %s86, %s88
    %p95 = scmp.eq.s32.totalorder %s15, 6
    %p96 = por %p94, %p95
    %p97 = scmp.ne.s32.totalorder %s88, %s89
    %p98 = scmp.eq.s32.totalorder %s15, 0
    %p99 = por %p97, %p98
    %p100 = scmp.ne.s32.totalorder %s88, %s89
    %p101 = scmp.eq.s32.totalorder %s16, 6
    %p102 = por %p100, %p101
    %p104 = scmp.ne.s32.totalorder %s89, %s103
    %p105 = scmp.eq.s32.totalorder %s16, 0
    %p106 = por %p104, %p105
    %s107 = ssub.s32 %s10, %s17
    %p108 = scmp.eq.s32.totalorder %s107, 0
    %s110 = sadd.s32 %s109, 1
    %s111 = scalar_select %p108, %s109, %s110
    %p114 = pneg %p108
    %p115 = scmp.eq.s32.totalorder %s10, 6
    %p116 = por %p114, %p115
    %p117 = scmp.ne.s32.totalorder %s109, %s112
    %p118 = scmp.eq.s32.totalorder %s10, 0
    %p119 = por %p117, %p118
    %p120 = scmp.ne.s32.totalorder %s109, %s112
    %p121 = scmp.eq.s32.totalorder %s15, 6
    %p122 = por %p120, %p121
    %p123 = scmp.ne.s32.totalorder %s112, %s113
    %p124 = scmp.eq.s32.totalorder %s15, 0
    %p125 = por %p123, %p124
    %p126 = scmp.ne.s32.totalorder %s112, %s113
    %p127 = scmp.eq.s32.totalorder %s16, 6
    %p128 = por %p126, %p127
    %p130 = scmp.ne.s32.totalorder %s113, %s129
    %p131 = scmp.eq.s32.totalorder %s16, 0
    %p132 = por %p130, %p131
    %p133 = scmp.le.s32.totalorder 1, %s10
    %p134 = scmp.lt.s32.totalorder %s10, 8
    %p135 = pnand %p133, %p134
    %p136 = pneg %p135
    // Predicated region
    $region9: #{simple_model_forward.5} parent=5 // pred_check
      _
    $region10: #{simple_model_forward.5} parent=5 // pred_check_branch
      %138 = sbr.rel (%p135) target = $region12
    $region11: #{simple_model_forward.5} parent=5 // pred_region
      %s139 = ssub.s32 %s10, 1
      // Predicated region
      $region13: #{simple_model_forward.5} parent=11 // pred_check
        %p140 = pneg %p57
      $region14: #{simple_model_forward.5} parent=11 // pred_check_branch
        %142 = sbr.rel (%p140) target = $region16
      $region15: #{simple_model_forward.5} parent=11 // pred_region
        _
      $region16: #{simple_model_forward.5} parent=11 // pred_fallthru
        _
      // Predicated region
      $region17: #{simple_model_forward.5} parent=11 // pred_check
        %p143 = pneg %p78
      $region18: #{simple_model_forward.5} parent=11 // pred_check_branch
        %145 = sbr.rel (%p143) target = $region20
      $region19: #{simple_model_forward.5} parent=11 // pred_region
        _
      $region20: #{simple_model_forward.5} parent=11 // pred_fallthru
        _
      // Predicated region
      $region21: #{simple_model_forward.5} parent=11 // pred_check
        %p146 = pneg %p99
      $region22: #{simple_model_forward.5} parent=11 // pred_check_branch
        %148 = sbr.rel (%p146) target = $region24
      $region23: #{simple_model_forward.5} parent=11 // pred_region
        _
      $region24: #{simple_model_forward.5} parent=11 // pred_fallthru
        _
    $region12: #{simple_model_forward.5} parent=5 // pred_fallthru
      _
    %p149 = scmp.lt.s32.totalorder %s10, 7
    // Predicated region
    $region25: #{simple_model_forward.5} parent=5 // pred_check
      %p150 = pneg %p149
    $region26: #{simple_model_forward.5} parent=5 // pred_check_branch
      %152 = sbr.rel (%p150) target = $region28
    $region27: #{simple_model_forward.5} parent=5 // pred_region
      // Predicated region
      $region29: #{simple_model_forward.5} parent=27 // pred_check
        %p153 = pneg %p30
      $region30: #{simple_model_forward.5} parent=27 // pred_check_branch
        %155 = sbr.rel (%p153) target = $region32
      $region31: #{simple_model_forward.5} parent=27 // pred_region
        %s156 = smul.u32 28, %s10
        %p157 = scmp.lt.s32.totalorder %s156, 195
        %s158 = scalar_select %p157, %s156, 195
        %s159 = smul.addr %s158, 4
        %s160 = scalar_lea.vmem %s0, %s159
        %s161 = smul.u32 28, %s10
      $region32: #{simple_model_forward.5} parent=27 // pred_fallthru
        _
    $region28: #{simple_model_forward.5} parent=5 // pred_fallthru
      _
    %p162 = scmp.le.s32.totalorder 1, %s10
    %p163 = scmp.lt.s32.totalorder %s10, 8
    %p164 = pnand %p162, %p163
    %p165 = pneg %p164
    // Predicated region
    $region33: #{simple_model_forward.5} parent=5 // pred_check
      _
    $region34: #{simple_model_forward.5} parent=5 // pred_check_branch
      %167 = sbr.rel (%p164) target = $region36
    $region35: #{simple_model_forward.5} parent=5 // pred_region
      %s168 = ssub.s32 %s10, 1
      %s169 = smul.u32 28, %s15
      %p170 = scmp.lt.s32.totalorder %s169, 195
      %s171 = scalar_select %p170, %s169, 195
      %s172 = smul.addr %s171, 4
      %s173 = scalar_lea.vmem %s0, %s172
      %p174 = pneg %p36
      %p175 = pneg %p33
      %p176 = pneg %p57
      %p177 = pneg %p54
      %p178 = pneg %p78
      %p179 = pneg %p75
      %p180 = pneg %p99
      %p181 = pneg %p96
      %p182 = pneg %p125
      %p183 = pneg %p122
      %s184 = smul.u32 28, %s15
      %p185 = scmp.lt.s32.totalorder %s184, 195
      %s186 = scalar_select %p185, %s184, 195
      %s187 = smul.addr %s186, 8
      %s188 = scalar_lea.vmem %s4, %s187
      %s189 = smul.u32 28, %s15
      %p190 = scmp.lt.s32.totalorder %s189, 195
      %s191 = scalar_select %p190, %s189, 195
      %s192 = smul.addr %s191, 4
      %s193 = scalar_lea.vmem %s0, %s192
      %s194 = smul.u32 28, %s15
      %s195 = smul.u32 28, %s15
      %p196 = scmp.lt.s32.totalorder %s195, 195
      %s197 = scalar_select %p196, %s195, 195
      %s198 = smul.addr %s197, 8
      %s199 = scalar_lea.vmem %s4, %s198
      %s200 = smul.u32 28, %s15
      %v202 = vld [vmem:[%s193] sm:$0xf]
      %v203 = vld [vmem:[%s193 + $0x4] sm:$0xf]
      %v204 = vld [vmem:[%s193 + $0x8] sm:$0xf]
      %v205 = vld [vmem:[%s193 + $0xc] sm:$0xf]
      %v206 = vld [vmem:[%s193 + $0x10] sm:$0xf]
      %v207 = vld [vmem:[%s193 + $0x14] sm:$0xf]
      %v208 = vld [vmem:[%s193 + $0x18] sm:$0xf]
      %v209 = vld [vmem:[%s193 + $0x1c] sm:$0xf]
      %v210 = vld [vmem:[%s193 + $0x20] sm:$0xf]
      %v211 = vld [vmem:[%s193 + $0x24] sm:$0xf]
      %v212 = vld [vmem:[%s193 + $0x28] sm:$0xf]
      %v213 = vld [vmem:[%s193 + $0x2c] sm:$0xf]
      %v214 = vld [vmem:[%s193 + $0x30] sm:$0xf]
      %v215 = vld [vmem:[%s193 + $0x34] sm:$0xf]
      %v216 = vld [vmem:[%s193 + $0x38] sm:$0xf]
      %v217 = vld [vmem:[%s193 + $0x3c] sm:$0xf]
      %v218 = vld [vmem:[%s193 + $0x40] sm:$0xf]
      %v219 = vld [vmem:[%s193 + $0x44] sm:$0xf]
      %v220 = vld [vmem:[%s193 + $0x48] sm:$0xf]
      %v221 = vld [vmem:[%s193 + $0x4c] sm:$0xf]
      %v222 = vld [vmem:[%s193 + $0x50] sm:$0xf]
      %v223 = vld [vmem:[%s193 + $0x54] sm:$0xf]
      %v224 = vld [vmem:[%s193 + $0x58] sm:$0xf]
      %v225 = vld [vmem:[%s193 + $0x5c] sm:$0xf]
      %v226 = vld [vmem:[%s193 + $0x60] sm:$0xf]
      %v227 = vld [vmem:[%s193 + $0x64] sm:$0xf]
      %v228 = vld [vmem:[%s193 + $0x68] sm:$0xf]
      %v229 = vld [vmem:[%s193 + $0x6c] sm:$0xf]
      %v230 = vld [vmem:[%s1] sm:$0xf]
      %v231 = vld [vmem:[%s1 + $0x4] sm:$0xf]
      %v232 = vld [vmem:[%s1 + $0x8] sm:$0xf]
      %v233 = vld [vmem:[%s1 + $0xc] sm:$0x1]
      %v262 = vunpack.c.l.b16 %v202
      %v263 = vunpack.c.l.b16 %v203
      %v264 = vunpack.c.l.b16 %v204
      %v265 = vunpack.c.l.b16 %v205
      %v266 = vunpack.c.l.b16 %v206
      %v267 = vunpack.c.l.b16 %v207
      %v268 = vunpack.c.l.b16 %v208
      %v269 = vunpack.c.l.b16 %v209
      %v270 = vunpack.c.l.b16 %v210
      %v271 = vunpack.c.l.b16 %v211
      %v272 = vunpack.c.l.b16 %v212
      %v273 = vunpack.c.l.b16 %v213
      %v274 = vunpack.c.l.b16 %v214
      %v275 = vunpack.c.l.b16 %v215
      %v276 = vunpack.c.l.b16 %v216
      %v277 = vunpack.c.l.b16 %v217
      %v278 = vunpack.c.l.b16 %v218
      %v279 = vunpack.c.l.b16 %v219
      %v280 = vunpack.c.l.b16 %v220
      %v281 = vunpack.c.l.b16 %v221
      %v282 = vunpack.c.l.b16 %v222
      %v283 = vunpack.c.l.b16 %v223
      %v284 = vunpack.c.l.b16 %v224
      %v285 = vunpack.c.l.b16 %v225
      %v286 = vunpack.c.l.b16 %v226
      %v287 = vunpack.c.l.b16 %v227
      %v288 = vunpack.c.l.b16 %v228
      %v289 = vunpack.c.l.b16 %v229
      %v290 = vpack.c.b16 %v263, %v262
      %v291 = vpack.c.b16 %v265, %v264
      %v292 = vpack.c.b16 %v267, %v266
      %v293 = vpack.c.b16 %v269, %v268
      %v294 = vpack.c.b16 %v271, %v270
      %v295 = vpack.c.b16 %v273, %v272
      %v296 = vpack.c.b16 %v275, %v274
      %v297 = vpack.c.b16 %v277, %v276
      %v298 = vpack.c.b16 %v279, %v278
      %v299 = vpack.c.b16 %v281, %v280
      %v300 = vpack.c.b16 %v283, %v282
      %v301 = vpack.c.b16 %v285, %v284
      %v302 = vpack.c.b16 %v287, %v286
      %v303 = vpack.c.b16 %v289, %v288
      %v308 = vunpack.c.l.b16 %v230
      %v309 = vunpack.c.l.b16 %v231
      %v310 = vunpack.c.l.b16 %v232
      %v311 = vunpack.c.l.b16 %v233
      %v312 = vpack.c.b16 %v309, %v308
      %v313 = vpack.c.b16 %v311, %v310
      %vm315 = vcmask 203776
      %v317 = vsel %vm315, %v290, 0
      %v320 = vsel %vm315, %v291, 0
      %v323 = vsel %vm315, %v292, 0
      %v326 = vsel %vm315, %v293, 0
      %v329 = vsel %vm315, %v294, 0
      %v332 = vsel %vm315, %v295, 0
      %v335 = vsel %vm315, %v296, 0
      %v338 = vsel %vm315, %v297, 0
      %v341 = vsel %vm315, %v298, 0
      %v344 = vsel %vm315, %v299, 0
      %v347 = vsel %vm315, %v300, 0
      %v350 = vsel %vm315, %v301, 0
      %v353 = vsel %vm315, %v302, 0
      %v356 = vsel %vm315, %v303, 0
      %vm358 = vcmask 1043456
      %vm359 = vcmask 1044480
      %v360 = vsel %vm358, 4294967295, 65535
      %v361 = vsel %vm359, %v360, 0
      %v363 = vand.u32 %v313, %v361
      %365 = vmatprep.subr.bf16.mxu0 0
      %366 = vmatpush1.bf16.msra.mxu0 0
      %367 = vmatprep.subr.bf16.mxu0 0
      %368 = vmatpush1.bf16.msra.mxu0 0
      %369 = vmatprep.subr.bf16.mxu0 0
      %370 = vmatpush1.bf16.msra.mxu0 0
      %371 = vmatprep.subr.bf16.mxu0 0
      %372 = vmatpush1.bf16.msra.mxu0 0
      %373 = vmatprep.subr.bf16.mxu0 0
      %374 = vmatpush1.bf16.msra.mxu0 0
      %375 = vmatprep.subr.bf16.mxu0 0
      %376 = vmatpush1.bf16.msra.mxu0 0
      %377 = vmatprep.subr.bf16.mxu0 0
      %378 = vmatpush1.bf16.msra.mxu0 %v363
      %379 = vmatprep.subr.bf16.mxu0 0
      %380 = vmatpush1.bf16.msra.mxu0 %v312
      %381 = vmatprep.subr.bf16.mxu0 0
      %382 = vmatpush2.bf16.msra.mxu0 0
      %383 = vmatprep.subr.bf16.mxu0 0
      %384 = vmatpush2.bf16.msra.mxu0 0
      %385 = vmatprep.subr.bf16.mxu0 0
      %386 = vmatpush2.bf16.msra.mxu0 0
      %387 = vmatprep.subr.bf16.mxu0 0
      %388 = vmatpush2.bf16.msra.mxu0 0
      %389 = vmatprep.subr.bf16.mxu0 0
      %390 = vmatpush2.bf16.msra.mxu0 0
      %391 = vmatprep.subr.bf16.mxu0 0
      %392 = vmatpush2.bf16.msra.mxu0 0
      %393 = vmatprep.subr.bf16.mxu0 0
      %394 = vmatpush2.bf16.msra.mxu0 0
      %395 = vmatprep.subr.bf16.mxu0 0
      %396 = vmatpush2.bf16.msra.mxu0 0
      %397 = vmatprep.mubr.bf16.mxu0 0
      %398 = vmatmul.mubr.bf16.gmra.mxu0 %v317
      %v399 = vpop.f32.mrf.mxu0
      %v400 = vadd.f32 0.0, %v399
      %v401 = vpop.f32.mrf.mxu0
      %v402 = vpop.f32.mrf.mxu0
      %v403 = vadd.f32 0.0, %v402
      %v404 = vpop.f32.mrf.mxu0
      %405 = vmatprep.mubr.bf16.mxu0 0
      %406 = vmatmul.mubr.bf16.gmra.mxu0 %v320
      %v407 = vpop.f32.mrf.mxu0
      %v408 = vadd.f32 0.0, %v407
      %v409 = vpop.f32.mrf.mxu0
      %v410 = vpop.f32.mrf.mxu0
      %v411 = vadd.f32 0.0, %v410
      %v412 = vpop.f32.mrf.mxu0
      %413 = vmatprep.mubr.bf16.mxu0 0
      %414 = vmatmul.mubr.bf16.gmra.mxu0 %v323
      %v415 = vpop.f32.mrf.mxu0
      %v416 = vadd.f32 0.0, %v415
      %v417 = vpop.f32.mrf.mxu0
      %v418 = vpop.f32.mrf.mxu0
      %v419 = vadd.f32 0.0, %v418
      %v420 = vpop.f32.mrf.mxu0
      %421 = vmatprep.mubr.bf16.mxu0 0
      %422 = vmatmul.mubr.bf16.gmra.mxu0 %v326
      %v423 = vpop.f32.mrf.mxu0
      %v424 = vadd.f32 0.0, %v423
      %v425 = vpop.f32.mrf.mxu0
      %v426 = vpop.f32.mrf.mxu0
      %v427 = vadd.f32 0.0, %v426
      %v428 = vpop.f32.mrf.mxu0
      %429 = vmatprep.mubr.bf16.mxu0 0
      %430 = vmatmul.mubr.bf16.gmra.mxu0 %v329
      %v431 = vpop.f32.mrf.mxu0
      %v432 = vadd.f32 0.0, %v431
      %v433 = vpop.f32.mrf.mxu0
      %v434 = vpop.f32.mrf.mxu0
      %v435 = vadd.f32 0.0, %v434
      %v436 = vpop.f32.mrf.mxu0
      %437 = vmatprep.mubr.bf16.mxu0 0
      %438 = vmatmul.mubr.bf16.gmra.mxu0 %v332
      %v439 = vpop.f32.mrf.mxu0
      %v440 = vadd.f32 0.0, %v439
      %v441 = vpop.f32.mrf.mxu0
      %v442 = vpop.f32.mrf.mxu0
      %v443 = vadd.f32 0.0, %v442
      %v444 = vpop.f32.mrf.mxu0
      %445 = vmatprep.mubr.bf16.mxu0 0
      %446 = vmatmul.mubr.bf16.gmra.mxu0 %v335
      %v447 = vpop.f32.mrf.mxu0
      %v448 = vadd.f32 0.0, %v447
      %v449 = vpop.f32.mrf.mxu0
      %v450 = vpop.f32.mrf.mxu0
      %v451 = vadd.f32 0.0, %v450
      %v452 = vpop.f32.mrf.mxu0
      %453 = vmatprep.mubr.bf16.mxu0 0
      %454 = vmatmul.mubr.bf16.gmra.mxu0 %v338
      %v455 = vpop.f32.mrf.mxu0
      %v456 = vadd.f32 0.0, %v455
      %v457 = vpop.f32.mrf.mxu0
      %v458 = vpop.f32.mrf.mxu0
      %v459 = vadd.f32 0.0, %v458
      %v460 = vpop.f32.mrf.mxu0
      %461 = vmatprep.mubr.bf16.mxu0 0
      %462 = vmatmul.mubr.bf16.gmra.mxu0 %v341
      %v463 = vpop.f32.mrf.mxu0
      %v464 = vadd.f32 0.0, %v463
      %v465 = vpop.f32.mrf.mxu0
      %v466 = vpop.f32.mrf.mxu0
      %v467 = vadd.f32 0.0, %v466
      %v468 = vpop.f32.mrf.mxu0
      %469 = vmatprep.mubr.bf16.mxu0 0
      %470 = vmatmul.mubr.bf16.gmra.mxu0 %v344
      %v471 = vpop.f32.mrf.mxu0
      %v472 = vadd.f32 0.0, %v471
      %v473 = vpop.f32.mrf.mxu0
      %v474 = vpop.f32.mrf.mxu0
      %v475 = vadd.f32 0.0, %v474
      %v476 = vpop.f32.mrf.mxu0
      %477 = vmatprep.mubr.bf16.mxu0 0
      %478 = vmatmul.mubr.bf16.gmra.mxu0 %v347
      %v479 = vpop.f32.mrf.mxu0
      %v480 = vadd.f32 0.0, %v479
      %v481 = vpop.f32.mrf.mxu0
      %v482 = vpop.f32.mrf.mxu0
      %v483 = vadd.f32 0.0, %v482
      %v484 = vpop.f32.mrf.mxu0
      %485 = vmatprep.mubr.bf16.mxu0 0
      %486 = vmatmul.mubr.bf16.gmra.mxu0 %v350
      %v487 = vpop.f32.mrf.mxu0
      %v488 = vadd.f32 0.0, %v487
      %v489 = vpop.f32.mrf.mxu0
      %v490 = vpop.f32.mrf.mxu0
      %v491 = vadd.f32 0.0, %v490
      %v492 = vpop.f32.mrf.mxu0
      %493 = vmatprep.mubr.bf16.mxu0 0
      %494 = vmatmul.mubr.bf16.gmra.mxu0 %v353
      %v495 = vpop.f32.mrf.mxu0
      %v496 = vadd.f32 0.0, %v495
      %v497 = vpop.f32.mrf.mxu0
      %v498 = vpop.f32.mrf.mxu0
      %v499 = vadd.f32 0.0, %v498
      %v500 = vpop.f32.mrf.mxu0
      %501 = vmatprep.mubr.bf16.mxu0 0
      %502 = vmatmul.mubr.bf16.gmra.mxu0 %v356
      %v503 = vpop.f32.mrf.mxu0
      %v504 = vadd.f32 0.0, %v503
      %v505 = vpop.f32.mrf.mxu0
      %v506 = vpop.f32.mrf.mxu0
      %v507 = vadd.f32 0.0, %v506
      %v508 = vpop.f32.mrf.mxu0
      %509 = vdwg.mxu0
      %v510 = vld [vmem:[%s2] sm:$0x1]
      %v512 = vlaneseq
      %v513 = vshrl.u32 %v512, 7
      %v514 = vsub.s32 0, %v513
      %v515 = vrot.slane %v510, %v514
      %v517 = vmul.f32 %v400, %v515
      %v518 = vmul.f32 %v403, %v515
      %v519 = vmul.f32 %v408, %v515
      %v520 = vmul.f32 %v411, %v515
      %v521 = vmul.f32 %v416, %v515
      %v522 = vmul.f32 %v419, %v515
      %v523 = vmul.f32 %v424, %v515
      %v524 = vmul.f32 %v427, %v515
      %v525 = vmul.f32 %v432, %v515
      %v526 = vmul.f32 %v435, %v515
      %v527 = vmul.f32 %v440, %v515
      %v528 = vmul.f32 %v443, %v515
      %v529 = vmul.f32 %v448, %v515
      %v530 = vmul.f32 %v451, %v515
      %v531 = vmul.f32 %v456, %v515
      %v532 = vmul.f32 %v459, %v515
      %v533 = vmul.f32 %v464, %v515
      %v534 = vmul.f32 %v467, %v515
      %v535 = vmul.f32 %v472, %v515
      %v536 = vmul.f32 %v475, %v515
      %v537 = vmul.f32 %v480, %v515
      %v538 = vmul.f32 %v483, %v515
      %v539 = vmul.f32 %v488, %v515
      %v540 = vmul.f32 %v491, %v515
      %v541 = vmul.f32 %v496, %v515
      %v542 = vmul.f32 %v499, %v515
      %v543 = vmul.f32 %v504, %v515
      %v544 = vmul.f32 %v507, %v515
      %v545 = vld [vmem:[%s3] sm:$0x1]
      %v547 = vlaneseq
      %v548 = vshrl.u32 %v547, 7
      %v549 = vsub.s32 0, %v548
      %v550 = vrot.slane %v545, %v549
      %v552 = vadd.f32 %v517, %v550
      %v553 = vadd.f32 %v518, %v550
      %v554 = vadd.f32 %v519, %v550
      %v555 = vadd.f32 %v520, %v550
      %v556 = vadd.f32 %v521, %v550
      %v557 = vadd.f32 %v522, %v550
      %v558 = vadd.f32 %v523, %v550
      %v559 = vadd.f32 %v524, %v550
      %v560 = vadd.f32 %v525, %v550
      %v561 = vadd.f32 %v526, %v550
      %v562 = vadd.f32 %v527, %v550
      %v563 = vadd.f32 %v528, %v550
      %v564 = vadd.f32 %v529, %v550
      %v565 = vadd.f32 %v530, %v550
      %v566 = vadd.f32 %v531, %v550
      %v567 = vadd.f32 %v532, %v550
      %v568 = vadd.f32 %v533, %v550
      %v569 = vadd.f32 %v534, %v550
      %v570 = vadd.f32 %v535, %v550
      %v571 = vadd.f32 %v536, %v550
      %v572 = vadd.f32 %v537, %v550
      %v573 = vadd.f32 %v538, %v550
      %v574 = vadd.f32 %v539, %v550
      %v575 = vadd.f32 %v540, %v550
      %v576 = vadd.f32 %v541, %v550
      %v577 = vadd.f32 %v542, %v550
      %v578 = vadd.f32 %v543, %v550
      %v579 = vadd.f32 %v544, %v550
      %v580 = vmax.f32 %v552, 0.0
      %v581 = vmax.f32 %v553, 0.0
      %v582 = vmax.f32 %v554, 0.0
      %v583 = vmax.f32 %v555, 0.0
      %v584 = vmax.f32 %v556, 0.0
      %v585 = vmax.f32 %v557, 0.0
      %v586 = vmax.f32 %v558, 0.0
      %v587 = vmax.f32 %v559, 0.0
      %v588 = vmax.f32 %v560, 0.0
      %v589 = vmax.f32 %v561, 0.0
      %v590 = vmax.f32 %v562, 0.0
      %v591 = vmax.f32 %v563, 0.0
      %v592 = vmax.f32 %v564, 0.0
      %v593 = vmax.f32 %v565, 0.0
      %v594 = vmax.f32 %v566, 0.0
      %v595 = vmax.f32 %v567, 0.0
      %v596 = vmax.f32 %v568, 0.0
      %v597 = vmax.f32 %v569, 0.0
      %v598 = vmax.f32 %v570, 0.0
      %v599 = vmax.f32 %v571, 0.0
      %v600 = vmax.f32 %v572, 0.0
      %v601 = vmax.f32 %v573, 0.0
      %v602 = vmax.f32 %v574, 0.0
      %v603 = vmax.f32 %v575, 0.0
      %v604 = vmax.f32 %v576, 0.0
      %v605 = vmax.f32 %v577, 0.0
      %v606 = vmax.f32 %v578, 0.0
      %v607 = vmax.f32 %v579, 0.0
      %608 = vst [vmem:[%s199] sm:$0xff] %v580
      %609 = vst [vmem:[%s199 + $0x8] sm:$0xff] %v581
      %610 = vst [vmem:[%s199 + $0x10] sm:$0xff] %v582
      %611 = vst [vmem:[%s199 + $0x18] sm:$0xff] %v583
      %612 = vst [vmem:[%s199 + $0x20] sm:$0xff] %v584
      %613 = vst [vmem:[%s199 + $0x28] sm:$0xff] %v585
      %614 = vst [vmem:[%s199 + $0x30] sm:$0xff] %v586
      %615 = vst [vmem:[%s199 + $0x38] sm:$0xff] %v587
      %616 = vst [vmem:[%s199 + $0x40] sm:$0xff] %v588
      %617 = vst [vmem:[%s199 + $0x48] sm:$0xff] %v589
      %618 = vst [vmem:[%s199 + $0x50] sm:$0xff] %v590
      %619 = vst [vmem:[%s199 + $0x58] sm:$0xff] %v591
      %620 = vst [vmem:[%s199 + $0x60] sm:$0xff] %v592
      %621 = vst [vmem:[%s199 + $0x68] sm:$0xff] %v593
      %622 = vst [vmem:[%s199 + $0x70] sm:$0xff] %v594
      %623 = vst [vmem:[%s199 + $0x78] sm:$0xff] %v595
      %624 = vst [vmem:[%s199 + $0x80] sm:$0xff] %v596
      %625 = vst [vmem:[%s199 + $0x88] sm:$0xff] %v597
      %626 = vst [vmem:[%s199 + $0x90] sm:$0xff] %v598
      %627 = vst [vmem:[%s199 + $0x98] sm:$0xff] %v599
      %628 = vst [vmem:[%s199 + $0xa0] sm:$0xff] %v600
      %629 = vst [vmem:[%s199 + $0xa8] sm:$0xff] %v601
      %630 = vst [vmem:[%s199 + $0xb0] sm:$0xff] %v602
      %631 = vst [vmem:[%s199 + $0xb8] sm:$0xff] %v603
      %632 = vst [vmem:[%s199 + $0xc0] sm:$0xff] %v604
      %633 = vst [vmem:[%s199 + $0xc8] sm:$0xff] %v605
      %634 = vst [vmem:[%s199 + $0xd0] sm:$0xff] %v606
      %635 = vst [vmem:[%s199 + $0xd8] sm:$0xff] %v607
      %s636 = smul.u32 28, %s15
      %p637 = scmp.lt.s32.totalorder %s636, 195
      %s638 = scalar_select %p637, %s636, 195
      %s639 = smul.addr %s638, 8
      %s640 = scalar_lea.vmem %s4, %s639
      // Predicated region
      $region37: #{simple_model_forward.5} parent=35 // pred_check
        %p641 = pneg %p122
      $region38: #{simple_model_forward.5} parent=35 // pred_check_branch
        %643 = sbr.rel (%p641) target = $region40
      $region39: #{simple_model_forward.5} parent=35 // pred_region
        %s644 = smul.u32 28, %s15
      $region40: #{simple_model_forward.5} parent=35 // pred_fallthru
        _
    $region36: #{simple_model_forward.5} parent=5 // pred_fallthru
      _
    %p645 = scmp.le.s32.totalorder 2, %s10
    // Predicated region
    $region41: #{simple_model_forward.5} parent=5 // pred_check
      %p646 = pneg %p645
    $region42: #{simple_model_forward.5} parent=5 // pred_check_branch
      %648 = sbr.rel (%p646) target = $region44
    $region43: #{simple_model_forward.5} parent=5 // pred_region
      %s649 = ssub.s32 %s10, 2
      // Predicated region
      $region45: #{simple_model_forward.5} parent=43 // pred_check
        %p650 = pneg %p128
      $region46: #{simple_model_forward.5} parent=43 // pred_check_branch
        %652 = sbr.rel (%p650) target = $region48
      $region47: #{simple_model_forward.5} parent=43 // pred_region
        %s653 = smul.u32 28, %s16
        %p654 = scmp.lt.s32.totalorder %s653, 195
        %s655 = scalar_select %p654, %s653, 195
        %s656 = smul.addr %s655, 8
        %s657 = scalar_lea.vmem %s4, %s656
      $region48: #{simple_model_forward.5} parent=43 // pred_fallthru
        _
    $region44: #{simple_model_forward.5} parent=5 // pred_fallthru
      _
  $region6: #{simple_model_forward.5} parent=0 // loop_footer
    %s14 = sadd.s32 1, %s10
  $region7: #{simple_model_forward.5} parent=0 // loop_footer_branch
    %9 = sbr.rel target = $region3
  $region8: #{simple_model_forward.5} parent=0 // loop_exit
    _

// kernel: simple_model_forward.6
$region0: #{simple_model_forward.6}
  #allocation0 [shape = 'u32[]', space=smem, size = 0x4, offset = 0x4, fixed_abs, tag = 'smem constant byte address 0x4 - core index']
  #allocation1 [shape = 'u32[144,128]{1,0:T(1,128)}', space=vmem, size = 0x12000, scoped, tag = 'internal scratch']
  %s0 = inlined_call_operand.vmem [shape: f32[49,256], index: 0, kind: input, shape index: {}]
  %s1 = inlined_call_operand.vmem [shape: f32[49,256], index: 1, kind: input, shape index: {}]
  %s2 = inlined_call_operand.vmem [shape: f32[49,256], index: 2, kind: input, shape index: {}]
  %s3 = inlined_call_operand.vmem [shape: f32[49,256], index: 3, kind: input, shape index: {}]
  %s4 = inlined_call_operand.vmem [shape: f32[49,256], index: 4, kind: output, shape index: {}]
  %s5 = sld [smem:[#allocation0]]
  $region26: #{simple_model_forward.6} parent=0
    _
  %s7 = ssub.s32 1, %s5
  %s8 = scalar_select 0, %s7, %s5
  // Predicated region
  $region2: #{simple_model_forward.6} parent=0 // pred_check
    _
  $region3: #{simple_model_forward.6} parent=0 // pred_check_branch
    %10 = sbr.rel (0) target = $region5
  $region4: #{simple_model_forward.6} parent=0 // pred_region
    _
  $region5: #{simple_model_forward.6} parent=0 // pred_fallthru
    _
  // Predicated region
  $region6: #{simple_model_forward.6} parent=0 // pred_check
    _
  $region7: #{simple_model_forward.6} parent=0 // pred_check_branch
    %12 = sbr.rel (0) target = $region9
  $region8: #{simple_model_forward.6} parent=0 // pred_region
    _
  $region9: #{simple_model_forward.6} parent=0 // pred_fallthru
    _
  // Predicated region
  $region10: #{simple_model_forward.6} parent=0 // pred_check
    _
  $region11: #{simple_model_forward.6} parent=0 // pred_check_branch
    %14 = sbr.rel (0) target = $region13
  $region12: #{simple_model_forward.6} parent=0 // pred_region
    _
  $region13: #{simple_model_forward.6} parent=0 // pred_fallthru
    _
  // Predicated region
  $region14: #{simple_model_forward.6} parent=0 // pred_check
    _
  $region15: #{simple_model_forward.6} parent=0 // pred_check_branch
    %16 = sbr.rel (0) target = $region17
  $region16: #{simple_model_forward.6} parent=0 // pred_region
    _
  $region17: #{simple_model_forward.6} parent=0 // pred_fallthru
    _
  %v17 = vld [vmem:[%s0] sm:$0xff]
  %v18 = vld [vmem:[%s0 + $0x8] sm:$0xff]
  %v19 = vld [vmem:[%s0 + $0x10] sm:$0xff]
  %v20 = vld [vmem:[%s0 + $0x18] sm:$0xff]
  %v21 = vld [vmem:[%s0 + $0x20] sm:$0xff]
  %v22 = vld [vmem:[%s0 + $0x28] sm:$0xff]
  %v23 = vld [vmem:[%s0 + $0x30] sm:$0xff]
  %v24 = vld [vmem:[%s0 + $0x38] sm:$0xff]
  %v25 = vld [vmem:[%s0 + $0x40] sm:$0xff]
  %v26 = vld [vmem:[%s0 + $0x48] sm:$0xff]
  %v27 = vld [vmem:[%s0 + $0x50] sm:$0xff]
  %v28 = vld [vmem:[%s0 + $0x58] sm:$0xff]
  %v29 = vld [vmem:[%s0 + $0x60] sm:$0x1]
  %v30 = vld [vmem:[%s0 + $0x68] sm:$0x1]
  %v31 = vld [vmem:[%s1] sm:$0xff]
  %v32 = vld [vmem:[%s1 + $0x8] sm:$0xff]
  %v33 = vld [vmem:[%s1 + $0x10] sm:$0xff]
  %v34 = vld [vmem:[%s1 + $0x18] sm:$0xff]
  %v35 = vld [vmem:[%s1 + $0x20] sm:$0xff]
  %v36 = vld [vmem:[%s1 + $0x28] sm:$0xff]
  %v37 = vld [vmem:[%s1 + $0x30] sm:$0xff]
  %v38 = vld [vmem:[%s1 + $0x38] sm:$0xff]
  %v39 = vld [vmem:[%s1 + $0x40] sm:$0xff]
  %v40 = vld [vmem:[%s1 + $0x48] sm:$0xff]
  %v41 = vld [vmem:[%s1 + $0x50] sm:$0xff]
  %v42 = vld [vmem:[%s1 + $0x58] sm:$0xff]
  %v43 = vld [vmem:[%s1 + $0x60] sm:$0x1]
  %v44 = vld [vmem:[%s1 + $0x68] sm:$0x1]
  %v45 = vmax.f32 %v17, %v31
  %v46 = vmax.f32 %v18, %v32
  %v47 = vmax.f32 %v19, %v33
  %v48 = vmax.f32 %v20, %v34
  %v49 = vmax.f32 %v21, %v35
  %v50 = vmax.f32 %v22, %v36
  %v51 = vmax.f32 %v23, %v37
  %v52 = vmax.f32 %v24, %v38
  %v53 = vmax.f32 %v25, %v39
  %v54 = vmax.f32 %v26, %v40
  %v55 = vmax.f32 %v27, %v41
  %v56 = vmax.f32 %v28, %v42
  %v57 = vmax.f32 %v29, %v43
  %v58 = vmax.f32 %v30, %v44
  %v59 = vld [vmem:[%s2] sm:$0xff]
  %v60 = vld [vmem:[%s2 + $0x8] sm:$0xff]
  %v61 = vld [vmem:[%s2 + $0x10] sm:$0xff]
  %v62 = vld [vmem:[%s2 + $0x18] sm:$0xff]
  %v63 = vld [vmem:[%s2 + $0x20] sm:$0xff]
  %v64 = vld [vmem:[%s2 + $0x28] sm:$0xff]
  %v65 = vld [vmem:[%s2 + $0x30] sm:$0xff]
  %v66 = vld [vmem:[%s2 + $0x38] sm:$0xff]
  %v67 = vld [vmem:[%s2 + $0x40] sm:$0xff]
  %v68 = vld [vmem:[%s2 + $0x48] sm:$0xff]
  %v69 = vld [vmem:[%s2 + $0x50] sm:$0xff]
  %v70 = vld [vmem:[%s2 + $0x58] sm:$0xff]
  %v71 = vld [vmem:[%s2 + $0x60] sm:$0x1]
  %v72 = vld [vmem:[%s2 + $0x68] sm:$0x1]
  %v73 = vld [vmem:[%s3] sm:$0xff]
  %v74 = vld [vmem:[%s3 + $0x8] sm:$0xff]
  %v75 = vld [vmem:[%s3 + $0x10] sm:$0xff]
  %v76 = vld [vmem:[%s3 + $0x18] sm:$0xff]
  %v77 = vld [vmem:[%s3 + $0x20] sm:$0xff]
  %v78 = vld [vmem:[%s3 + $0x28] sm:$0xff]
  %v79 = vld [vmem:[%s3 + $0x30] sm:$0xff]
  %v80 = vld [vmem:[%s3 + $0x38] sm:$0xff]
  %v81 = vld [vmem:[%s3 + $0x40] sm:$0xff]
  %v82 = vld [vmem:[%s3 + $0x48] sm:$0xff]
  %v83 = vld [vmem:[%s3 + $0x50] sm:$0xff]
  %v84 = vld [vmem:[%s3 + $0x58] sm:$0xff]
  %v85 = vld [vmem:[%s3 + $0x60] sm:$0x1]
  %v86 = vld [vmem:[%s3 + $0x68] sm:$0x1]
  %v87 = vmax.f32 %v59, %v73
  %v88 = vmax.f32 %v60, %v74
  %v89 = vmax.f32 %v61, %v75
  %v90 = vmax.f32 %v62, %v76
  %v91 = vmax.f32 %v63, %v77
  %v92 = vmax.f32 %v64, %v78
  %v93 = vmax.f32 %v65, %v79
  %v94 = vmax.f32 %v66, %v80
  %v95 = vmax.f32 %v67, %v81
  %v96 = vmax.f32 %v68, %v82
  %v97 = vmax.f32 %v69, %v83
  %v98 = vmax.f32 %v70, %v84
  %v99 = vmax.f32 %v71, %v85
  %v100 = vmax.f32 %v72, %v86
  %v101 = vmax.f32 %v45, %v87
  %v102 = vmax.f32 %v46, %v88
  %v103 = vmax.f32 %v47, %v89
  %v104 = vmax.f32 %v48, %v90
  %v105 = vmax.f32 %v49, %v91
  %v106 = vmax.f32 %v50, %v92
  %v107 = vmax.f32 %v51, %v93
  %v108 = vmax.f32 %v52, %v94
  %v109 = vmax.f32 %v53, %v95
  %v110 = vmax.f32 %v54, %v96
  %v111 = vmax.f32 %v55, %v97
  %v112 = vmax.f32 %v56, %v98
  %v113 = vmax.f32 %v57, %v99
  %v114 = vmax.f32 %v58, %v100
  %115 = vst [vmem:[%s4] sm:$0xff] %v101
  %116 = vst [vmem:[%s4 + $0x8] sm:$0xff] %v102
  %117 = vst [vmem:[%s4 + $0x10] sm:$0xff] %v103
  %118 = vst [vmem:[%s4 + $0x18] sm:$0xff] %v104
  %119 = vst [vmem:[%s4 + $0x20] sm:$0xff] %v105
  %120 = vst [vmem:[%s4 + $0x28] sm:$0xff] %v106
  %121 = vst [vmem:[%s4 + $0x30] sm:$0xff] %v107
  %122 = vst [vmem:[%s4 + $0x38] sm:$0xff] %v108
  %123 = vst [vmem:[%s4 + $0x40] sm:$0xff] %v109
  %124 = vst [vmem:[%s4 + $0x48] sm:$0xff] %v110
  %125 = vst [vmem:[%s4 + $0x50] sm:$0xff] %v111
  %126 = vst [vmem:[%s4 + $0x58] sm:$0xff] %v112
  %127 = vst [vmem:[%s4 + $0x60] sm:$0x1] %v113
  %128 = vst [vmem:[%s4 + $0x68] sm:$0x1] %v114
  // Predicated region
  $region18: #{simple_model_forward.6} parent=0 // pred_check
    _
  $region19: #{simple_model_forward.6} parent=0 // pred_check_branch
    %130 = sbr.rel (0) target = $region21
  $region20: #{simple_model_forward.6} parent=0 // pred_region
    _
  $region21: #{simple_model_forward.6} parent=0 // pred_fallthru
    _
  // Predicated region
  $region22: #{simple_model_forward.6} parent=0 // pred_check
    _
  $region23: #{simple_model_forward.6} parent=0 // pred_check_branch
    %132 = sbr.rel (0) target = $region25
  $region24: #{simple_model_forward.6} parent=0 // pred_region
    _
  $region25: #{simple_model_forward.6} parent=0 // pred_fallthru
    _

// kernel: simple_model_forward.7
$region0: #{simple_model_forward.7}
  #allocation0 [shape = 'u32[]', space=smem, size = 0x4, offset = 0x4, fixed_abs, tag = 'smem constant byte address 0x4 - core index']
  #allocation1 [shape = 'u32[144,128]{1,0:T(1,128)}', space=vmem, size = 0x12000, scoped, tag = 'internal scratch']
  %s0 = inlined_call_operand.vmem [shape: bf16[512,800], index: 0, kind: input, shape index: {}]
  %s1 = inlined_call_operand.vmem [shape: bf16[800,128], index: 1, kind: input, shape index: {}]
  %s2 = inlined_call_operand.vmem [shape: f32[1,128], index: 2, kind: input, shape index: {}]
  %s3 = inlined_call_operand.vmem [shape: f32[1,128], index: 3, kind: input, shape index: {}]
  %s4 = inlined_call_operand.vmem [shape: f32[512,128], index: 4, kind: output, shape index: {}]
  %s5 = sld [smem:[#allocation0]]
  $region49: #{simple_model_forward.7} parent=0
    _
  %s7 = ssub.s32 1, %s5
  %s8 = scalar_select 0, %s7, %s5
  loop: start=0, step=1, limit=4
  $region2: #{simple_model_forward.7} parent=0 // loop_pre_header
    _
  $region3: #{simple_model_forward.7} parent=0 // loop_header
    %s10 = sphi 0, %s14
    %p11 = scmp.ge.s32.totalorder %s10, 4
    %s20 = sphi 0, %s22
    %s23 = sphi 0, %s20
    %s24 = sphi 0, %s23
    %s40 = sphi 0, %s24
    %s44 = sphi 0, %s44
    %s46 = sphi 0, %s44
    %s47 = sphi 0, %s46
    %s61 = sphi 0, %s47
    %s65 = sphi 0, %s65
    %s67 = sphi 0, %s65
    %s68 = sphi 0, %s67
    %s82 = sphi 0, %s68
    %s86 = sphi 0, %s86
    %s88 = sphi 0, %s86
    %s89 = sphi 0, %s88
    %s103 = sphi 0, %s89
    %s109 = sphi 0, %s111
    %s112 = sphi 0, %s109
    %s113 = sphi 0, %s112
    %s129 = sphi 0, %s113
  $region4: #{simple_model_forward.7} parent=0 // loop_header_branch
    %13 = sbr.rel (%p11) target = $region8
  $region5: #{simple_model_forward.7} parent=0 // loop_body
    %s15 = ssub.s32 %s10, 1
    %s16 = ssub.s32 %s10, 2
    %s17 = sadd.s32 %s10, 1
    %s18 = ssub.s32 %s10, %s17
    %p19 = scmp.eq.s32.totalorder %s18, 0
    %s21 = sadd.s32 %s20, 1
    %s22 = scalar_select %p19, %s20, %s21
    %p25 = pneg %p19
    %p26 = scmp.eq.s32.totalorder %s10, 1
    %p27 = por %p25, %p26
    %p28 = scmp.ne.s32.totalorder %s20, %s23
    %p29 = scmp.eq.s32.totalorder %s10, 0
    %p30 = por %p28, %p29
    %p31 = scmp.ne.s32.totalorder %s20, %s23
    %p32 = scmp.eq.s32.totalorder %s15, 1
    %p33 = por %p31, %p32
    %p34 = scmp.ne.s32.totalorder %s23, %s24
    %p35 = scmp.eq.s32.totalorder %s15, 0
    %p36 = por %p34, %p35
    %p37 = scmp.ne.s32.totalorder %s23, %s24
    %p38 = scmp.eq.s32.totalorder %s16, 1
    %p39 = por %p37, %p38
    %p41 = scmp.ne.s32.totalorder %s24, %s40
    %p42 = scmp.eq.s32.totalorder %s16, 0
    %p43 = por %p41, %p42
    %s45 = sadd.s32 %s44, 1
    %p48 = scmp.eq.s32.totalorder %s10, 1
    %p49 = scmp.ne.s32.totalorder %s44, %s46
    %p50 = scmp.eq.s32.totalorder %s10, 0
    %p51 = por %p49, %p50
    %p52 = scmp.ne.s32.totalorder %s44, %s46
    %p53 = scmp.eq.s32.totalorder %s15, 1
    %p54 = por %p52, %p53
    %p55 = scmp.ne.s32.totalorder %s46, %s47
    %p56 = scmp.eq.s32.totalorder %s15, 0
    %p57 = por %p55, %p56
    %p58 = scmp.ne.s32.totalorder %s46, %s47
    %p59 = scmp.eq.s32.totalorder %s16, 1
    %p60 = por %p58, %p59
    %p62 = scmp.ne.s32.totalorder %s47, %s61
    %p63 = scmp.eq.s32.totalorder %s16, 0
    %p64 = por %p62, %p63
    %s66 = sadd.s32 %s65, 1
    %p69 = scmp.eq.s32.totalorder %s10, 1
    %p70 = scmp.ne.s32.totalorder %s65, %s67
    %p71 = scmp.eq.s32.totalorder %s10, 0
    %p72 = por %p70, %p71
    %p73 = scmp.ne.s32.totalorder %s65, %s67
    %p74 = scmp.eq.s32.totalorder %s15, 1
    %p75 = por %p73, %p74
    %p76 = scmp.ne.s32.totalorder %s67, %s68
    %p77 = scmp.eq.s32.totalorder %s15, 0
    %p78 = por %p76, %p77
    %p79 = scmp.ne.s32.totalorder %s67, %s68
    %p80 = scmp.eq.s32.totalorder %s16, 1
    %p81 = por %p79, %p80
    %p83 = scmp.ne.s32.totalorder %s68, %s82
    %p84 = scmp.eq.s32.totalorder %s16, 0
    %p85 = por %p83, %p84
    %s87 = sadd.s32 %s86, 1
    %p90 = scmp.eq.s32.totalorder %s10, 1
    %p91 = scmp.ne.s32.totalorder %s86, %s88
    %p92 = scmp.eq.s32.totalorder %s10, 0
    %p93 = por %p91, %p92
    %p94 = scmp.ne.s32.totalorder %s86, %s88
    %p95 = scmp.eq.s32.totalorder %s15, 1
    %p96 = por %p94, %p95
    %p97 = scmp.ne.s32.totalorder %s88, %s89
    %p98 = scmp.eq.s32.totalorder %s15, 0
    %p99 = por %p97, %p98
    %p100 = scmp.ne.s32.totalorder %s88, %s89
    %p101 = scmp.eq.s32.totalorder %s16, 1
    %p102 = por %p100, %p101
    %p104 = scmp.ne.s32.totalorder %s89, %s103
    %p105 = scmp.eq.s32.totalorder %s16, 0
    %p106 = por %p104, %p105
    %s107 = ssub.s32 %s10, %s17
    %p108 = scmp.eq.s32.totalorder %s107, 0
    %s110 = sadd.s32 %s109, 1
    %s111 = scalar_select %p108, %s109, %s110
    %p114 = pneg %p108
    %p115 = scmp.eq.s32.totalorder %s10, 1
    %p116 = por %p114, %p115
    %p117 = scmp.ne.s32.totalorder %s109, %s112
    %p118 = scmp.eq.s32.totalorder %s10, 0
    %p119 = por %p117, %p118
    %p120 = scmp.ne.s32.totalorder %s109, %s112
    %p121 = scmp.eq.s32.totalorder %s15, 1
    %p122 = por %p120, %p121
    %p123 = scmp.ne.s32.totalorder %s112, %s113
    %p124 = scmp.eq.s32.totalorder %s15, 0
    %p125 = por %p123, %p124
    %p126 = scmp.ne.s32.totalorder %s112, %s113
    %p127 = scmp.eq.s32.totalorder %s16, 1
    %p128 = por %p126, %p127
    %p130 = scmp.ne.s32.totalorder %s113, %s129
    %p131 = scmp.eq.s32.totalorder %s16, 0
    %p132 = por %p130, %p131
    %p133 = scmp.le.s32.totalorder 1, %s10
    %p134 = scmp.lt.s32.totalorder %s10, 3
    %p135 = pnand %p133, %p134
    %p136 = pneg %p135
    // Predicated region
    $region9: #{simple_model_forward.7} parent=5 // pred_check
      _
    $region10: #{simple_model_forward.7} parent=5 // pred_check_branch
      %138 = sbr.rel (%p135) target = $region12
    $region11: #{simple_model_forward.7} parent=5 // pred_region
      %s139 = ssub.s32 %s10, 1
      // Predicated region
      $region13: #{simple_model_forward.7} parent=11 // pred_check
        %p140 = pneg %p57
      $region14: #{simple_model_forward.7} parent=11 // pred_check_branch
        %142 = sbr.rel (%p140) target = $region16
      $region15: #{simple_model_forward.7} parent=11 // pred_region
        _
      $region16: #{simple_model_forward.7} parent=11 // pred_fallthru
        _
      // Predicated region
      $region17: #{simple_model_forward.7} parent=11 // pred_check
        %p143 = pneg %p78
      $region18: #{simple_model_forward.7} parent=11 // pred_check_branch
        %145 = sbr.rel (%p143) target = $region20
      $region19: #{simple_model_forward.7} parent=11 // pred_region
        _
      $region20: #{simple_model_forward.7} parent=11 // pred_fallthru
        _
      // Predicated region
      $region21: #{simple_model_forward.7} parent=11 // pred_check
        %p146 = pneg %p99
      $region22: #{simple_model_forward.7} parent=11 // pred_check_branch
        %148 = sbr.rel (%p146) target = $region24
      $region23: #{simple_model_forward.7} parent=11 // pred_region
        _
      $region24: #{simple_model_forward.7} parent=11 // pred_fallthru
        _
    $region12: #{simple_model_forward.7} parent=5 // pred_fallthru
      _
    %p149 = scmp.lt.s32.totalorder %s10, 2
    // Predicated region
    $region25: #{simple_model_forward.7} parent=5 // pred_check
      %p150 = pneg %p149
    $region26: #{simple_model_forward.7} parent=5 // pred_check_branch
      %152 = sbr.rel (%p150) target = $region28
    $region27: #{simple_model_forward.7} parent=5 // pred_region
      // Predicated region
      $region29: #{simple_model_forward.7} parent=27 // pred_check
        %p153 = pneg %p30
      $region30: #{simple_model_forward.7} parent=27 // pred_check_branch
        %155 = sbr.rel (%p153) target = $region32
      $region31: #{simple_model_forward.7} parent=27 // pred_region
        %s156 = smul.u32 32, %s10
        %p157 = scmp.lt.s32.totalorder %s156, 63
        %s158 = scalar_select %p157, %s156, 63
        %s159 = smul.addr %s158, 7
        %s160 = smul.addr %s159, 4
        %s161 = scalar_lea.vmem %s0, %s160
        %s162 = smul.u32 32, %s10
      $region32: #{simple_model_forward.7} parent=27 // pred_fallthru
        _
    $region28: #{simple_model_forward.7} parent=5 // pred_fallthru
      _
    %p163 = scmp.le.s32.totalorder 1, %s10
    %p164 = scmp.lt.s32.totalorder %s10, 3
    %p165 = pnand %p163, %p164
    %p166 = pneg %p165
    // Predicated region
    $region33: #{simple_model_forward.7} parent=5 // pred_check
      _
    $region34: #{simple_model_forward.7} parent=5 // pred_check_branch
      %168 = sbr.rel (%p165) target = $region36
    $region35: #{simple_model_forward.7} parent=5 // pred_region
      %s169 = ssub.s32 %s10, 1
      %s170 = smul.u32 32, %s15
      %p171 = scmp.lt.s32.totalorder %s170, 63
      %s172 = scalar_select %p171, %s170, 63
      %s173 = smul.addr %s172, 7
      %s174 = smul.addr %s173, 4
      %s175 = scalar_lea.vmem %s0, %s174
      %p176 = pneg %p36
      %p177 = pneg %p33
      %p178 = pneg %p57
      %p179 = pneg %p54
      %p180 = pneg %p78
      %p181 = pneg %p75
      %p182 = pneg %p99
      %p183 = pneg %p96
      %p184 = pneg %p125
      %p185 = pneg %p122
      %s186 = smul.u32 32, %s15
      %p187 = scmp.lt.s32.totalorder %s186, 63
      %s188 = scalar_select %p187, %s186, 63
      %s189 = smul.addr %s188, 8
      %s190 = scalar_lea.vmem %s4, %s189
      %s191 = smul.u32 32, %s15
      %p192 = scmp.lt.s32.totalorder %s191, 63
      %s193 = scalar_select %p192, %s191, 63
      %s194 = smul.addr %s193, 7
      %s195 = smul.addr %s194, 4
      %s196 = scalar_lea.vmem %s0, %s195
      %s197 = smul.u32 32, %s15
      %s198 = smul.u32 32, %s15
      %p199 = scmp.lt.s32.totalorder %s198, 63
      %s200 = scalar_select %p199, %s198, 63
      %s201 = smul.addr %s200, 8
      %s202 = scalar_lea.vmem %s4, %s201
      %s203 = smul.u32 32, %s15
      %v205 = vld [vmem:[%s196] sm:$0xff]
      %v206 = vld [vmem:[%s196 + $0x8] sm:$0xff]
      %v207 = vld [vmem:[%s196 + $0x10] sm:$0xff]
      %v208 = vld [vmem:[%s196 + $0x18] sm:$0xf]
      %v209 = vld [vmem:[%s196 + $0x1c] sm:$0xff]
      %v210 = vld [vmem:[%s196 + $0x24] sm:$0xff]
      %v211 = vld [vmem:[%s196 + $0x2c] sm:$0xff]
      %v212 = vld [vmem:[%s196 + $0x34] sm:$0xf]
      %v213 = vld [vmem:[%s196 + $0x38] sm:$0xff]
      %v214 = vld [vmem:[%s196 + $0x40] sm:$0xff]
      %v215 = vld [vmem:[%s196 + $0x48] sm:$0xff]
      %v216 = vld [vmem:[%s196 + $0x50] sm:$0xf]
      %v217 = vld [vmem:[%s196 + $0x54] sm:$0xff]
      %v218 = vld [vmem:[%s196 + $0x5c] sm:$0xff]
      %v219 = vld [vmem:[%s196 + $0x64] sm:$0xff]
      %v220 = vld [vmem:[%s196 + $0x6c] sm:$0xf]
      %v221 = vld [vmem:[%s196 + $0x70] sm:$0xff]
      %v222 = vld [vmem:[%s196 + $0x78] sm:$0xff]
      %v223 = vld [vmem:[%s196 + $0x80] sm:$0xff]
      %v224 = vld [vmem:[%s196 + $0x88] sm:$0xf]
      %v225 = vld [vmem:[%s196 + $0x8c] sm:$0xff]
      %v226 = vld [vmem:[%s196 + $0x94] sm:$0xff]
      %v227 = vld [vmem:[%s196 + $0x9c] sm:$0xff]
      %v228 = vld [vmem:[%s196 + $0xa4] sm:$0xf]
      %v229 = vld [vmem:[%s196 + $0xa8] sm:$0xff]
      %v230 = vld [vmem:[%s196 + $0xb0] sm:$0xff]
      %v231 = vld [vmem:[%s196 + $0xb8] sm:$0xff]
      %v232 = vld [vmem:[%s196 + $0xc0] sm:$0xf]
      %v233 = vld [vmem:[%s196 + $0xc4] sm:$0xff]
      %v234 = vld [vmem:[%s196 + $0xcc] sm:$0xff]
      %v235 = vld [vmem:[%s196 + $0xd4] sm:$0xff]
      %v236 = vld [vmem:[%s196 + $0xdc] sm:$0xf]
      %v237 = vld [vmem:[%s196 + $0xe0] sm:$0xff]
      %v238 = vld [vmem:[%s196 + $0xe8] sm:$0xff]
      %v239 = vld [vmem:[%s196 + $0xf0] sm:$0xff]
      %v240 = vld [vmem:[%s196 + $0xf8] sm:$0xf]
      %v241 = vld [vmem:[%s196 + $0xfc] sm:$0xff]
      %v242 = vld [vmem:[%s196 + $0x104] sm:$0xff]
      %v243 = vld [vmem:[%s196 + $0x10c] sm:$0xff]
      %v244 = vld [vmem:[%s196 + $0x114] sm:$0xf]
      %v245 = vld [vmem:[%s196 + $0x118] sm:$0xff]
      %v246 = vld [vmem:[%s196 + $0x120] sm:$0xff]
      %v247 = vld [vmem:[%s196 + $0x128] sm:$0xff]
      %v248 = vld [vmem:[%s196 + $0x130] sm:$0xf]
      %v249 = vld [vmem:[%s196 + $0x134] sm:$0xff]
      %v250 = vld [vmem:[%s196 + $0x13c] sm:$0xff]
      %v251 = vld [vmem:[%s196 + $0x144] sm:$0xff]
      %v252 = vld [vmem:[%s196 + $0x14c] sm:$0xf]
      %v253 = vld [vmem:[%s196 + $0x150] sm:$0xff]
      %v254 = vld [vmem:[%s196 + $0x158] sm:$0xff]
      %v255 = vld [vmem:[%s196 + $0x160] sm:$0xff]
      %v256 = vld [vmem:[%s196 + $0x168] sm:$0xf]
      %v257 = vld [vmem:[%s196 + $0x16c] sm:$0xff]
      %v258 = vld [vmem:[%s196 + $0x174] sm:$0xff]
      %v259 = vld [vmem:[%s196 + $0x17c] sm:$0xff]
      %v260 = vld [vmem:[%s196 + $0x184] sm:$0xf]
      %v261 = vld [vmem:[%s196 + $0x188] sm:$0xff]
      %v262 = vld [vmem:[%s196 + $0x190] sm:$0xff]
      %v263 = vld [vmem:[%s196 + $0x198] sm:$0xff]
      %v264 = vld [vmem:[%s196 + $0x1a0] sm:$0xf]
      %v265 = vld [vmem:[%s196 + $0x1a4] sm:$0xff]
      %v266 = vld [vmem:[%s196 + $0x1ac] sm:$0xff]
      %v267 = vld [vmem:[%s196 + $0x1b4] sm:$0xff]
      %v268 = vld [vmem:[%s196 + $0x1bc] sm:$0xf]
      %v269 = vld [vmem:[%s196 + $0x1c0] sm:$0xff]
      %v270 = vld [vmem:[%s196 + $0x1c8] sm:$0xff]
      %v271 = vld [vmem:[%s196 + $0x1d0] sm:$0xff]
      %v272 = vld [vmem:[%s196 + $0x1d8] sm:$0xf]
      %v273 = vld [vmem:[%s196 + $0x1dc] sm:$0xff]
      %v274 = vld [vmem:[%s196 + $0x1e4] sm:$0xff]
      %v275 = vld [vmem:[%s196 + $0x1ec] sm:$0xff]
      %v276 = vld [vmem:[%s196 + $0x1f4] sm:$0xf]
      %v277 = vld [vmem:[%s196 + $0x1f8] sm:$0xff]
      %v278 = vld [vmem:[%s196 + $0x200] sm:$0xff]
      %v279 = vld [vmem:[%s196 + $0x208] sm:$0xff]
      %v280 = vld [vmem:[%s196 + $0x210] sm:$0xf]
      %v281 = vld [vmem:[%s196 + $0x214] sm:$0xff]
      %v282 = vld [vmem:[%s196 + $0x21c] sm:$0xff]
      %v283 = vld [vmem:[%s196 + $0x224] sm:$0xff]
      %v284 = vld [vmem:[%s196 + $0x22c] sm:$0xf]
      %v285 = vld [vmem:[%s196 + $0x230] sm:$0xff]
      %v286 = vld [vmem:[%s196 + $0x238] sm:$0xff]
      %v287 = vld [vmem:[%s196 + $0x240] sm:$0xff]
      %v288 = vld [vmem:[%s196 + $0x248] sm:$0xf]
      %v289 = vld [vmem:[%s196 + $0x24c] sm:$0xff]
      %v290 = vld [vmem:[%s196 + $0x254] sm:$0xff]
      %v291 = vld [vmem:[%s196 + $0x25c] sm:$0xff]
      %v292 = vld [vmem:[%s196 + $0x264] sm:$0xf]
      %v293 = vld [vmem:[%s196 + $0x268] sm:$0xff]
      %v294 = vld [vmem:[%s196 + $0x270] sm:$0xff]
      %v295 = vld [vmem:[%s196 + $0x278] sm:$0xff]
      %v296 = vld [vmem:[%s196 + $0x280] sm:$0xf]
      %v297 = vld [vmem:[%s196 + $0x284] sm:$0xff]
      %v298 = vld [vmem:[%s196 + $0x28c] sm:$0xff]
      %v299 = vld [vmem:[%s196 + $0x294] sm:$0xff]
      %v300 = vld [vmem:[%s196 + $0x29c] sm:$0xf]
      %v301 = vld [vmem:[%s196 + $0x2a0] sm:$0xff]
      %v302 = vld [vmem:[%s196 + $0x2a8] sm:$0xff]
      %v303 = vld [vmem:[%s196 + $0x2b0] sm:$0xff]
      %v304 = vld [vmem:[%s196 + $0x2b8] sm:$0xf]
      %v305 = vld [vmem:[%s196 + $0x2bc] sm:$0xff]
      %v306 = vld [vmem:[%s196 + $0x2c4] sm:$0xff]
      %v307 = vld [vmem:[%s196 + $0x2cc] sm:$0xff]
      %v308 = vld [vmem:[%s196 + $0x2d4] sm:$0xf]
      %v309 = vld [vmem:[%s196 + $0x2d8] sm:$0xff]
      %v310 = vld [vmem:[%s196 + $0x2e0] sm:$0xff]
      %v311 = vld [vmem:[%s196 + $0x2e8] sm:$0xff]
      %v312 = vld [vmem:[%s196 + $0x2f0] sm:$0xf]
      %v313 = vld [vmem:[%s196 + $0x2f4] sm:$0xff]
      %v314 = vld [vmem:[%s196 + $0x2fc] sm:$0xff]
      %v315 = vld [vmem:[%s196 + $0x304] sm:$0xff]
      %v316 = vld [vmem:[%s196 + $0x30c] sm:$0xf]
      %v317 = vld [vmem:[%s196 + $0x310] sm:$0xff]
      %v318 = vld [vmem:[%s196 + $0x318] sm:$0xff]
      %v319 = vld [vmem:[%s196 + $0x320] sm:$0xff]
      %v320 = vld [vmem:[%s196 + $0x328] sm:$0xf]
      %v321 = vld [vmem:[%s196 + $0x32c] sm:$0xff]
      %v322 = vld [vmem:[%s196 + $0x334] sm:$0xff]
      %v323 = vld [vmem:[%s196 + $0x33c] sm:$0xff]
      %v324 = vld [vmem:[%s196 + $0x344] sm:$0xf]
      %v325 = vld [vmem:[%s196 + $0x348] sm:$0xff]
      %v326 = vld [vmem:[%s196 + $0x350] sm:$0xff]
      %v327 = vld [vmem:[%s196 + $0x358] sm:$0xff]
      %v328 = vld [vmem:[%s196 + $0x360] sm:$0xf]
      %v329 = vld [vmem:[%s196 + $0x364] sm:$0xff]
      %v330 = vld [vmem:[%s196 + $0x36c] sm:$0xff]
      %v331 = vld [vmem:[%s196 + $0x374] sm:$0xff]
      %v332 = vld [vmem:[%s196 + $0x37c] sm:$0xf]
      %v333 = vld [vmem:[%s1] sm:$0xf]
      %v334 = vld [vmem:[%s1 + $0x4] sm:$0xf]
      %v335 = vld [vmem:[%s1 + $0x8] sm:$0xf]
      %v336 = vld [vmem:[%s1 + $0xc] sm:$0xf]
      %v337 = vld [vmem:[%s1 + $0x10] sm:$0xf]
      %v338 = vld [vmem:[%s1 + $0x14] sm:$0xf]
      %v339 = vld [vmem:[%s1 + $0x18] sm:$0xf]
      %v340 = vld [vmem:[%s1 + $0x1c] sm:$0xf]
      %v341 = vld [vmem:[%s1 + $0x20] sm:$0xf]
      %v342 = vld [vmem:[%s1 + $0x24] sm:$0xf]
      %v343 = vld [vmem:[%s1 + $0x28] sm:$0xf]
      %v344 = vld [vmem:[%s1 + $0x2c] sm:$0xf]
      %v345 = vld [vmem:[%s1 + $0x30] sm:$0xf]
      %v346 = vld [vmem:[%s1 + $0x34] sm:$0xf]
      %v347 = vld [vmem:[%s1 + $0x38] sm:$0xf]
      %v348 = vld [vmem:[%s1 + $0x3c] sm:$0xf]
      %v349 = vld [vmem:[%s1 + $0x40] sm:$0xf]
      %v350 = vld [vmem:[%s1 + $0x44] sm:$0xf]
      %v351 = vld [vmem:[%s1 + $0x48] sm:$0xf]
      %v352 = vld [vmem:[%s1 + $0x4c] sm:$0xf]
      %v353 = vld [vmem:[%s1 + $0x50] sm:$0xf]
      %v354 = vld [vmem:[%s1 + $0x54] sm:$0xf]
      %v355 = vld [vmem:[%s1 + $0x58] sm:$0xf]
      %v356 = vld [vmem:[%s1 + $0x5c] sm:$0xf]
      %v357 = vld [vmem:[%s1 + $0x60] sm:$0xf]
      %v358 = vld [vmem:[%s1 + $0x64] sm:$0xf]
      %v359 = vld [vmem:[%s1 + $0x68] sm:$0xf]
      %v360 = vld [vmem:[%s1 + $0x6c] sm:$0xf]
      %v361 = vld [vmem:[%s1 + $0x70] sm:$0xf]
      %v362 = vld [vmem:[%s1 + $0x74] sm:$0xf]
      %v363 = vld [vmem:[%s1 + $0x78] sm:$0xf]
      %v364 = vld [vmem:[%s1 + $0x7c] sm:$0xf]
      %v365 = vld [vmem:[%s1 + $0x80] sm:$0xf]
      %v366 = vld [vmem:[%s1 + $0x84] sm:$0xf]
      %v367 = vld [vmem:[%s1 + $0x88] sm:$0xf]
      %v368 = vld [vmem:[%s1 + $0x8c] sm:$0xf]
      %v369 = vld [vmem:[%s1 + $0x90] sm:$0xf]
      %v370 = vld [vmem:[%s1 + $0x94] sm:$0xf]
      %v371 = vld [vmem:[%s1 + $0x98] sm:$0xf]
      %v372 = vld [vmem:[%s1 + $0x9c] sm:$0xf]
      %v373 = vld [vmem:[%s1 + $0xa0] sm:$0xf]
      %v374 = vld [vmem:[%s1 + $0xa4] sm:$0xf]
      %v375 = vld [vmem:[%s1 + $0xa8] sm:$0xf]
      %v376 = vld [vmem:[%s1 + $0xac] sm:$0xf]
      %v377 = vld [vmem:[%s1 + $0xb0] sm:$0xf]
      %v378 = vld [vmem:[%s1 + $0xb4] sm:$0xf]
      %v379 = vld [vmem:[%s1 + $0xb8] sm:$0xf]
      %v380 = vld [vmem:[%s1 + $0xbc] sm:$0xf]
      %v381 = vld [vmem:[%s1 + $0xc0] sm:$0xf]
      %v382 = vld [vmem:[%s1 + $0xc4] sm:$0xf]
      %v383 = vld [vmem:[%s1 + $0xc8] sm:$0xf]
      %v384 = vld [vmem:[%s1 + $0xcc] sm:$0xf]
      %v385 = vld [vmem:[%s1 + $0xd0] sm:$0xf]
      %v386 = vld [vmem:[%s1 + $0xd4] sm:$0xf]
      %v387 = vld [vmem:[%s1 + $0xd8] sm:$0xf]
      %v388 = vld [vmem:[%s1 + $0xdc] sm:$0xf]
      %v389 = vld [vmem:[%s1 + $0xe0] sm:$0xf]
      %v390 = vld [vmem:[%s1 + $0xe4] sm:$0xf]
      %v391 = vld [vmem:[%s1 + $0xe8] sm:$0xf]
      %v392 = vld [vmem:[%s1 + $0xec] sm:$0xf]
      %v393 = vld [vmem:[%s1 + $0xf0] sm:$0xf]
      %v394 = vld [vmem:[%s1 + $0xf4] sm:$0xf]
      %v395 = vld [vmem:[%s1 + $0xf8] sm:$0xf]
      %v396 = vld [vmem:[%s1 + $0xfc] sm:$0xf]
      %v397 = vld [vmem:[%s1 + $0x100] sm:$0xf]
      %v398 = vld [vmem:[%s1 + $0x104] sm:$0xf]
      %v399 = vld [vmem:[%s1 + $0x108] sm:$0xf]
      %v400 = vld [vmem:[%s1 + $0x10c] sm:$0xf]
      %v401 = vld [vmem:[%s1 + $0x110] sm:$0xf]
      %v402 = vld [vmem:[%s1 + $0x114] sm:$0xf]
      %v403 = vld [vmem:[%s1 + $0x118] sm:$0xf]
      %v404 = vld [vmem:[%s1 + $0x11c] sm:$0xf]
      %v405 = vld [vmem:[%s1 + $0x120] sm:$0xf]
      %v406 = vld [vmem:[%s1 + $0x124] sm:$0xf]
      %v407 = vld [vmem:[%s1 + $0x128] sm:$0xf]
      %v408 = vld [vmem:[%s1 + $0x12c] sm:$0xf]
      %v409 = vld [vmem:[%s1 + $0x130] sm:$0xf]
      %v410 = vld [vmem:[%s1 + $0x134] sm:$0xf]
      %v411 = vld [vmem:[%s1 + $0x138] sm:$0xf]
      %v412 = vld [vmem:[%s1 + $0x13c] sm:$0xf]
      %v413 = vld [vmem:[%s1 + $0x140] sm:$0xf]
      %v414 = vld [vmem:[%s1 + $0x144] sm:$0xf]
      %v415 = vld [vmem:[%s1 + $0x148] sm:$0xf]
      %v416 = vld [vmem:[%s1 + $0x14c] sm:$0xf]
      %v417 = vld [vmem:[%s1 + $0x150] sm:$0xf]
      %v418 = vld [vmem:[%s1 + $0x154] sm:$0xf]
      %v419 = vld [vmem:[%s1 + $0x158] sm:$0xf]
      %v420 = vld [vmem:[%s1 + $0x15c] sm:$0xf]
      %v421 = vld [vmem:[%s1 + $0x160] sm:$0xf]
      %v422 = vld [vmem:[%s1 + $0x164] sm:$0xf]
      %v423 = vld [vmem:[%s1 + $0x168] sm:$0xf]
      %v424 = vld [vmem:[%s1 + $0x16c] sm:$0xf]
      %v425 = vld [vmem:[%s1 + $0x170] sm:$0xf]
      %v426 = vld [vmem:[%s1 + $0x174] sm:$0xf]
      %v427 = vld [vmem:[%s1 + $0x178] sm:$0xf]
      %v428 = vld [vmem:[%s1 + $0x17c] sm:$0xf]
      %v429 = vld [vmem:[%s1 + $0x180] sm:$0xf]
      %v430 = vld [vmem:[%s1 + $0x184] sm:$0xf]
      %v431 = vld [vmem:[%s1 + $0x188] sm:$0xf]
      %v432 = vld [vmem:[%s1 + $0x18c] sm:$0xf]
      %v561 = vunpack.c.l.b16 %v205
      %v562 = vunpack.c.h.b16 %v205
      %v563 = vunpack.c.l.b16 %v206
      %v564 = vunpack.c.h.b16 %v206
      %v565 = vunpack.c.l.b16 %v207
      %v566 = vunpack.c.h.b16 %v207
      %v567 = vunpack.c.l.b16 %v208
      %v568 = vunpack.c.l.b16 %v209
      %v569 = vunpack.c.h.b16 %v209
      %v570 = vunpack.c.l.b16 %v210
      %v571 = vunpack.c.h.b16 %v210
      %v572 = vunpack.c.l.b16 %v211
      %v573 = vunpack.c.h.b16 %v211
      %v574 = vunpack.c.l.b16 %v212
      %v575 = vunpack.c.l.b16 %v213
      %v576 = vunpack.c.h.b16 %v213
      %v577 = vunpack.c.l.b16 %v214
      %v578 = vunpack.c.h.b16 %v214
      %v579 = vunpack.c.l.b16 %v215
      %v580 = vunpack.c.h.b16 %v215
      %v581 = vunpack.c.l.b16 %v216
      %v582 = vunpack.c.l.b16 %v217
      %v583 = vunpack.c.h.b16 %v217
      %v584 = vunpack.c.l.b16 %v218
      %v585 = vunpack.c.h.b16 %v218
      %v586 = vunpack.c.l.b16 %v219
      %v587 = vunpack.c.h.b16 %v219
      %v588 = vunpack.c.l.b16 %v220
      %v589 = vunpack.c.l.b16 %v221
      %v590 = vunpack.c.h.b16 %v221
      %v591 = vunpack.c.l.b16 %v222
      %v592 = vunpack.c.h.b16 %v222
      %v593 = vunpack.c.l.b16 %v223
      %v594 = vunpack.c.h.b16 %v223
      %v595 = vunpack.c.l.b16 %v224
      %v596 = vunpack.c.l.b16 %v225
      %v597 = vunpack.c.h.b16 %v225
      %v598 = vunpack.c.l.b16 %v226
      %v599 = vunpack.c.h.b16 %v226
      %v600 = vunpack.c.l.b16 %v227
      %v601 = vunpack.c.h.b16 %v227
      %v602 = vunpack.c.l.b16 %v228
      %v603 = vunpack.c.l.b16 %v229
      %v604 = vunpack.c.h.b16 %v229
      %v605 = vunpack.c.l.b16 %v230
      %v606 = vunpack.c.h.b16 %v230
      %v607 = vunpack.c.l.b16 %v231
      %v608 = vunpack.c.h.b16 %v231
      %v609 = vunpack.c.l.b16 %v232
      %v610 = vunpack.c.l.b16 %v233
      %v611 = vunpack.c.h.b16 %v233
      %v612 = vunpack.c.l.b16 %v234
      %v613 = vunpack.c.h.b16 %v234
      %v614 = vunpack.c.l.b16 %v235
      %v615 = vunpack.c.h.b16 %v235
      %v616 = vunpack.c.l.b16 %v236
      %v617 = vunpack.c.l.b16 %v237
      %v618 = vunpack.c.h.b16 %v237
      %v619 = vunpack.c.l.b16 %v238
      %v620 = vunpack.c.h.b16 %v238
      %v621 = vunpack.c.l.b16 %v239
      %v622 = vunpack.c.h.b16 %v239
      %v623 = vunpack.c.l.b16 %v240
      %v624 = vunpack.c.l.b16 %v241
      %v625 = vunpack.c.h.b16 %v241
      %v626 = vunpack.c.l.b16 %v242
      %v627 = vunpack.c.h.b16 %v242
      %v628 = vunpack.c.l.b16 %v243
      %v629 = vunpack.c.h.b16 %v243
      %v630 = vunpack.c.l.b16 %v244
      %v631 = vunpack.c.l.b16 %v245
      %v632 = vunpack.c.h.b16 %v245
      %v633 = vunpack.c.l.b16 %v246
      %v634 = vunpack.c.h.b16 %v246
      %v635 = vunpack.c.l.b16 %v247
      %v636 = vunpack.c.h.b16 %v247
      %v637 = vunpack.c.l.b16 %v248
      %v638 = vunpack.c.l.b16 %v249
      %v639 = vunpack.c.h.b16 %v249
      %v640 = vunpack.c.l.b16 %v250
      %v641 = vunpack.c.h.b16 %v250
      %v642 = vunpack.c.l.b16 %v251
      %v643 = vunpack.c.h.b16 %v251
      %v644 = vunpack.c.l.b16 %v252
      %v645 = vunpack.c.l.b16 %v253
      %v646 = vunpack.c.h.b16 %v253
      %v647 = vunpack.c.l.b16 %v254
      %v648 = vunpack.c.h.b16 %v254
      %v649 = vunpack.c.l.b16 %v255
      %v650 = vunpack.c.h.b16 %v255
      %v651 = vunpack.c.l.b16 %v256
      %v652 = vunpack.c.l.b16 %v257
      %v653 = vunpack.c.h.b16 %v257
      %v654 = vunpack.c.l.b16 %v258
      %v655 = vunpack.c.h.b16 %v258
      %v656 = vunpack.c.l.b16 %v259
      %v657 = vunpack.c.h.b16 %v259
      %v658 = vunpack.c.l.b16 %v260
      %v659 = vunpack.c.l.b16 %v261
      %v660 = vunpack.c.h.b16 %v261
      %v661 = vunpack.c.l.b16 %v262
      %v662 = vunpack.c.h.b16 %v262
      %v663 = vunpack.c.l.b16 %v263
      %v664 = vunpack.c.h.b16 %v263
      %v665 = vunpack.c.l.b16 %v264
      %v666 = vunpack.c.l.b16 %v265
      %v667 = vunpack.c.h.b16 %v265
      %v668 = vunpack.c.l.b16 %v266
      %v669 = vunpack.c.h.b16 %v266
      %v670 = vunpack.c.l.b16 %v267
      %v671 = vunpack.c.h.b16 %v267
      %v672 = vunpack.c.l.b16 %v268
      %v673 = vunpack.c.l.b16 %v269
      %v674 = vunpack.c.h.b16 %v269
      %v675 = vunpack.c.l.b16 %v270
      %v676 = vunpack.c.h.b16 %v270
      %v677 = vunpack.c.l.b16 %v271
      %v678 = vunpack.c.h.b16 %v271
      %v679 = vunpack.c.l.b16 %v272
      %v680 = vunpack.c.l.b16 %v273
      %v681 = vunpack.c.h.b16 %v273
      %v682 = vunpack.c.l.b16 %v274
      %v683 = vunpack.c.h.b16 %v274
      %v684 = vunpack.c.l.b16 %v275
      %v685 = vunpack.c.h.b16 %v275
      %v686 = vunpack.c.l.b16 %v276
      %v687 = vunpack.c.l.b16 %v277
      %v688 = vunpack.c.h.b16 %v277
      %v689 = vunpack.c.l.b16 %v278
      %v690 = vunpack.c.h.b16 %v278
      %v691 = vunpack.c.l.b16 %v279
      %v692 = vunpack.c.h.b16 %v279
      %v693 = vunpack.c.l.b16 %v280
      %v694 = vunpack.c.l.b16 %v281
      %v695 = vunpack.c.h.b16 %v281
      %v696 = vunpack.c.l.b16 %v282
      %v697 = vunpack.c.h.b16 %v282
      %v698 = vunpack.c.l.b16 %v283
      %v699 = vunpack.c.h.b16 %v283
      %v700 = vunpack.c.l.b16 %v284
      %v701 = vunpack.c.l.b16 %v285
      %v702 = vunpack.c.h.b16 %v285
      %v703 = vunpack.c.l.b16 %v286
      %v704 = vunpack.c.h.b16 %v286
      %v705 = vunpack.c.l.b16 %v287
      %v706 = vunpack.c.h.b16 %v287
      %v707 = vunpack.c.l.b16 %v288
      %v708 = vunpack.c.l.b16 %v289
      %v709 = vunpack.c.h.b16 %v289
      %v710 = vunpack.c.l.b16 %v290
      %v711 = vunpack.c.h.b16 %v290
      %v712 = vunpack.c.l.b16 %v291
      %v713 = vunpack.c.h.b16 %v291
      %v714 = vunpack.c.l.b16 %v292
      %v715 = vunpack.c.l.b16 %v293
      %v716 = vunpack.c.h.b16 %v293
      %v717 = vunpack.c.l.b16 %v294
      %v718 = vunpack.c.h.b16 %v294
      %v719 = vunpack.c.l.b16 %v295
      %v720 = vunpack.c.h.b16 %v295
      %v721 = vunpack.c.l.b16 %v296
      %v722 = vunpack.c.l.b16 %v297
      %v723 = vunpack.c.h.b16 %v297
      %v724 = vunpack.c.l.b16 %v298
      %v725 = vunpack.c.h.b16 %v298
      %v726 = vunpack.c.l.b16 %v299
      %v727 = vunpack.c.h.b16 %v299
      %v728 = vunpack.c.l.b16 %v300
      %v729 = vunpack.c.l.b16 %v301
      %v730 = vunpack.c.h.b16 %v301
      %v731 = vunpack.c.l.b16 %v302
      %v732 = vunpack.c.h.b16 %v302
      %v733 = vunpack.c.l.b16 %v303
      %v734 = vunpack.c.h.b16 %v303
      %v735 = vunpack.c.l.b16 %v304
      %v736 = vunpack.c.l.b16 %v305
      %v737 = vunpack.c.h.b16 %v305
      %v738 = vunpack.c.l.b16 %v306
      %v739 = vunpack.c.h.b16 %v306
      %v740 = vunpack.c.l.b16 %v307
      %v741 = vunpack.c.h.b16 %v307
      %v742 = vunpack.c.l.b16 %v308
      %v743 = vunpack.c.l.b16 %v309
      %v744 = vunpack.c.h.b16 %v309
      %v745 = vunpack.c.l.b16 %v310
      %v746 = vunpack.c.h.b16 %v310
      %v747 = vunpack.c.l.b16 %v311
      %v748 = vunpack.c.h.b16 %v311
      %v749 = vunpack.c.l.b16 %v312
      %v750 = vunpack.c.l.b16 %v313
      %v751 = vunpack.c.h.b16 %v313
      %v752 = vunpack.c.l.b16 %v314
      %v753 = vunpack.c.h.b16 %v314
      %v754 = vunpack.c.l.b16 %v315
      %v755 = vunpack.c.h.b16 %v315
      %v756 = vunpack.c.l.b16 %v316
      %v757 = vunpack.c.l.b16 %v317
      %v758 = vunpack.c.h.b16 %v317
      %v759 = vunpack.c.l.b16 %v318
      %v760 = vunpack.c.h.b16 %v318
      %v761 = vunpack.c.l.b16 %v319
      %v762 = vunpack.c.h.b16 %v319
      %v763 = vunpack.c.l.b16 %v320
      %v764 = vunpack.c.l.b16 %v321
      %v765 = vunpack.c.h.b16 %v321
      %v766 = vunpack.c.l.b16 %v322
      %v767 = vunpack.c.h.b16 %v322
      %v768 = vunpack.c.l.b16 %v323
      %v769 = vunpack.c.h.b16 %v323
      %v770 = vunpack.c.l.b16 %v324
      %v771 = vunpack.c.l.b16 %v325
      %v772 = vunpack.c.h.b16 %v325
      %v773 = vunpack.c.l.b16 %v326
      %v774 = vunpack.c.h.b16 %v326
      %v775 = vunpack.c.l.b16 %v327
      %v776 = vunpack.c.h.b16 %v327
      %v777 = vunpack.c.l.b16 %v328
      %v778 = vunpack.c.l.b16 %v329
      %v779 = vunpack.c.h.b16 %v329
      %v780 = vunpack.c.l.b16 %v330
      %v781 = vunpack.c.h.b16 %v330
      %v782 = vunpack.c.l.b16 %v331
      %v783 = vunpack.c.h.b16 %v331
      %v784 = vunpack.c.l.b16 %v332
      %v785 = vpack.c.b16 %v568, %v561
      %v786 = vpack.c.b16 %v569, %v562
      %v787 = vpack.c.b16 %v570, %v563
      %v788 = vpack.c.b16 %v571, %v564
      %v789 = vpack.c.b16 %v572, %v565
      %v790 = vpack.c.b16 %v573, %v566
      %v791 = vpack.c.b16 %v574, %v567
      %v792 = vpack.c.b16 %v582, %v575
      %v793 = vpack.c.b16 %v583, %v576
      %v794 = vpack.c.b16 %v584, %v577
      %v795 = vpack.c.b16 %v585, %v578
      %v796 = vpack.c.b16 %v586, %v579
      %v797 = vpack.c.b16 %v587, %v580
      %v798 = vpack.c.b16 %v588, %v581
      %v799 = vpack.c.b16 %v596, %v589
      %v800 = vpack.c.b16 %v597, %v590
      %v801 = vpack.c.b16 %v598, %v591
      %v802 = vpack.c.b16 %v599, %v592
      %v803 = vpack.c.b16 %v600, %v593
      %v804 = vpack.c.b16 %v601, %v594
      %v805 = vpack.c.b16 %v602, %v595
      %v806 = vpack.c.b16 %v610, %v603
      %v807 = vpack.c.b16 %v611, %v604
      %v808 = vpack.c.b16 %v612, %v605
      %v809 = vpack.c.b16 %v613, %v606
      %v810 = vpack.c.b16 %v614, %v607
      %v811 = vpack.c.b16 %v615, %v608
      %v812 = vpack.c.b16 %v616, %v609
      %v813 = vpack.c.b16 %v624, %v617
      %v814 = vpack.c.b16 %v625, %v618
      %v815 = vpack.c.b16 %v626, %v619
      %v816 = vpack.c.b16 %v627, %v620
      %v817 = vpack.c.b16 %v628, %v621
      %v818 = vpack.c.b16 %v629, %v622
      %v819 = vpack.c.b16 %v630, %v623
      %v820 = vpack.c.b16 %v638, %v631
      %v821 = vpack.c.b16 %v639, %v632
      %v822 = vpack.c.b16 %v640, %v633
      %v823 = vpack.c.b16 %v641, %v634
      %v824 = vpack.c.b16 %v642, %v635
      %v825 = vpack.c.b16 %v643, %v636
      %v826 = vpack.c.b16 %v644, %v637
      %v827 = vpack.c.b16 %v652, %v645
      %v828 = vpack.c.b16 %v653, %v646
      %v829 = vpack.c.b16 %v654, %v647
      %v830 = vpack.c.b16 %v655, %v648
      %v831 = vpack.c.b16 %v656, %v649
      %v832 = vpack.c.b16 %v657, %v650
      %v833 = vpack.c.b16 %v658, %v651
      %v834 = vpack.c.b16 %v666, %v659
      %v835 = vpack.c.b16 %v667, %v660
      %v836 = vpack.c.b16 %v668, %v661
      %v837 = vpack.c.b16 %v669, %v662
      %v838 = vpack.c.b16 %v670, %v663
      %v839 = vpack.c.b16 %v671, %v664
      %v840 = vpack.c.b16 %v672, %v665
      %v841 = vpack.c.b16 %v680, %v673
      %v842 = vpack.c.b16 %v681, %v674
      %v843 = vpack.c.b16 %v682, %v675
      %v844 = vpack.c.b16 %v683, %v676
      %v845 = vpack.c.b16 %v684, %v677
      %v846 = vpack.c.b16 %v685, %v678
      %v847 = vpack.c.b16 %v686, %v679
      %v848 = vpack.c.b16 %v694, %v687
      %v849 = vpack.c.b16 %v695, %v688
      %v850 = vpack.c.b16 %v696, %v689
      %v851 = vpack.c.b16 %v697, %v690
      %v852 = vpack.c.b16 %v698, %v691
      %v853 = vpack.c.b16 %v699, %v692
      %v854 = vpack.c.b16 %v700, %v693
      %v855 = vpack.c.b16 %v708, %v701
      %v856 = vpack.c.b16 %v709, %v702
      %v857 = vpack.c.b16 %v710, %v703
      %v858 = vpack.c.b16 %v711, %v704
      %v859 = vpack.c.b16 %v712, %v705
      %v860 = vpack.c.b16 %v713, %v706
      %v861 = vpack.c.b16 %v714, %v707
      %v862 = vpack.c.b16 %v722, %v715
      %v863 = vpack.c.b16 %v723, %v716
      %v864 = vpack.c.b16 %v724, %v717
      %v865 = vpack.c.b16 %v725, %v718
      %v866 = vpack.c.b16 %v726, %v719
      %v867 = vpack.c.b16 %v727, %v720
      %v868 = vpack.c.b16 %v728, %v721
      %v869 = vpack.c.b16 %v736, %v729
      %v870 = vpack.c.b16 %v737, %v730
      %v871 = vpack.c.b16 %v738, %v731
      %v872 = vpack.c.b16 %v739, %v732
      %v873 = vpack.c.b16 %v740, %v733
      %v874 = vpack.c.b16 %v741, %v734
      %v875 = vpack.c.b16 %v742, %v735
      %v876 = vpack.c.b16 %v750, %v743
      %v877 = vpack.c.b16 %v751, %v744
      %v878 = vpack.c.b16 %v752, %v745
      %v879 = vpack.c.b16 %v753, %v746
      %v880 = vpack.c.b16 %v754, %v747
      %v881 = vpack.c.b16 %v755, %v748
      %v882 = vpack.c.b16 %v756, %v749
      %v883 = vpack.c.b16 %v764, %v757
      %v884 = vpack.c.b16 %v765, %v758
      %v885 = vpack.c.b16 %v766, %v759
      %v886 = vpack.c.b16 %v767, %v760
      %v887 = vpack.c.b16 %v768, %v761
      %v888 = vpack.c.b16 %v769, %v762
      %v889 = vpack.c.b16 %v770, %v763
      %v890 = vpack.c.b16 %v778, %v771
      %v891 = vpack.c.b16 %v779, %v772
      %v892 = vpack.c.b16 %v780, %v773
      %v893 = vpack.c.b16 %v781, %v774
      %v894 = vpack.c.b16 %v782, %v775
      %v895 = vpack.c.b16 %v783, %v776
      %v896 = vpack.c.b16 %v784, %v777
      %v1093 = vunpack.c.l.b16 %v333
      %v1094 = vunpack.c.l.b16 %v334
      %v1095 = vunpack.c.l.b16 %v335
      %v1096 = vunpack.c.l.b16 %v336
      %v1097 = vunpack.c.l.b16 %v337
      %v1098 = vunpack.c.l.b16 %v338
      %v1099 = vunpack.c.l.b16 %v339
      %v1100 = vunpack.c.l.b16 %v340
      %v1101 = vunpack.c.l.b16 %v341
      %v1102 = vunpack.c.l.b16 %v342
      %v1103 = vunpack.c.l.b16 %v343
      %v1104 = vunpack.c.l.b16 %v344
      %v1105 = vunpack.c.l.b16 %v345
      %v1106 = vunpack.c.l.b16 %v346
      %v1107 = vunpack.c.l.b16 %v347
      %v1108 = vunpack.c.l.b16 %v348
      %v1109 = vunpack.c.l.b16 %v349
      %v1110 = vunpack.c.l.b16 %v350
      %v1111 = vunpack.c.l.b16 %v351
      %v1112 = vunpack.c.l.b16 %v352
      %v1113 = vunpack.c.l.b16 %v353
      %v1114 = vunpack.c.l.b16 %v354
      %v1115 = vunpack.c.l.b16 %v355
      %v1116 = vunpack.c.l.b16 %v356
      %v1117 = vunpack.c.l.b16 %v357
      %v1118 = vunpack.c.l.b16 %v358
      %v1119 = vunpack.c.l.b16 %v359
      %v1120 = vunpack.c.l.b16 %v360
      %v1121 = vunpack.c.l.b16 %v361
      %v1122 = vunpack.c.l.b16 %v362
      %v1123 = vunpack.c.l.b16 %v363
      %v1124 = vunpack.c.l.b16 %v364
      %v1125 = vunpack.c.l.b16 %v365
      %v1126 = vunpack.c.l.b16 %v366
      %v1127 = vunpack.c.l.b16 %v367
      %v1128 = vunpack.c.l.b16 %v368
      %v1129 = vunpack.c.l.b16 %v369
      %v1130 = vunpack.c.l.b16 %v370
      %v1131 = vunpack.c.l.b16 %v371
      %v1132 = vunpack.c.l.b16 %v372
      %v1133 = vunpack.c.l.b16 %v373
      %v1134 = vunpack.c.l.b16 %v374
      %v1135 = vunpack.c.l.b16 %v375
      %v1136 = vunpack.c.l.b16 %v376
      %v1137 = vunpack.c.l.b16 %v377
      %v1138 = vunpack.c.l.b16 %v378
      %v1139 = vunpack.c.l.b16 %v379
      %v1140 = vunpack.c.l.b16 %v380
      %v1141 = vunpack.c.l.b16 %v381
      %v1142 = vunpack.c.l.b16 %v382
      %v1143 = vunpack.c.l.b16 %v383
      %v1144 = vunpack.c.l.b16 %v384
      %v1145 = vunpack.c.l.b16 %v385
      %v1146 = vunpack.c.l.b16 %v386
      %v1147 = vunpack.c.l.b16 %v387
      %v1148 = vunpack.c.l.b16 %v388
      %v1149 = vunpack.c.l.b16 %v389
      %v1150 = vunpack.c.l.b16 %v390
      %v1151 = vunpack.c.l.b16 %v391
      %v1152 = vunpack.c.l.b16 %v392
      %v1153 = vunpack.c.l.b16 %v393
      %v1154 = vunpack.c.l.b16 %v394
      %v1155 = vunpack.c.l.b16 %v395
      %v1156 = vunpack.c.l.b16 %v396
      %v1157 = vunpack.c.l.b16 %v397
      %v1158 = vunpack.c.l.b16 %v398
      %v1159 = vunpack.c.l.b16 %v399
      %v1160 = vunpack.c.l.b16 %v400
      %v1161 = vunpack.c.l.b16 %v401
      %v1162 = vunpack.c.l.b16 %v402
      %v1163 = vunpack.c.l.b16 %v403
      %v1164 = vunpack.c.l.b16 %v404
      %v1165 = vunpack.c.l.b16 %v405
      %v1166 = vunpack.c.l.b16 %v406
      %v1167 = vunpack.c.l.b16 %v407
      %v1168 = vunpack.c.l.b16 %v408
      %v1169 = vunpack.c.l.b16 %v409
      %v1170 = vunpack.c.l.b16 %v410
      %v1171 = vunpack.c.l.b16 %v411
      %v1172 = vunpack.c.l.b16 %v412
      %v1173 = vunpack.c.l.b16 %v413
      %v1174 = vunpack.c.l.b16 %v414
      %v1175 = vunpack.c.l.b16 %v415
      %v1176 = vunpack.c.l.b16 %v416
      %v1177 = vunpack.c.l.b16 %v417
      %v1178 = vunpack.c.l.b16 %v418
      %v1179 = vunpack.c.l.b16 %v419
      %v1180 = vunpack.c.l.b16 %v420
      %v1181 = vunpack.c.l.b16 %v421
      %v1182 = vunpack.c.l.b16 %v422
      %v1183 = vunpack.c.l.b16 %v423
      %v1184 = vunpack.c.l.b16 %v424
      %v1185 = vunpack.c.l.b16 %v425
      %v1186 = vunpack.c.l.b16 %v426
      %v1187 = vunpack.c.l.b16 %v427
      %v1188 = vunpack.c.l.b16 %v428
      %v1189 = vunpack.c.l.b16 %v429
      %v1190 = vunpack.c.l.b16 %v430
      %v1191 = vunpack.c.l.b16 %v431
      %v1192 = vunpack.c.l.b16 %v432
      %v1193 = vpack.c.b16 %v1094, %v1093
      %v1194 = vpack.c.b16 %v1096, %v1095
      %v1195 = vpack.c.b16 %v1098, %v1097
      %v1196 = vpack.c.b16 %v1100, %v1099
      %v1197 = vpack.c.b16 %v1102, %v1101
      %v1198 = vpack.c.b16 %v1104, %v1103
      %v1199 = vpack.c.b16 %v1106, %v1105
      %v1200 = vpack.c.b16 %v1108, %v1107
      %v1201 = vpack.c.b16 %v1110, %v1109
      %v1202 = vpack.c.b16 %v1112, %v1111
      %v1203 = vpack.c.b16 %v1114, %v1113
      %v1204 = vpack.c.b16 %v1116, %v1115
      %v1205 = vpack.c.b16 %v1118, %v1117
      %v1206 = vpack.c.b16 %v1120, %v1119
      %v1207 = vpack.c.b16 %v1122, %v1121
      %v1208 = vpack.c.b16 %v1124, %v1123
      %v1209 = vpack.c.b16 %v1126, %v1125
      %v1210 = vpack.c.b16 %v1128, %v1127
      %v1211 = vpack.c.b16 %v1130, %v1129
      %v1212 = vpack.c.b16 %v1132, %v1131
      %v1213 = vpack.c.b16 %v1134, %v1133
      %v1214 = vpack.c.b16 %v1136, %v1135
      %v1215 = vpack.c.b16 %v1138, %v1137
      %v1216 = vpack.c.b16 %v1140, %v1139
      %v1217 = vpack.c.b16 %v1142, %v1141
      %v1218 = vpack.c.b16 %v1144, %v1143
      %v1219 = vpack.c.b16 %v1146, %v1145
      %v1220 = vpack.c.b16 %v1148, %v1147
      %v1221 = vpack.c.b16 %v1150, %v1149
      %v1222 = vpack.c.b16 %v1152, %v1151
      %v1223 = vpack.c.b16 %v1154, %v1153
      %v1224 = vpack.c.b16 %v1156, %v1155
      %v1225 = vpack.c.b16 %v1158, %v1157
      %v1226 = vpack.c.b16 %v1160, %v1159
      %v1227 = vpack.c.b16 %v1162, %v1161
      %v1228 = vpack.c.b16 %v1164, %v1163
      %v1229 = vpack.c.b16 %v1166, %v1165
      %v1230 = vpack.c.b16 %v1168, %v1167
      %v1231 = vpack.c.b16 %v1170, %v1169
      %v1232 = vpack.c.b16 %v1172, %v1171
      %v1233 = vpack.c.b16 %v1174, %v1173
      %v1234 = vpack.c.b16 %v1176, %v1175
      %v1235 = vpack.c.b16 %v1178, %v1177
      %v1236 = vpack.c.b16 %v1180, %v1179
      %v1237 = vpack.c.b16 %v1182, %v1181
      %v1238 = vpack.c.b16 %v1184, %v1183
      %v1239 = vpack.c.b16 %v1186, %v1185
      %v1240 = vpack.c.b16 %v1188, %v1187
      %v1241 = vpack.c.b16 %v1190, %v1189
      %v1242 = vpack.c.b16 %v1192, %v1191
      %vm1293 = vcmask 261120
      %v1295 = vsel %vm1293, %v791, 0
      %v1298 = vsel %vm1293, %v798, 0
      %v1301 = vsel %vm1293, %v805, 0
      %v1304 = vsel %vm1293, %v812, 0
      %v1307 = vsel %vm1293, %v819, 0
      %v1310 = vsel %vm1293, %v826, 0
      %v1313 = vsel %vm1293, %v833, 0
      %v1316 = vsel %vm1293, %v840, 0
      %v1319 = vsel %vm1293, %v847, 0
      %v1322 = vsel %vm1293, %v854, 0
      %v1325 = vsel %vm1293, %v861, 0
      %v1328 = vsel %vm1293, %v868, 0
      %v1331 = vsel %vm1293, %v875, 0
      %v1334 = vsel %vm1293, %v882, 0
      %v1337 = vsel %vm1293, %v889, 0
      %v1340 = vsel %vm1293, %v896, 0
      %1342 = vmatprep.subr.bf16.mxu0 0
      %1343 = vmatpush1.bf16.msra.mxu0 %v1200
      %1344 = vmatprep.subr.bf16.mxu0 0
      %1345 = vmatpush1.bf16.msra.mxu0 %v1199
      %1346 = vmatprep.subr.bf16.mxu0 0
      %1347 = vmatpush1.bf16.msra.mxu0 %v1198
      %1348 = vmatprep.subr.bf16.mxu0 0
      %1349 = vmatpush1.bf16.msra.mxu0 %v1197
      %1350 = vmatprep.subr.bf16.mxu0 0
      %1351 = vmatpush1.bf16.msra.mxu0 %v1196
      %1352 = vmatprep.subr.bf16.mxu0 0
      %1353 = vmatpush1.bf16.msra.mxu0 %v1195
      %1354 = vmatprep.subr.bf16.mxu0 0
      %1355 = vmatpush1.bf16.msra.mxu0 %v1194
      %1356 = vmatprep.subr.bf16.mxu0 0
      %1357 = vmatpush1.bf16.msra.mxu0 %v1193
      %1358 = vmatprep.subr.bf16.mxu0 0
      %1359 = vmatpush2.bf16.msra.mxu0 %v1208
      %1360 = vmatprep.subr.bf16.mxu0 0
      %1361 = vmatpush2.bf16.msra.mxu0 %v1207
      %1362 = vmatprep.subr.bf16.mxu0 0
      %1363 = vmatpush2.bf16.msra.mxu0 %v1206
      %1364 = vmatprep.subr.bf16.mxu0 0
      %1365 = vmatpush2.bf16.msra.mxu0 %v1205
      %1366 = vmatprep.subr.bf16.mxu0 0
      %1367 = vmatpush2.bf16.msra.mxu0 %v1204
      %1368 = vmatprep.subr.bf16.mxu0 0
      %1369 = vmatpush2.bf16.msra.mxu0 %v1203
      %1370 = vmatprep.subr.bf16.mxu0 0
      %1371 = vmatpush2.bf16.msra.mxu0 %v1202
      %1372 = vmatprep.subr.bf16.mxu0 0
      %1373 = vmatpush2.bf16.msra.mxu0 %v1201
      %1374 = vmatprep.mubr.bf16.mxu0 %v786
      %1375 = vmatmul.mubr.bf16.gmra.mxu0 %v785
      %v1376 = vpop.f32.mrf.mxu0
      %v1377 = vadd.f32 0.0, %v1376
      %v1378 = vpop.f32.mrf.mxu0
      %v1379 = vpop.f32.mrf.mxu0
      %v1380 = vadd.f32 0.0, %v1379
      %v1381 = vpop.f32.mrf.mxu0
      %1382 = vmatprep.mubr.bf16.mxu0 %v793
      %1383 = vmatmul.mubr.bf16.gmra.mxu0 %v792
      %v1384 = vpop.f32.mrf.mxu0
      %v1385 = vadd.f32 0.0, %v1384
      %v1386 = vpop.f32.mrf.mxu0
      %v1387 = vpop.f32.mrf.mxu0
      %v1388 = vadd.f32 0.0, %v1387
      %v1389 = vpop.f32.mrf.mxu0
      %1390 = vmatprep.mubr.bf16.mxu0 %v800
      %1391 = vmatmul.mubr.bf16.gmra.mxu0 %v799
      %v1392 = vpop.f32.mrf.mxu0
      %v1393 = vadd.f32 0.0, %v1392
      %v1394 = vpop.f32.mrf.mxu0
      %v1395 = vpop.f32.mrf.mxu0
      %v1396 = vadd.f32 0.0, %v1395
      %v1397 = vpop.f32.mrf.mxu0
      %1398 = vmatprep.mubr.bf16.mxu0 %v807
      %1399 = vmatmul.mubr.bf16.gmra.mxu0 %v806
      %v1400 = vpop.f32.mrf.mxu0
      %v1401 = vadd.f32 0.0, %v1400
      %v1402 = vpop.f32.mrf.mxu0
      %v1403 = vpop.f32.mrf.mxu0
      %v1404 = vadd.f32 0.0, %v1403
      %v1405 = vpop.f32.mrf.mxu0
      %1406 = vmatprep.mubr.bf16.mxu0 %v814
      %1407 = vmatmul.mubr.bf16.gmra.mxu0 %v813
      %v1408 = vpop.f32.mrf.mxu0
      %v1409 = vadd.f32 0.0, %v1408
      %v1410 = vpop.f32.mrf.mxu0
      %v1411 = vpop.f32.mrf.mxu0
      %v1412 = vadd.f32 0.0, %v1411
      %v1413 = vpop.f32.mrf.mxu0
      %1414 = vmatprep.mubr.bf16.mxu0 %v821
      %1415 = vmatmul.mubr.bf16.gmra.mxu0 %v820
      %v1416 = vpop.f32.mrf.mxu0
      %v1417 = vadd.f32 0.0, %v1416
      %v1418 = vpop.f32.mrf.mxu0
      %v1419 = vpop.f32.mrf.mxu0
      %v1420 = vadd.f32 0.0, %v1419
      %v1421 = vpop.f32.mrf.mxu0
      %1422 = vmatprep.mubr.bf16.mxu0 %v828
      %1423 = vmatmul.mubr.bf16.gmra.mxu0 %v827
      %v1424 = vpop.f32.mrf.mxu0
      %v1425 = vadd.f32 0.0, %v1424
      %v1426 = vpop.f32.mrf.mxu0
      %v1427 = vpop.f32.mrf.mxu0
      %v1428 = vadd.f32 0.0, %v1427
      %v1429 = vpop.f32.mrf.mxu0
      %1430 = vmatprep.mubr.bf16.mxu0 %v835
      %1431 = vmatmul.mubr.bf16.gmra.mxu0 %v834
      %v1432 = vpop.f32.mrf.mxu0
      %v1433 = vadd.f32 0.0, %v1432
      %v1434 = vpop.f32.mrf.mxu0
      %v1435 = vpop.f32.mrf.mxu0
      %v1436 = vadd.f32 0.0, %v1435
      %v1437 = vpop.f32.mrf.mxu0
      %1438 = vmatprep.mubr.bf16.mxu0 %v842
      %1439 = vmatmul.mubr.bf16.gmra.mxu0 %v841
      %v1440 = vpop.f32.mrf.mxu0
      %v1441 = vadd.f32 0.0, %v1440
      %v1442 = vpop.f32.mrf.mxu0
      %v1443 = vpop.f32.mrf.mxu0
      %v1444 = vadd.f32 0.0, %v1443
      %v1445 = vpop.f32.mrf.mxu0
      %1446 = vmatprep.mubr.bf16.mxu0 %v849
      %1447 = vmatmul.mubr.bf16.gmra.mxu0 %v848
      %v1448 = vpop.f32.mrf.mxu0
      %v1449 = vadd.f32 0.0, %v1448
      %v1450 = vpop.f32.mrf.mxu0
      %v1451 = vpop.f32.mrf.mxu0
      %v1452 = vadd.f32 0.0, %v1451
      %v1453 = vpop.f32.mrf.mxu0
      %1454 = vmatprep.mubr.bf16.mxu0 %v856
      %1455 = vmatmul.mubr.bf16.gmra.mxu0 %v855
      %v1456 = vpop.f32.mrf.mxu0
      %v1457 = vadd.f32 0.0, %v1456
      %v1458 = vpop.f32.mrf.mxu0
      %v1459 = vpop.f32.mrf.mxu0
      %v1460 = vadd.f32 0.0, %v1459
      %v1461 = vpop.f32.mrf.mxu0
      %1462 = vmatprep.mubr.bf16.mxu0 %v863
      %1463 = vmatmul.mubr.bf16.gmra.mxu0 %v862
      %v1464 = vpop.f32.mrf.mxu0
      %v1465 = vadd.f32 0.0, %v1464
      %v1466 = vpop.f32.mrf.mxu0
      %v1467 = vpop.f32.mrf.mxu0
      %v1468 = vadd.f32 0.0, %v1467
      %v1469 = vpop.f32.mrf.mxu0
      %1470 = vmatprep.mubr.bf16.mxu0 %v870
      %1471 = vmatmul.mubr.bf16.gmra.mxu0 %v869
      %v1472 = vpop.f32.mrf.mxu0
      %v1473 = vadd.f32 0.0, %v1472
      %v1474 = vpop.f32.mrf.mxu0
      %v1475 = vpop.f32.mrf.mxu0
      %v1476 = vadd.f32 0.0, %v1475
      %v1477 = vpop.f32.mrf.mxu0
      %1478 = vmatprep.mubr.bf16.mxu0 %v877
      %1479 = vmatmul.mubr.bf16.gmra.mxu0 %v876
      %v1480 = vpop.f32.mrf.mxu0
      %v1481 = vadd.f32 0.0, %v1480
      %v1482 = vpop.f32.mrf.mxu0
      %v1483 = vpop.f32.mrf.mxu0
      %v1484 = vadd.f32 0.0, %v1483
      %v1485 = vpop.f32.mrf.mxu0
      %1486 = vmatprep.mubr.bf16.mxu0 %v884
      %1487 = vmatmul.mubr.bf16.gmra.mxu0 %v883
      %v1488 = vpop.f32.mrf.mxu0
      %v1489 = vadd.f32 0.0, %v1488
      %v1490 = vpop.f32.mrf.mxu0
      %v1491 = vpop.f32.mrf.mxu0
      %v1492 = vadd.f32 0.0, %v1491
      %v1493 = vpop.f32.mrf.mxu0
      %1494 = vmatprep.mubr.bf16.mxu0 %v891
      %1495 = vmatmul.mubr.bf16.gmra.mxu0 %v890
      %v1496 = vpop.f32.mrf.mxu0
      %v1497 = vadd.f32 0.0, %v1496
      %v1498 = vpop.f32.mrf.mxu0
      %v1499 = vpop.f32.mrf.mxu0
      %v1500 = vadd.f32 0.0, %v1499
      %v1501 = vpop.f32.mrf.mxu0
      %1502 = vdwg.mxu0
      %1503 = vmatprep.subr.bf16.mxu0 0
      %1504 = vmatpush1.bf16.msra.mxu0 %v1216
      %1505 = vmatprep.subr.bf16.mxu0 0
      %1506 = vmatpush1.bf16.msra.mxu0 %v1215
      %1507 = vmatprep.subr.bf16.mxu0 0
      %1508 = vmatpush1.bf16.msra.mxu0 %v1214
      %1509 = vmatprep.subr.bf16.mxu0 0
      %1510 = vmatpush1.bf16.msra.mxu0 %v1213
      %1511 = vmatprep.subr.bf16.mxu0 0
      %1512 = vmatpush1.bf16.msra.mxu0 %v1212
      %1513 = vmatprep.subr.bf16.mxu0 0
      %1514 = vmatpush1.bf16.msra.mxu0 %v1211
      %1515 = vmatprep.subr.bf16.mxu0 0
      %1516 = vmatpush1.bf16.msra.mxu0 %v1210
      %1517 = vmatprep.subr.bf16.mxu0 0
      %1518 = vmatpush1.bf16.msra.mxu0 %v1209
      %1519 = vmatprep.subr.bf16.mxu0 0
      %1520 = vmatpush2.bf16.msra.mxu0 %v1224
      %1521 = vmatprep.subr.bf16.mxu0 0
      %1522 = vmatpush2.bf16.msra.mxu0 %v1223
      %1523 = vmatprep.subr.bf16.mxu0 0
      %1524 = vmatpush2.bf16.msra.mxu0 %v1222
      %1525 = vmatprep.subr.bf16.mxu0 0
      %1526 = vmatpush2.bf16.msra.mxu0 %v1221
      %1527 = vmatprep.subr.bf16.mxu0 0
      %1528 = vmatpush2.bf16.msra.mxu0 %v1220
      %1529 = vmatprep.subr.bf16.mxu0 0
      %1530 = vmatpush2.bf16.msra.mxu0 %v1219
      %1531 = vmatprep.subr.bf16.mxu0 0
      %1532 = vmatpush2.bf16.msra.mxu0 %v1218
      %1533 = vmatprep.subr.bf16.mxu0 0
      %1534 = vmatpush2.bf16.msra.mxu0 %v1217
      %1535 = vmatprep.mubr.bf16.mxu0 %v788
      %1536 = vmatmul.mubr.bf16.gmra.mxu0 %v787
      %v1537 = vpop.f32.mrf.mxu0
      %v1538 = vadd.f32 %v1377, %v1537
      %v1539 = vpop.f32.mrf.mxu0
      %v1540 = vpop.f32.mrf.mxu0
      %v1541 = vadd.f32 %v1380, %v1540
      %v1542 = vpop.f32.mrf.mxu0
      %1543 = vmatprep.mubr.bf16.mxu0 %v795
      %1544 = vmatmul.mubr.bf16.gmra.mxu0 %v794
      %v1545 = vpop.f32.mrf.mxu0
      %v1546 = vadd.f32 %v1385, %v1545
      %v1547 = vpop.f32.mrf.mxu0
      %v1548 = vpop.f32.mrf.mxu0
      %v1549 = vadd.f32 %v1388, %v1548
      %v1550 = vpop.f32.mrf.mxu0
      %1551 = vmatprep.mubr.bf16.mxu0 %v802
      %1552 = vmatmul.mubr.bf16.gmra.mxu0 %v801
      %v1553 = vpop.f32.mrf.mxu0
      %v1554 = vadd.f32 %v1393, %v1553
      %v1555 = vpop.f32.mrf.mxu0
      %v1556 = vpop.f32.mrf.mxu0
      %v1557 = vadd.f32 %v1396, %v1556
      %v1558 = vpop.f32.mrf.mxu0
      %1559 = vmatprep.mubr.bf16.mxu0 %v809
      %1560 = vmatmul.mubr.bf16.gmra.mxu0 %v808
      %v1561 = vpop.f32.mrf.mxu0
      %v1562 = vadd.f32 %v1401, %v1561
      %v1563 = vpop.f32.mrf.mxu0
      %v1564 = vpop.f32.mrf.mxu0
      %v1565 = vadd.f32 %v1404, %v1564
      %v1566 = vpop.f32.mrf.mxu0
      %1567 = vmatprep.mubr.bf16.mxu0 %v816
      %1568 = vmatmul.mubr.bf16.gmra.mxu0 %v815
      %v1569 = vpop.f32.mrf.mxu0
      %v1570 = vadd.f32 %v1409, %v1569
      %v1571 = vpop.f32.mrf.mxu0
      %v1572 = vpop.f32.mrf.mxu0
      %v1573 = vadd.f32 %v1412, %v1572
      %v1574 = vpop.f32.mrf.mxu0
      %1575 = vmatprep.mubr.bf16.mxu0 %v823
      %1576 = vmatmul.mubr.bf16.gmra.mxu0 %v822
      %v1577 = vpop.f32.mrf.mxu0
      %v1578 = vadd.f32 %v1417, %v1577
      %v1579 = vpop.f32.mrf.mxu0
      %v1580 = vpop.f32.mrf.mxu0
      %v1581 = vadd.f32 %v1420, %v1580
      %v1582 = vpop.f32.mrf.mxu0
      %1583 = vmatprep.mubr.bf16.mxu0 %v830
      %1584 = vmatmul.mubr.bf16.gmra.mxu0 %v829
      %v1585 = vpop.f32.mrf.mxu0
      %v1586 = vadd.f32 %v1425, %v1585
      %v1587 = vpop.f32.mrf.mxu0
      %v1588 = vpop.f32.mrf.mxu0
      %v1589 = vadd.f32 %v1428, %v1588
      %v1590 = vpop.f32.mrf.mxu0
      %1591 = vmatprep.mubr.bf16.mxu0 %v837
      %1592 = vmatmul.mubr.bf16.gmra.mxu0 %v836
      %v1593 = vpop.f32.mrf.mxu0
      %v1594 = vadd.f32 %v1433, %v1593
      %v1595 = vpop.f32.mrf.mxu0
      %v1596 = vpop.f32.mrf.mxu0
      %v1597 = vadd.f32 %v1436, %v1596
      %v1598 = vpop.f32.mrf.mxu0
      %1599 = vmatprep.mubr.bf16.mxu0 %v844
      %1600 = vmatmul.mubr.bf16.gmra.mxu0 %v843
      %v1601 = vpop.f32.mrf.mxu0
      %v1602 = vadd.f32 %v1441, %v1601
      %v1603 = vpop.f32.mrf.mxu0
      %v1604 = vpop.f32.mrf.mxu0
      %v1605 = vadd.f32 %v1444, %v1604
      %v1606 = vpop.f32.mrf.mxu0
      %1607 = vmatprep.mubr.bf16.mxu0 %v851
      %1608 = vmatmul.mubr.bf16.gmra.mxu0 %v850
      %v1609 = vpop.f32.mrf.mxu0
      %v1610 = vadd.f32 %v1449, %v1609
      %v1611 = vpop.f32.mrf.mxu0
      %v1612 = vpop.f32.mrf.mxu0
      %v1613 = vadd.f32 %v1452, %v1612
      %v1614 = vpop.f32.mrf.mxu0
      %1615 = vmatprep.mubr.bf16.mxu0 %v858
      %1616 = vmatmul.mubr.bf16.gmra.mxu0 %v857
      %v1617 = vpop.f32.mrf.mxu0
      %v1618 = vadd.f32 %v1457, %v1617
      %v1619 = vpop.f32.mrf.mxu0
      %v1620 = vpop.f32.mrf.mxu0
      %v1621 = vadd.f32 %v1460, %v1620
      %v1622 = vpop.f32.mrf.mxu0
      %1623 = vmatprep.mubr.bf16.mxu0 %v865
      %1624 = vmatmul.mubr.bf16.gmra.mxu0 %v864
      %v1625 = vpop.f32.mrf.mxu0
      %v1626 = vadd.f32 %v1465, %v1625
      %v1627 = vpop.f32.mrf.mxu0
      %v1628 = vpop.f32.mrf.mxu0
      %v1629 = vadd.f32 %v1468, %v1628
      %v1630 = vpop.f32.mrf.mxu0
      %1631 = vmatprep.mubr.bf16.mxu0 %v872
      %1632 = vmatmul.mubr.bf16.gmra.mxu0 %v871
      %v1633 = vpop.f32.mrf.mxu0
      %v1634 = vadd.f32 %v1473, %v1633
      %v1635 = vpop.f32.mrf.mxu0
      %v1636 = vpop.f32.mrf.mxu0
      %v1637 = vadd.f32 %v1476, %v1636
      %v1638 = vpop.f32.mrf.mxu0
      %1639 = vmatprep.mubr.bf16.mxu0 %v879
      %1640 = vmatmul.mubr.bf16.gmra.mxu0 %v878
      %v1641 = vpop.f32.mrf.mxu0
      %v1642 = vadd.f32 %v1481, %v1641
      %v1643 = vpop.f32.mrf.mxu0
      %v1644 = vpop.f32.mrf.mxu0
      %v1645 = vadd.f32 %v1484, %v1644
      %v1646 = vpop.f32.mrf.mxu0
      %1647 = vmatprep.mubr.bf16.mxu0 %v886
      %1648 = vmatmul.mubr.bf16.gmra.mxu0 %v885
      %v1649 = vpop.f32.mrf.mxu0
      %v1650 = vadd.f32 %v1489, %v1649
      %v1651 = vpop.f32.mrf.mxu0
      %v1652 = vpop.f32.mrf.mxu0
      %v1653 = vadd.f32 %v1492, %v1652
      %v1654 = vpop.f32.mrf.mxu0
      %1655 = vmatprep.mubr.bf16.mxu0 %v893
      %1656 = vmatmul.mubr.bf16.gmra.mxu0 %v892
      %v1657 = vpop.f32.mrf.mxu0
      %v1658 = vadd.f32 %v1497, %v1657
      %v1659 = vpop.f32.mrf.mxu0
      %v1660 = vpop.f32.mrf.mxu0
      %v1661 = vadd.f32 %v1500, %v1660
      %v1662 = vpop.f32.mrf.mxu0
      %1663 = vdwg.mxu0
      %1664 = vmatprep.subr.bf16.mxu0 0
      %1665 = vmatpush1.bf16.msra.mxu0 %v1232
      %1666 = vmatprep.subr.bf16.mxu0 0
      %1667 = vmatpush1.bf16.msra.mxu0 %v1231
      %1668 = vmatprep.subr.bf16.mxu0 0
      %1669 = vmatpush1.bf16.msra.mxu0 %v1230
      %1670 = vmatprep.subr.bf16.mxu0 0
      %1671 = vmatpush1.bf16.msra.mxu0 %v1229
      %1672 = vmatprep.subr.bf16.mxu0 0
      %1673 = vmatpush1.bf16.msra.mxu0 %v1228
      %1674 = vmatprep.subr.bf16.mxu0 0
      %1675 = vmatpush1.bf16.msra.mxu0 %v1227
      %1676 = vmatprep.subr.bf16.mxu0 0
      %1677 = vmatpush1.bf16.msra.mxu0 %v1226
      %1678 = vmatprep.subr.bf16.mxu0 0
      %1679 = vmatpush1.bf16.msra.mxu0 %v1225
      %1680 = vmatprep.subr.bf16.mxu0 0
      %1681 = vmatpush2.bf16.msra.mxu0 %v1240
      %1682 = vmatprep.subr.bf16.mxu0 0
      %1683 = vmatpush2.bf16.msra.mxu0 %v1239
      %1684 = vmatprep.subr.bf16.mxu0 0
      %1685 = vmatpush2.bf16.msra.mxu0 %v1238
      %1686 = vmatprep.subr.bf16.mxu0 0
      %1687 = vmatpush2.bf16.msra.mxu0 %v1237
      %1688 = vmatprep.subr.bf16.mxu0 0
      %1689 = vmatpush2.bf16.msra.mxu0 %v1236
      %1690 = vmatprep.subr.bf16.mxu0 0
      %1691 = vmatpush2.bf16.msra.mxu0 %v1235
      %1692 = vmatprep.subr.bf16.mxu0 0
      %1693 = vmatpush2.bf16.msra.mxu0 %v1234
      %1694 = vmatprep.subr.bf16.mxu0 0
      %1695 = vmatpush2.bf16.msra.mxu0 %v1233
      %1696 = vmatprep.mubr.bf16.mxu0 %v790
      %1697 = vmatmul.mubr.bf16.gmra.mxu0 %v789
      %v1698 = vpop.f32.mrf.mxu0
      %v1699 = vadd.f32 %v1538, %v1698
      %v1700 = vpop.f32.mrf.mxu0
      %v1701 = vpop.f32.mrf.mxu0
      %v1702 = vadd.f32 %v1541, %v1701
      %v1703 = vpop.f32.mrf.mxu0
      %1704 = vmatprep.mubr.bf16.mxu0 %v797
      %1705 = vmatmul.mubr.bf16.gmra.mxu0 %v796
      %v1706 = vpop.f32.mrf.mxu0
      %v1707 = vadd.f32 %v1546, %v1706
      %v1708 = vpop.f32.mrf.mxu0
      %v1709 = vpop.f32.mrf.mxu0
      %v1710 = vadd.f32 %v1549, %v1709
      %v1711 = vpop.f32.mrf.mxu0
      %1712 = vmatprep.mubr.bf16.mxu0 %v804
      %1713 = vmatmul.mubr.bf16.gmra.mxu0 %v803
      %v1714 = vpop.f32.mrf.mxu0
      %v1715 = vadd.f32 %v1554, %v1714
      %v1716 = vpop.f32.mrf.mxu0
      %v1717 = vpop.f32.mrf.mxu0
      %v1718 = vadd.f32 %v1557, %v1717
      %v1719 = vpop.f32.mrf.mxu0
      %1720 = vmatprep.mubr.bf16.mxu0 %v811
      %1721 = vmatmul.mubr.bf16.gmra.mxu0 %v810
      %v1722 = vpop.f32.mrf.mxu0
      %v1723 = vadd.f32 %v1562, %v1722
      %v1724 = vpop.f32.mrf.mxu0
      %v1725 = vpop.f32.mrf.mxu0
      %v1726 = vadd.f32 %v1565, %v1725
      %v1727 = vpop.f32.mrf.mxu0
      %1728 = vmatprep.mubr.bf16.mxu0 %v818
      %1729 = vmatmul.mubr.bf16.gmra.mxu0 %v817
      %v1730 = vpop.f32.mrf.mxu0
      %v1731 = vadd.f32 %v1570, %v1730
      %v1732 = vpop.f32.mrf.mxu0
      %v1733 = vpop.f32.mrf.mxu0
      %v1734 = vadd.f32 %v1573, %v1733
      %v1735 = vpop.f32.mrf.mxu0
      %1736 = vmatprep.mubr.bf16.mxu0 %v825
      %1737 = vmatmul.mubr.bf16.gmra.mxu0 %v824
      %v1738 = vpop.f32.mrf.mxu0
      %v1739 = vadd.f32 %v1578, %v1738
      %v1740 = vpop.f32.mrf.mxu0
      %v1741 = vpop.f32.mrf.mxu0
      %v1742 = vadd.f32 %v1581, %v1741
      %v1743 = vpop.f32.mrf.mxu0
      %1744 = vmatprep.mubr.bf16.mxu0 %v832
      %1745 = vmatmul.mubr.bf16.gmra.mxu0 %v831
      %v1746 = vpop.f32.mrf.mxu0
      %v1747 = vadd.f32 %v1586, %v1746
      %v1748 = vpop.f32.mrf.mxu0
      %v1749 = vpop.f32.mrf.mxu0
      %v1750 = vadd.f32 %v1589, %v1749
      %v1751 = vpop.f32.mrf.mxu0
      %1752 = vmatprep.mubr.bf16.mxu0 %v839
      %1753 = vmatmul.mubr.bf16.gmra.mxu0 %v838
      %v1754 = vpop.f32.mrf.mxu0
      %v1755 = vadd.f32 %v1594, %v1754
      %v1756 = vpop.f32.mrf.mxu0
      %v1757 = vpop.f32.mrf.mxu0
      %v1758 = vadd.f32 %v1597, %v1757
      %v1759 = vpop.f32.mrf.mxu0
      %1760 = vmatprep.mubr.bf16.mxu0 %v846
      %1761 = vmatmul.mubr.bf16.gmra.mxu0 %v845
      %v1762 = vpop.f32.mrf.mxu0
      %v1763 = vadd.f32 %v1602, %v1762
      %v1764 = vpop.f32.mrf.mxu0
      %v1765 = vpop.f32.mrf.mxu0
      %v1766 = vadd.f32 %v1605, %v1765
      %v1767 = vpop.f32.mrf.mxu0
      %1768 = vmatprep.mubr.bf16.mxu0 %v853
      %1769 = vmatmul.mubr.bf16.gmra.mxu0 %v852
      %v1770 = vpop.f32.mrf.mxu0
      %v1771 = vadd.f32 %v1610, %v1770
      %v1772 = vpop.f32.mrf.mxu0
      %v1773 = vpop.f32.mrf.mxu0
      %v1774 = vadd.f32 %v1613, %v1773
      %v1775 = vpop.f32.mrf.mxu0
      %1776 = vmatprep.mubr.bf16.mxu0 %v860
      %1777 = vmatmul.mubr.bf16.gmra.mxu0 %v859
      %v1778 = vpop.f32.mrf.mxu0
      %v1779 = vadd.f32 %v1618, %v1778
      %v1780 = vpop.f32.mrf.mxu0
      %v1781 = vpop.f32.mrf.mxu0
      %v1782 = vadd.f32 %v1621, %v1781
      %v1783 = vpop.f32.mrf.mxu0
      %1784 = vmatprep.mubr.bf16.mxu0 %v867
      %1785 = vmatmul.mubr.bf16.gmra.mxu0 %v866
      %v1786 = vpop.f32.mrf.mxu0
      %v1787 = vadd.f32 %v1626, %v1786
      %v1788 = vpop.f32.mrf.mxu0
      %v1789 = vpop.f32.mrf.mxu0
      %v1790 = vadd.f32 %v1629, %v1789
      %v1791 = vpop.f32.mrf.mxu0
      %1792 = vmatprep.mubr.bf16.mxu0 %v874
      %1793 = vmatmul.mubr.bf16.gmra.mxu0 %v873
      %v1794 = vpop.f32.mrf.mxu0
      %v1795 = vadd.f32 %v1634, %v1794
      %v1796 = vpop.f32.mrf.mxu0
      %v1797 = vpop.f32.mrf.mxu0
      %v1798 = vadd.f32 %v1637, %v1797
      %v1799 = vpop.f32.mrf.mxu0
      %1800 = vmatprep.mubr.bf16.mxu0 %v881
      %1801 = vmatmul.mubr.bf16.gmra.mxu0 %v880
      %v1802 = vpop.f32.mrf.mxu0
      %v1803 = vadd.f32 %v1642, %v1802
      %v1804 = vpop.f32.mrf.mxu0
      %v1805 = vpop.f32.mrf.mxu0
      %v1806 = vadd.f32 %v1645, %v1805
      %v1807 = vpop.f32.mrf.mxu0
      %1808 = vmatprep.mubr.bf16.mxu0 %v888
      %1809 = vmatmul.mubr.bf16.gmra.mxu0 %v887
      %v1810 = vpop.f32.mrf.mxu0
      %v1811 = vadd.f32 %v1650, %v1810
      %v1812 = vpop.f32.mrf.mxu0
      %v1813 = vpop.f32.mrf.mxu0
      %v1814 = vadd.f32 %v1653, %v1813
      %v1815 = vpop.f32.mrf.mxu0
      %1816 = vmatprep.mubr.bf16.mxu0 %v895
      %1817 = vmatmul.mubr.bf16.gmra.mxu0 %v894
      %v1818 = vpop.f32.mrf.mxu0
      %v1819 = vadd.f32 %v1658, %v1818
      %v1820 = vpop.f32.mrf.mxu0
      %v1821 = vpop.f32.mrf.mxu0
      %v1822 = vadd.f32 %v1661, %v1821
      %v1823 = vpop.f32.mrf.mxu0
      %1824 = vdwg.mxu0
      %1825 = vmatprep.subr.bf16.mxu0 0
      %1826 = vmatpush1.bf16.msra.mxu0 0
      %1827 = vmatprep.subr.bf16.mxu0 0
      %1828 = vmatpush1.bf16.msra.mxu0 0
      %1829 = vmatprep.subr.bf16.mxu0 0
      %1830 = vmatpush1.bf16.msra.mxu0 0
      %1831 = vmatprep.subr.bf16.mxu0 0
      %1832 = vmatpush1.bf16.msra.mxu0 0
      %1833 = vmatprep.subr.bf16.mxu0 0
      %1834 = vmatpush1.bf16.msra.mxu0 0
      %1835 = vmatprep.subr.bf16.mxu0 0
      %1836 = vmatpush1.bf16.msra.mxu0 0
      %1837 = vmatprep.subr.bf16.mxu0 0
      %1838 = vmatpush1.bf16.msra.mxu0 %v1242
      %1839 = vmatprep.subr.bf16.mxu0 0
      %1840 = vmatpush1.bf16.msra.mxu0 %v1241
      %1841 = vmatprep.subr.bf16.mxu0 0
      %1842 = vmatpush2.bf16.msra.mxu0 0
      %1843 = vmatprep.subr.bf16.mxu0 0
      %1844 = vmatpush2.bf16.msra.mxu0 0
      %1845 = vmatprep.subr.bf16.mxu0 0
      %1846 = vmatpush2.bf16.msra.mxu0 0
      %1847 = vmatprep.subr.bf16.mxu0 0
      %1848 = vmatpush2.bf16.msra.mxu0 0
      %1849 = vmatprep.subr.bf16.mxu0 0
      %1850 = vmatpush2.bf16.msra.mxu0 0
      %1851 = vmatprep.subr.bf16.mxu0 0
      %1852 = vmatpush2.bf16.msra.mxu0 0
      %1853 = vmatprep.subr.bf16.mxu0 0
      %1854 = vmatpush2.bf16.msra.mxu0 0
      %1855 = vmatprep.subr.bf16.mxu0 0
      %1856 = vmatpush2.bf16.msra.mxu0 0
      %1857 = vmatprep.mubr.bf16.mxu0 0
      %1858 = vmatmul.mubr.bf16.gmra.mxu0 %v1295
      %v1859 = vpop.f32.mrf.mxu0
      %v1860 = vadd.f32 %v1699, %v1859
      %v1861 = vpop.f32.mrf.mxu0
      %v1862 = vpop.f32.mrf.mxu0
      %v1863 = vadd.f32 %v1702, %v1862
      %v1864 = vpop.f32.mrf.mxu0
      %1865 = vmatprep.mubr.bf16.mxu0 0
      %1866 = vmatmul.mubr.bf16.gmra.mxu0 %v1298
      %v1867 = vpop.f32.mrf.mxu0
      %v1868 = vadd.f32 %v1707, %v1867
      %v1869 = vpop.f32.mrf.mxu0
      %v1870 = vpop.f32.mrf.mxu0
      %v1871 = vadd.f32 %v1710, %v1870
      %v1872 = vpop.f32.mrf.mxu0
      %1873 = vmatprep.mubr.bf16.mxu0 0
      %1874 = vmatmul.mubr.bf16.gmra.mxu0 %v1301
      %v1875 = vpop.f32.mrf.mxu0
      %v1876 = vadd.f32 %v1715, %v1875
      %v1877 = vpop.f32.mrf.mxu0
      %v1878 = vpop.f32.mrf.mxu0
      %v1879 = vadd.f32 %v1718, %v1878
      %v1880 = vpop.f32.mrf.mxu0
      %1881 = vmatprep.mubr.bf16.mxu0 0
      %1882 = vmatmul.mubr.bf16.gmra.mxu0 %v1304
      %v1883 = vpop.f32.mrf.mxu0
      %v1884 = vadd.f32 %v1723, %v1883
      %v1885 = vpop.f32.mrf.mxu0
      %v1886 = vpop.f32.mrf.mxu0
      %v1887 = vadd.f32 %v1726, %v1886
      %v1888 = vpop.f32.mrf.mxu0
      %1889 = vmatprep.mubr.bf16.mxu0 0
      %1890 = vmatmul.mubr.bf16.gmra.mxu0 %v1307
      %v1891 = vpop.f32.mrf.mxu0
      %v1892 = vadd.f32 %v1731, %v1891
      %v1893 = vpop.f32.mrf.mxu0
      %v1894 = vpop.f32.mrf.mxu0
      %v1895 = vadd.f32 %v1734, %v1894
      %v1896 = vpop.f32.mrf.mxu0
      %1897 = vmatprep.mubr.bf16.mxu0 0
      %1898 = vmatmul.mubr.bf16.gmra.mxu0 %v1310
      %v1899 = vpop.f32.mrf.mxu0
      %v1900 = vadd.f32 %v1739, %v1899
      %v1901 = vpop.f32.mrf.mxu0
      %v1902 = vpop.f32.mrf.mxu0
      %v1903 = vadd.f32 %v1742, %v1902
      %v1904 = vpop.f32.mrf.mxu0
      %1905 = vmatprep.mubr.bf16.mxu0 0
      %1906 = vmatmul.mubr.bf16.gmra.mxu0 %v1313
      %v1907 = vpop.f32.mrf.mxu0
      %v1908 = vadd.f32 %v1747, %v1907
      %v1909 = vpop.f32.mrf.mxu0
      %v1910 = vpop.f32.mrf.mxu0
      %v1911 = vadd.f32 %v1750, %v1910
      %v1912 = vpop.f32.mrf.mxu0
      %1913 = vmatprep.mubr.bf16.mxu0 0
      %1914 = vmatmul.mubr.bf16.gmra.mxu0 %v1316
      %v1915 = vpop.f32.mrf.mxu0
      %v1916 = vadd.f32 %v1755, %v1915
      %v1917 = vpop.f32.mrf.mxu0
      %v1918 = vpop.f32.mrf.mxu0
      %v1919 = vadd.f32 %v1758, %v1918
      %v1920 = vpop.f32.mrf.mxu0
      %1921 = vmatprep.mubr.bf16.mxu0 0
      %1922 = vmatmul.mubr.bf16.gmra.mxu0 %v1319
      %v1923 = vpop.f32.mrf.mxu0
      %v1924 = vadd.f32 %v1763, %v1923
      %v1925 = vpop.f32.mrf.mxu0
      %v1926 = vpop.f32.mrf.mxu0
      %v1927 = vadd.f32 %v1766, %v1926
      %v1928 = vpop.f32.mrf.mxu0
      %1929 = vmatprep.mubr.bf16.mxu0 0
      %1930 = vmatmul.mubr.bf16.gmra.mxu0 %v1322
      %v1931 = vpop.f32.mrf.mxu0
      %v1932 = vadd.f32 %v1771, %v1931
      %v1933 = vpop.f32.mrf.mxu0
      %v1934 = vpop.f32.mrf.mxu0
      %v1935 = vadd.f32 %v1774, %v1934
      %v1936 = vpop.f32.mrf.mxu0
      %1937 = vmatprep.mubr.bf16.mxu0 0
      %1938 = vmatmul.mubr.bf16.gmra.mxu0 %v1325
      %v1939 = vpop.f32.mrf.mxu0
      %v1940 = vadd.f32 %v1779, %v1939
      %v1941 = vpop.f32.mrf.mxu0
      %v1942 = vpop.f32.mrf.mxu0
      %v1943 = vadd.f32 %v1782, %v1942
      %v1944 = vpop.f32.mrf.mxu0
      %1945 = vmatprep.mubr.bf16.mxu0 0
      %1946 = vmatmul.mubr.bf16.gmra.mxu0 %v1328
      %v1947 = vpop.f32.mrf.mxu0
      %v1948 = vadd.f32 %v1787, %v1947
      %v1949 = vpop.f32.mrf.mxu0
      %v1950 = vpop.f32.mrf.mxu0
      %v1951 = vadd.f32 %v1790, %v1950
      %v1952 = vpop.f32.mrf.mxu0
      %1953 = vmatprep.mubr.bf16.mxu0 0
      %1954 = vmatmul.mubr.bf16.gmra.mxu0 %v1331
      %v1955 = vpop.f32.mrf.mxu0
      %v1956 = vadd.f32 %v1795, %v1955
      %v1957 = vpop.f32.mrf.mxu0
      %v1958 = vpop.f32.mrf.mxu0
      %v1959 = vadd.f32 %v1798, %v1958
      %v1960 = vpop.f32.mrf.mxu0
      %1961 = vmatprep.mubr.bf16.mxu0 0
      %1962 = vmatmul.mubr.bf16.gmra.mxu0 %v1334
      %v1963 = vpop.f32.mrf.mxu0
      %v1964 = vadd.f32 %v1803, %v1963
      %v1965 = vpop.f32.mrf.mxu0
      %v1966 = vpop.f32.mrf.mxu0
      %v1967 = vadd.f32 %v1806, %v1966
      %v1968 = vpop.f32.mrf.mxu0
      %1969 = vmatprep.mubr.bf16.mxu0 0
      %1970 = vmatmul.mubr.bf16.gmra.mxu0 %v1337
      %v1971 = vpop.f32.mrf.mxu0
      %v1972 = vadd.f32 %v1811, %v1971
      %v1973 = vpop.f32.mrf.mxu0
      %v1974 = vpop.f32.mrf.mxu0
      %v1975 = vadd.f32 %v1814, %v1974
      %v1976 = vpop.f32.mrf.mxu0
      %1977 = vmatprep.mubr.bf16.mxu0 0
      %1978 = vmatmul.mubr.bf16.gmra.mxu0 %v1340
      %v1979 = vpop.f32.mrf.mxu0
      %v1980 = vadd.f32 %v1819, %v1979
      %v1981 = vpop.f32.mrf.mxu0
      %v1982 = vpop.f32.mrf.mxu0
      %v1983 = vadd.f32 %v1822, %v1982
      %v1984 = vpop.f32.mrf.mxu0
      %1985 = vdwg.mxu0
      %v1986 = vld [vmem:[%s2] sm:$0x1]
      %v1988 = vlaneseq
      %v1989 = vshrl.u32 %v1988, 7
      %v1990 = vsub.s32 0, %v1989
      %v1991 = vrot.slane %v1986, %v1990
      %v1993 = vmul.f32 %v1860, %v1991
      %v1994 = vmul.f32 %v1863, %v1991
      %v1995 = vmul.f32 %v1868, %v1991
      %v1996 = vmul.f32 %v1871, %v1991
      %v1997 = vmul.f32 %v1876, %v1991
      %v1998 = vmul.f32 %v1879, %v1991
      %v1999 = vmul.f32 %v1884, %v1991
      %v2000 = vmul.f32 %v1887, %v1991
      %v2001 = vmul.f32 %v1892, %v1991
      %v2002 = vmul.f32 %v1895, %v1991
      %v2003 = vmul.f32 %v1900, %v1991
      %v2004 = vmul.f32 %v1903, %v1991
      %v2005 = vmul.f32 %v1908, %v1991
      %v2006 = vmul.f32 %v1911, %v1991
      %v2007 = vmul.f32 %v1916, %v1991
      %v2008 = vmul.f32 %v1919, %v1991
      %v2009 = vmul.f32 %v1924, %v1991
      %v2010 = vmul.f32 %v1927, %v1991
      %v2011 = vmul.f32 %v1932, %v1991
      %v2012 = vmul.f32 %v1935, %v1991
      %v2013 = vmul.f32 %v1940, %v1991
      %v2014 = vmul.f32 %v1943, %v1991
      %v2015 = vmul.f32 %v1948, %v1991
      %v2016 = vmul.f32 %v1951, %v1991
      %v2017 = vmul.f32 %v1956, %v1991
      %v2018 = vmul.f32 %v1959, %v1991
      %v2019 = vmul.f32 %v1964, %v1991
      %v2020 = vmul.f32 %v1967, %v1991
      %v2021 = vmul.f32 %v1972, %v1991
      %v2022 = vmul.f32 %v1975, %v1991
      %v2023 = vmul.f32 %v1980, %v1991
      %v2024 = vmul.f32 %v1983, %v1991
      %v2025 = vld [vmem:[%s3] sm:$0x1]
      %v2027 = vlaneseq
      %v2028 = vshrl.u32 %v2027, 7
      %v2029 = vsub.s32 0, %v2028
      %v2030 = vrot.slane %v2025, %v2029
      %v2032 = vadd.f32 %v1993, %v2030
      %v2033 = vadd.f32 %v1994, %v2030
      %v2034 = vadd.f32 %v1995, %v2030
      %v2035 = vadd.f32 %v1996, %v2030
      %v2036 = vadd.f32 %v1997, %v2030
      %v2037 = vadd.f32 %v1998, %v2030
      %v2038 = vadd.f32 %v1999, %v2030
      %v2039 = vadd.f32 %v2000, %v2030
      %v2040 = vadd.f32 %v2001, %v2030
      %v2041 = vadd.f32 %v2002, %v2030
      %v2042 = vadd.f32 %v2003, %v2030
      %v2043 = vadd.f32 %v2004, %v2030
      %v2044 = vadd.f32 %v2005, %v2030
      %v2045 = vadd.f32 %v2006, %v2030
      %v2046 = vadd.f32 %v2007, %v2030
      %v2047 = vadd.f32 %v2008, %v2030
      %v2048 = vadd.f32 %v2009, %v2030
      %v2049 = vadd.f32 %v2010, %v2030
      %v2050 = vadd.f32 %v2011, %v2030
      %v2051 = vadd.f32 %v2012, %v2030
      %v2052 = vadd.f32 %v2013, %v2030
      %v2053 = vadd.f32 %v2014, %v2030
      %v2054 = vadd.f32 %v2015, %v2030
      %v2055 = vadd.f32 %v2016, %v2030
      %v2056 = vadd.f32 %v2017, %v2030
      %v2057 = vadd.f32 %v2018, %v2030
      %v2058 = vadd.f32 %v2019, %v2030
      %v2059 = vadd.f32 %v2020, %v2030
      %v2060 = vadd.f32 %v2021, %v2030
      %v2061 = vadd.f32 %v2022, %v2030
      %v2062 = vadd.f32 %v2023, %v2030
      %v2063 = vadd.f32 %v2024, %v2030
      %v2064 = vmax.f32 %v2032, 0.0
      %v2065 = vmax.f32 %v2033, 0.0
      %v2066 = vmax.f32 %v2034, 0.0
      %v2067 = vmax.f32 %v2035, 0.0
      %v2068 = vmax.f32 %v2036, 0.0
      %v2069 = vmax.f32 %v2037, 0.0
      %v2070 = vmax.f32 %v2038, 0.0
      %v2071 = vmax.f32 %v2039, 0.0
      %v2072 = vmax.f32 %v2040, 0.0
      %v2073 = vmax.f32 %v2041, 0.0
      %v2074 = vmax.f32 %v2042, 0.0
      %v2075 = vmax.f32 %v2043, 0.0
      %v2076 = vmax.f32 %v2044, 0.0
      %v2077 = vmax.f32 %v2045, 0.0
      %v2078 = vmax.f32 %v2046, 0.0
      %v2079 = vmax.f32 %v2047, 0.0
      %v2080 = vmax.f32 %v2048, 0.0
      %v2081 = vmax.f32 %v2049, 0.0
      %v2082 = vmax.f32 %v2050, 0.0
      %v2083 = vmax.f32 %v2051, 0.0
      %v2084 = vmax.f32 %v2052, 0.0
      %v2085 = vmax.f32 %v2053, 0.0
      %v2086 = vmax.f32 %v2054, 0.0
      %v2087 = vmax.f32 %v2055, 0.0
      %v2088 = vmax.f32 %v2056, 0.0
      %v2089 = vmax.f32 %v2057, 0.0
      %v2090 = vmax.f32 %v2058, 0.0
      %v2091 = vmax.f32 %v2059, 0.0
      %v2092 = vmax.f32 %v2060, 0.0
      %v2093 = vmax.f32 %v2061, 0.0
      %v2094 = vmax.f32 %v2062, 0.0
      %v2095 = vmax.f32 %v2063, 0.0
      %2096 = vst [vmem:[%s202] sm:$0xff] %v2064
      %2097 = vst [vmem:[%s202 + $0x8] sm:$0xff] %v2065
      %2098 = vst [vmem:[%s202 + $0x10] sm:$0xff] %v2066
      %2099 = vst [vmem:[%s202 + $0x18] sm:$0xff] %v2067
      %2100 = vst [vmem:[%s202 + $0x20] sm:$0xff] %v2068
      %2101 = vst [vmem:[%s202 + $0x28] sm:$0xff] %v2069
      %2102 = vst [vmem:[%s202 + $0x30] sm:$0xff] %v2070
      %2103 = vst [vmem:[%s202 + $0x38] sm:$0xff] %v2071
      %2104 = vst [vmem:[%s202 + $0x40] sm:$0xff] %v2072
      %2105 = vst [vmem:[%s202 + $0x48] sm:$0xff] %v2073
      %2106 = vst [vmem:[%s202 + $0x50] sm:$0xff] %v2074
      %2107 = vst [vmem:[%s202 + $0x58] sm:$0xff] %v2075
      %2108 = vst [vmem:[%s202 + $0x60] sm:$0xff] %v2076
      %2109 = vst [vmem:[%s202 + $0x68] sm:$0xff] %v2077
      %2110 = vst [vmem:[%s202 + $0x70] sm:$0xff] %v2078
      %2111 = vst [vmem:[%s202 + $0x78] sm:$0xff] %v2079
      %2112 = vst [vmem:[%s202 + $0x80] sm:$0xff] %v2080
      %2113 = vst [vmem:[%s202 + $0x88] sm:$0xff] %v2081
      %2114 = vst [vmem:[%s202 + $0x90] sm:$0xff] %v2082
      %2115 = vst [vmem:[%s202 + $0x98] sm:$0xff] %v2083
      %2116 = vst [vmem:[%s202 + $0xa0] sm:$0xff] %v2084
      %2117 = vst [vmem:[%s202 + $0xa8] sm:$0xff] %v2085
      %2118 = vst [vmem:[%s202 + $0xb0] sm:$0xff] %v2086
      %2119 = vst [vmem:[%s202 + $0xb8] sm:$0xff] %v2087
      %2120 = vst [vmem:[%s202 + $0xc0] sm:$0xff] %v2088
      %2121 = vst [vmem:[%s202 + $0xc8] sm:$0xff] %v2089
      %2122 = vst [vmem:[%s202 + $0xd0] sm:$0xff] %v2090
      %2123 = vst [vmem:[%s202 + $0xd8] sm:$0xff] %v2091
      %2124 = vst [vmem:[%s202 + $0xe0] sm:$0xff] %v2092
      %2125 = vst [vmem:[%s202 + $0xe8] sm:$0xff] %v2093
      %2126 = vst [vmem:[%s202 + $0xf0] sm:$0xff] %v2094
      %2127 = vst [vmem:[%s202 + $0xf8] sm:$0xff] %v2095
      %s2128 = smul.u32 32, %s15
      %p2129 = scmp.lt.s32.totalorder %s2128, 63
      %s2130 = scalar_select %p2129, %s2128, 63
      %s2131 = smul.addr %s2130, 8
      %s2132 = scalar_lea.vmem %s4, %s2131
      // Predicated region
      $region37: #{simple_model_forward.7} parent=35 // pred_check
        %p2133 = pneg %p122
      $region38: #{simple_model_forward.7} parent=35 // pred_check_branch
        %2135 = sbr.rel (%p2133) target = $region40
      $region39: #{simple_model_forward.7} parent=35 // pred_region
        %s2136 = smul.u32 32, %s15
      $region40: #{simple_model_forward.7} parent=35 // pred_fallthru
        _
    $region36: #{simple_model_forward.7} parent=5 // pred_fallthru
      _
    %p2137 = scmp.le.s32.totalorder 2, %s10
    // Predicated region
    $region41: #{simple_model_forward.7} parent=5 // pred_check
      %p2138 = pneg %p2137
    $region42: #{simple_model_forward.7} parent=5 // pred_check_branch
      %2140 = sbr.rel (%p2138) target = $region44
    $region43: #{simple_model_forward.7} parent=5 // pred_region
      %s2141 = ssub.s32 %s10, 2
      // Predicated region
      $region45: #{simple_model_forward.7} parent=43 // pred_check
        %p2142 = pneg %p128
      $region46: #{simple_model_forward.7} parent=43 // pred_check_branch
        %2144 = sbr.rel (%p2142) target = $region48
      $region47: #{simple_model_forward.7} parent=43 // pred_region
        %s2145 = smul.u32 32, %s16
        %p2146 = scmp.lt.s32.totalorder %s2145, 63
        %s2147 = scalar_select %p2146, %s2145, 63
        %s2148 = smul.addr %s2147, 8
        %s2149 = scalar_lea.vmem %s4, %s2148
      $region48: #{simple_model_forward.7} parent=43 // pred_fallthru
        _
    $region44: #{simple_model_forward.7} parent=5 // pred_fallthru
      _
  $region6: #{simple_model_forward.7} parent=0 // loop_footer
    %s14 = sadd.s32 1, %s10
  $region7: #{simple_model_forward.7} parent=0 // loop_footer_branch
    %9 = sbr.rel target = $region3
  $region8: #{simple_model_forward.7} parent=0 // loop_exit
    _

// kernel: simple_model_forward.8
$region0: #{simple_model_forward.8}
  #allocation0 [shape = 'u32[]', space=smem, size = 0x4, offset = 0x4, fixed_abs, tag = 'smem constant byte address 0x4 - core index']
  #allocation1 [shape = 'u32[144,128]{1,0:T(1,128)}', space=vmem, size = 0x12000, scoped, tag = 'internal scratch']
  %s0 = inlined_call_operand.vmem [shape: f32[49,128], index: 0, kind: input, shape index: {}]
  %s1 = inlined_call_operand.vmem [shape: f32[49,128], index: 1, kind: input, shape index: {}]
  %s2 = inlined_call_operand.vmem [shape: f32[49,128], index: 2, kind: input, shape index: {}]
  %s3 = inlined_call_operand.vmem [shape: f32[49,128], index: 3, kind: input, shape index: {}]
  %s4 = inlined_call_operand.vmem [shape: f32[49,128], index: 4, kind: output, shape index: {}]
  %s5 = sld [smem:[#allocation0]]
  $region26: #{simple_model_forward.8} parent=0
    _
  %s7 = ssub.s32 1, %s5
  %s8 = scalar_select 0, %s7, %s5
  // Predicated region
  $region2: #{simple_model_forward.8} parent=0 // pred_check
    _
  $region3: #{simple_model_forward.8} parent=0 // pred_check_branch
    %10 = sbr.rel (0) target = $region5
  $region4: #{simple_model_forward.8} parent=0 // pred_region
    _
  $region5: #{simple_model_forward.8} parent=0 // pred_fallthru
    _
  // Predicated region
  $region6: #{simple_model_forward.8} parent=0 // pred_check
    _
  $region7: #{simple_model_forward.8} parent=0 // pred_check_branch
    %12 = sbr.rel (0) target = $region9
  $region8: #{simple_model_forward.8} parent=0 // pred_region
    _
  $region9: #{simple_model_forward.8} parent=0 // pred_fallthru
    _
  // Predicated region
  $region10: #{simple_model_forward.8} parent=0 // pred_check
    _
  $region11: #{simple_model_forward.8} parent=0 // pred_check_branch
    %14 = sbr.rel (0) target = $region13
  $region12: #{simple_model_forward.8} parent=0 // pred_region
    _
  $region13: #{simple_model_forward.8} parent=0 // pred_fallthru
    _
  // Predicated region
  $region14: #{simple_model_forward.8} parent=0 // pred_check
    _
  $region15: #{simple_model_forward.8} parent=0 // pred_check_branch
    %16 = sbr.rel (0) target = $region17
  $region16: #{simple_model_forward.8} parent=0 // pred_region
    _
  $region17: #{simple_model_forward.8} parent=0 // pred_fallthru
    _
  %v17 = vld [vmem:[%s0] sm:$0xff]
  %v18 = vld [vmem:[%s0 + $0x8] sm:$0xff]
  %v19 = vld [vmem:[%s0 + $0x10] sm:$0xff]
  %v20 = vld [vmem:[%s0 + $0x18] sm:$0xff]
  %v21 = vld [vmem:[%s0 + $0x20] sm:$0xff]
  %v22 = vld [vmem:[%s0 + $0x28] sm:$0xff]
  %v23 = vld [vmem:[%s0 + $0x30] sm:$0x1]
  %v24 = vld [vmem:[%s1] sm:$0xff]
  %v25 = vld [vmem:[%s1 + $0x8] sm:$0xff]
  %v26 = vld [vmem:[%s1 + $0x10] sm:$0xff]
  %v27 = vld [vmem:[%s1 + $0x18] sm:$0xff]
  %v28 = vld [vmem:[%s1 + $0x20] sm:$0xff]
  %v29 = vld [vmem:[%s1 + $0x28] sm:$0xff]
  %v30 = vld [vmem:[%s1 + $0x30] sm:$0x1]
  %v31 = vmax.f32 %v17, %v24
  %v32 = vmax.f32 %v18, %v25
  %v33 = vmax.f32 %v19, %v26
  %v34 = vmax.f32 %v20, %v27
  %v35 = vmax.f32 %v21, %v28
  %v36 = vmax.f32 %v22, %v29
  %v37 = vmax.f32 %v23, %v30
  %v38 = vld [vmem:[%s2] sm:$0xff]
  %v39 = vld [vmem:[%s2 + $0x8] sm:$0xff]
  %v40 = vld [vmem:[%s2 + $0x10] sm:$0xff]
  %v41 = vld [vmem:[%s2 + $0x18] sm:$0xff]
  %v42 = vld [vmem:[%s2 + $0x20] sm:$0xff]
  %v43 = vld [vmem:[%s2 + $0x28] sm:$0xff]
  %v44 = vld [vmem:[%s2 + $0x30] sm:$0x1]
  %v45 = vld [vmem:[%s3] sm:$0xff]
  %v46 = vld [vmem:[%s3 + $0x8] sm:$0xff]
  %v47 = vld [vmem:[%s3 + $0x10] sm:$0xff]
  %v48 = vld [vmem:[%s3 + $0x18] sm:$0xff]
  %v49 = vld [vmem:[%s3 + $0x20] sm:$0xff]
  %v50 = vld [vmem:[%s3 + $0x28] sm:$0xff]
  %v51 = vld [vmem:[%s3 + $0x30] sm:$0x1]
  %v52 = vmax.f32 %v38, %v45
  %v53 = vmax.f32 %v39, %v46
  %v54 = vmax.f32 %v40, %v47
  %v55 = vmax.f32 %v41, %v48
  %v56 = vmax.f32 %v42, %v49
  %v57 = vmax.f32 %v43, %v50
  %v58 = vmax.f32 %v44, %v51
  %v59 = vmax.f32 %v31, %v52
  %v60 = vmax.f32 %v32, %v53
  %v61 = vmax.f32 %v33, %v54
  %v62 = vmax.f32 %v34, %v55
  %v63 = vmax.f32 %v35, %v56
  %v64 = vmax.f32 %v36, %v57
  %v65 = vmax.f32 %v37, %v58
  %66 = vst [vmem:[%s4] sm:$0xff] %v59
  %67 = vst [vmem:[%s4 + $0x8] sm:$0xff] %v60
  %68 = vst [vmem:[%s4 + $0x10] sm:$0xff] %v61
  %69 = vst [vmem:[%s4 + $0x18] sm:$0xff] %v62
  %70 = vst [vmem:[%s4 + $0x20] sm:$0xff] %v63
  %71 = vst [vmem:[%s4 + $0x28] sm:$0xff] %v64
  %72 = vst [vmem:[%s4 + $0x30] sm:$0x1] %v65
  // Predicated region
  $region18: #{simple_model_forward.8} parent=0 // pred_check
    _
  $region19: #{simple_model_forward.8} parent=0 // pred_check_branch
    %74 = sbr.rel (0) target = $region21
  $region20: #{simple_model_forward.8} parent=0 // pred_region
    _
  $region21: #{simple_model_forward.8} parent=0 // pred_fallthru
    _
  // Predicated region
  $region22: #{simple_model_forward.8} parent=0 // pred_check
    _
  $region23: #{simple_model_forward.8} parent=0 // pred_check_branch
    %76 = sbr.rel (0) target = $region25
  $region24: #{simple_model_forward.8} parent=0 // pred_region
    _
  $region25: #{simple_model_forward.8} parent=0 // pred_fallthru
    _

// kernel: simple_model_forward.9
$region0: #{simple_model_forward.9}
  #allocation0 [shape = 'u32[]', space=smem, size = 0x4, offset = 0x4, fixed_abs, tag = 'smem constant byte address 0x4 - core index']
  #allocation1 [shape = 'u32[144,128]{1,0:T(1,128)}', space=vmem, size = 0x12000, scoped, tag = 'internal scratch']
  %s0 = inlined_call_operand.vmem [shape: bf16[16,3136], index: 0, kind: input, shape index: {}]
  %s1 = inlined_call_operand.vmem [shape: bf16[3136,128], index: 1, kind: input, shape index: {}]
  %s2 = inlined_call_operand.vmem [shape: f32[1,128], index: 2, kind: input, shape index: {}]
  %s3 = inlined_call_operand.vmem [shape: f32[1,128], index: 3, kind: input, shape index: {}]
  %s4 = inlined_call_operand.vmem [shape: f32[16,128], index: 4, kind: output, shape index: {}]
  %s5 = sld [smem:[#allocation0]]
  $region26: #{simple_model_forward.9} parent=0
    _
  %s7 = ssub.s32 1, %s5
  %s8 = scalar_select 0, %s7, %s5
  // Predicated region
  $region2: #{simple_model_forward.9} parent=0 // pred_check
    _
  $region3: #{simple_model_forward.9} parent=0 // pred_check_branch
    %10 = sbr.rel (0) target = $region5
  $region4: #{simple_model_forward.9} parent=0 // pred_region
    _
  $region5: #{simple_model_forward.9} parent=0 // pred_fallthru
    _
  // Predicated region
  $region6: #{simple_model_forward.9} parent=0 // pred_check
    _
  $region7: #{simple_model_forward.9} parent=0 // pred_check_branch
    %12 = sbr.rel (0) target = $region9
  $region8: #{simple_model_forward.9} parent=0 // pred_region
    _
  $region9: #{simple_model_forward.9} parent=0 // pred_fallthru
    _
  // Predicated region
  $region10: #{simple_model_forward.9} parent=0 // pred_check
    _
  $region11: #{simple_model_forward.9} parent=0 // pred_check_branch
    %14 = sbr.rel (0) target = $region13
  $region12: #{simple_model_forward.9} parent=0 // pred_region
    _
  $region13: #{simple_model_forward.9} parent=0 // pred_fallthru
    _
  // Predicated region
  $region14: #{simple_model_forward.9} parent=0 // pred_check
    _
  $region15: #{simple_model_forward.9} parent=0 // pred_check_branch
    %16 = sbr.rel (0) target = $region17
  $region16: #{simple_model_forward.9} parent=0 // pred_region
    _
  $region17: #{simple_model_forward.9} parent=0 // pred_fallthru
    _
  %v18 = vld [vmem:[%s0] sm:$0xff]
  %v19 = vld [vmem:[%s0 + $0x8] sm:$0xff]
  %v20 = vld [vmem:[%s0 + $0x10] sm:$0xff]
  %v21 = vld [vmem:[%s0 + $0x18] sm:$0xff]
  %v22 = vld [vmem:[%s0 + $0x20] sm:$0xff]
  %v23 = vld [vmem:[%s0 + $0x28] sm:$0xff]
  %v24 = vld [vmem:[%s0 + $0x30] sm:$0xff]
  %v25 = vld [vmem:[%s0 + $0x38] sm:$0xff]
  %v26 = vld [vmem:[%s0 + $0x40] sm:$0xff]
  %v27 = vld [vmem:[%s0 + $0x48] sm:$0xff]
  %v28 = vld [vmem:[%s0 + $0x50] sm:$0xff]
  %v29 = vld [vmem:[%s0 + $0x58] sm:$0xff]
  %v30 = vld [vmem:[%s0 + $0x60] sm:$0xf]
  %v31 = vld [vmem:[%s0 + $0x64] sm:$0xff]
  %v32 = vld [vmem:[%s0 + $0x6c] sm:$0xff]
  %v33 = vld [vmem:[%s0 + $0x74] sm:$0xff]
  %v34 = vld [vmem:[%s0 + $0x7c] sm:$0xff]
  %v35 = vld [vmem:[%s0 + $0x84] sm:$0xff]
  %v36 = vld [vmem:[%s0 + $0x8c] sm:$0xff]
  %v37 = vld [vmem:[%s0 + $0x94] sm:$0xff]
  %v38 = vld [vmem:[%s0 + $0x9c] sm:$0xff]
  %v39 = vld [vmem:[%s0 + $0xa4] sm:$0xff]
  %v40 = vld [vmem:[%s0 + $0xac] sm:$0xff]
  %v41 = vld [vmem:[%s0 + $0xb4] sm:$0xff]
  %v42 = vld [vmem:[%s0 + $0xbc] sm:$0xff]
  %v43 = vld [vmem:[%s0 + $0xc4] sm:$0xf]
  %v44 = vld [vmem:[%s1] sm:$0xf]
  %v45 = vld [vmem:[%s1 + $0x4] sm:$0xf]
  %v46 = vld [vmem:[%s1 + $0x8] sm:$0xf]
  %v47 = vld [vmem:[%s1 + $0xc] sm:$0xf]
  %v48 = vld [vmem:[%s1 + $0x10] sm:$0xf]
  %v49 = vld [vmem:[%s1 + $0x14] sm:$0xf]
  %v50 = vld [vmem:[%s1 + $0x18] sm:$0xf]
  %v51 = vld [vmem:[%s1 + $0x1c] sm:$0xf]
  %v52 = vld [vmem:[%s1 + $0x20] sm:$0xf]
  %v53 = vld [vmem:[%s1 + $0x24] sm:$0xf]
  %v54 = vld [vmem:[%s1 + $0x28] sm:$0xf]
  %v55 = vld [vmem:[%s1 + $0x2c] sm:$0xf]
  %v56 = vld [vmem:[%s1 + $0x30] sm:$0xf]
  %v57 = vld [vmem:[%s1 + $0x34] sm:$0xf]
  %v58 = vld [vmem:[%s1 + $0x38] sm:$0xf]
  %v59 = vld [vmem:[%s1 + $0x3c] sm:$0xf]
  %v60 = vld [vmem:[%s1 + $0x40] sm:$0xf]
  %v61 = vld [vmem:[%s1 + $0x44] sm:$0xf]
  %v62 = vld [vmem:[%s1 + $0x48] sm:$0xf]
  %v63 = vld [vmem:[%s1 + $0x4c] sm:$0xf]
  %v64 = vld [vmem:[%s1 + $0x50] sm:$0xf]
  %v65 = vld [vmem:[%s1 + $0x54] sm:$0xf]
  %v66 = vld [vmem:[%s1 + $0x58] sm:$0xf]
  %v67 = vld [vmem:[%s1 + $0x5c] sm:$0xf]
  %v68 = vld [vmem:[%s1 + $0x60] sm:$0xf]
  %v69 = vld [vmem:[%s1 + $0x64] sm:$0xf]
  %v70 = vld [vmem:[%s1 + $0x68] sm:$0xf]
  %v71 = vld [vmem:[%s1 + $0x6c] sm:$0xf]
  %v72 = vld [vmem:[%s1 + $0x70] sm:$0xf]
  %v73 = vld [vmem:[%s1 + $0x74] sm:$0xf]
  %v74 = vld [vmem:[%s1 + $0x78] sm:$0xf]
  %v75 = vld [vmem:[%s1 + $0x7c] sm:$0xf]
  %v76 = vld [vmem:[%s1 + $0x80] sm:$0xf]
  %v77 = vld [vmem:[%s1 + $0x84] sm:$0xf]
  %v78 = vld [vmem:[%s1 + $0x88] sm:$0xf]
  %v79 = vld [vmem:[%s1 + $0x8c] sm:$0xf]
  %v80 = vld [vmem:[%s1 + $0x90] sm:$0xf]
  %v81 = vld [vmem:[%s1 + $0x94] sm:$0xf]
  %v82 = vld [vmem:[%s1 + $0x98] sm:$0xf]
  %v83 = vld [vmem:[%s1 + $0x9c] sm:$0xf]
  %v84 = vld [vmem:[%s1 + $0xa0] sm:$0xf]
  %v85 = vld [vmem:[%s1 + $0xa4] sm:$0xf]
  %v86 = vld [vmem:[%s1 + $0xa8] sm:$0xf]
  %v87 = vld [vmem:[%s1 + $0xac] sm:$0xf]
  %v88 = vld [vmem:[%s1 + $0xb0] sm:$0xf]
  %v89 = vld [vmem:[%s1 + $0xb4] sm:$0xf]
  %v90 = vld [vmem:[%s1 + $0xb8] sm:$0xf]
  %v91 = vld [vmem:[%s1 + $0xbc] sm:$0xf]
  %v92 = vld [vmem:[%s1 + $0xc0] sm:$0xf]
  %v93 = vld [vmem:[%s1 + $0xc4] sm:$0xf]
  %v94 = vld [vmem:[%s1 + $0xc8] sm:$0xf]
  %v95 = vld [vmem:[%s1 + $0xcc] sm:$0xf]
  %v96 = vld [vmem:[%s1 + $0xd0] sm:$0xf]
  %v97 = vld [vmem:[%s1 + $0xd4] sm:$0xf]
  %v98 = vld [vmem:[%s1 + $0xd8] sm:$0xf]
  %v99 = vld [vmem:[%s1 + $0xdc] sm:$0xf]
  %v100 = vld [vmem:[%s1 + $0xe0] sm:$0xf]
  %v101 = vld [vmem:[%s1 + $0xe4] sm:$0xf]
  %v102 = vld [vmem:[%s1 + $0xe8] sm:$0xf]
  %v103 = vld [vmem:[%s1 + $0xec] sm:$0xf]
  %v104 = vld [vmem:[%s1 + $0xf0] sm:$0xf]
  %v105 = vld [vmem:[%s1 + $0xf4] sm:$0xf]
  %v106 = vld [vmem:[%s1 + $0xf8] sm:$0xf]
  %v107 = vld [vmem:[%s1 + $0xfc] sm:$0xf]
  %v108 = vld [vmem:[%s1 + $0x100] sm:$0xf]
  %v109 = vld [vmem:[%s1 + $0x104] sm:$0xf]
  %v110 = vld [vmem:[%s1 + $0x108] sm:$0xf]
  %v111 = vld [vmem:[%s1 + $0x10c] sm:$0xf]
  %v112 = vld [vmem:[%s1 + $0x110] sm:$0xf]
  %v113 = vld [vmem:[%s1 + $0x114] sm:$0xf]
  %v114 = vld [vmem:[%s1 + $0x118] sm:$0xf]
  %v115 = vld [vmem:[%s1 + $0x11c] sm:$0xf]
  %v116 = vld [vmem:[%s1 + $0x120] sm:$0xf]
  %v117 = vld [vmem:[%s1 + $0x124] sm:$0xf]
  %v118 = vld [vmem:[%s1 + $0x128] sm:$0xf]
  %v119 = vld [vmem:[%s1 + $0x12c] sm:$0xf]
  %v120 = vld [vmem:[%s1 + $0x130] sm:$0xf]
  %v121 = vld [vmem:[%s1 + $0x134] sm:$0xf]
  %v122 = vld [vmem:[%s1 + $0x138] sm:$0xf]
  %v123 = vld [vmem:[%s1 + $0x13c] sm:$0xf]
  %v124 = vld [vmem:[%s1 + $0x140] sm:$0xf]
  %v125 = vld [vmem:[%s1 + $0x144] sm:$0xf]
  %v126 = vld [vmem:[%s1 + $0x148] sm:$0xf]
  %v127 = vld [vmem:[%s1 + $0x14c] sm:$0xf]
  %v128 = vld [vmem:[%s1 + $0x150] sm:$0xf]
  %v129 = vld [vmem:[%s1 + $0x154] sm:$0xf]
  %v130 = vld [vmem:[%s1 + $0x158] sm:$0xf]
  %v131 = vld [vmem:[%s1 + $0x15c] sm:$0xf]
  %v132 = vld [vmem:[%s1 + $0x160] sm:$0xf]
  %v133 = vld [vmem:[%s1 + $0x164] sm:$0xf]
  %v134 = vld [vmem:[%s1 + $0x168] sm:$0xf]
  %v135 = vld [vmem:[%s1 + $0x16c] sm:$0xf]
  %v136 = vld [vmem:[%s1 + $0x170] sm:$0xf]
  %v137 = vld [vmem:[%s1 + $0x174] sm:$0xf]
  %v138 = vld [vmem:[%s1 + $0x178] sm:$0xf]
  %v139 = vld [vmem:[%s1 + $0x17c] sm:$0xf]
  %v140 = vld [vmem:[%s1 + $0x180] sm:$0xf]
  %v141 = vld [vmem:[%s1 + $0x184] sm:$0xf]
  %v142 = vld [vmem:[%s1 + $0x188] sm:$0xf]
  %v143 = vld [vmem:[%s1 + $0x18c] sm:$0xf]
  %v144 = vld [vmem:[%s1 + $0x190] sm:$0xf]
  %v145 = vld [vmem:[%s1 + $0x194] sm:$0xf]
  %v146 = vld [vmem:[%s1 + $0x198] sm:$0xf]
  %v147 = vld [vmem:[%s1 + $0x19c] sm:$0xf]
  %v148 = vld [vmem:[%s1 + $0x1a0] sm:$0xf]
  %v149 = vld [vmem:[%s1 + $0x1a4] sm:$0xf]
  %v150 = vld [vmem:[%s1 + $0x1a8] sm:$0xf]
  %v151 = vld [vmem:[%s1 + $0x1ac] sm:$0xf]
  %v152 = vld [vmem:[%s1 + $0x1b0] sm:$0xf]
  %v153 = vld [vmem:[%s1 + $0x1b4] sm:$0xf]
  %v154 = vld [vmem:[%s1 + $0x1b8] sm:$0xf]
  %v155 = vld [vmem:[%s1 + $0x1bc] sm:$0xf]
  %v156 = vld [vmem:[%s1 + $0x1c0] sm:$0xf]
  %v157 = vld [vmem:[%s1 + $0x1c4] sm:$0xf]
  %v158 = vld [vmem:[%s1 + $0x1c8] sm:$0xf]
  %v159 = vld [vmem:[%s1 + $0x1cc] sm:$0xf]
  %v160 = vld [vmem:[%s1 + $0x1d0] sm:$0xf]
  %v161 = vld [vmem:[%s1 + $0x1d4] sm:$0xf]
  %v162 = vld [vmem:[%s1 + $0x1d8] sm:$0xf]
  %v163 = vld [vmem:[%s1 + $0x1dc] sm:$0xf]
  %v164 = vld [vmem:[%s1 + $0x1e0] sm:$0xf]
  %v165 = vld [vmem:[%s1 + $0x1e4] sm:$0xf]
  %v166 = vld [vmem:[%s1 + $0x1e8] sm:$0xf]
  %v167 = vld [vmem:[%s1 + $0x1ec] sm:$0xf]
  %v168 = vld [vmem:[%s1 + $0x1f0] sm:$0xf]
  %v169 = vld [vmem:[%s1 + $0x1f4] sm:$0xf]
  %v170 = vld [vmem:[%s1 + $0x1f8] sm:$0xf]
  %v171 = vld [vmem:[%s1 + $0x1fc] sm:$0xf]
  %v172 = vld [vmem:[%s1 + $0x200] sm:$0xf]
  %v173 = vld [vmem:[%s1 + $0x204] sm:$0xf]
  %v174 = vld [vmem:[%s1 + $0x208] sm:$0xf]
  %v175 = vld [vmem:[%s1 + $0x20c] sm:$0xf]
  %v176 = vld [vmem:[%s1 + $0x210] sm:$0xf]
  %v177 = vld [vmem:[%s1 + $0x214] sm:$0xf]
  %v178 = vld [vmem:[%s1 + $0x218] sm:$0xf]
  %v179 = vld [vmem:[%s1 + $0x21c] sm:$0xf]
  %v180 = vld [vmem:[%s1 + $0x220] sm:$0xf]
  %v181 = vld [vmem:[%s1 + $0x224] sm:$0xf]
  %v182 = vld [vmem:[%s1 + $0x228] sm:$0xf]
  %v183 = vld [vmem:[%s1 + $0x22c] sm:$0xf]
  %v184 = vld [vmem:[%s1 + $0x230] sm:$0xf]
  %v185 = vld [vmem:[%s1 + $0x234] sm:$0xf]
  %v186 = vld [vmem:[%s1 + $0x238] sm:$0xf]
  %v187 = vld [vmem:[%s1 + $0x23c] sm:$0xf]
  %v188 = vld [vmem:[%s1 + $0x240] sm:$0xf]
  %v189 = vld [vmem:[%s1 + $0x244] sm:$0xf]
  %v190 = vld [vmem:[%s1 + $0x248] sm:$0xf]
  %v191 = vld [vmem:[%s1 + $0x24c] sm:$0xf]
  %v192 = vld [vmem:[%s1 + $0x250] sm:$0xf]
  %v193 = vld [vmem:[%s1 + $0x254] sm:$0xf]
  %v194 = vld [vmem:[%s1 + $0x258] sm:$0xf]
  %v195 = vld [vmem:[%s1 + $0x25c] sm:$0xf]
  %v196 = vld [vmem:[%s1 + $0x260] sm:$0xf]
  %v197 = vld [vmem:[%s1 + $0x264] sm:$0xf]
  %v198 = vld [vmem:[%s1 + $0x268] sm:$0xf]
  %v199 = vld [vmem:[%s1 + $0x26c] sm:$0xf]
  %v200 = vld [vmem:[%s1 + $0x270] sm:$0xf]
  %v201 = vld [vmem:[%s1 + $0x274] sm:$0xf]
  %v202 = vld [vmem:[%s1 + $0x278] sm:$0xf]
  %v203 = vld [vmem:[%s1 + $0x27c] sm:$0xf]
  %v204 = vld [vmem:[%s1 + $0x280] sm:$0xf]
  %v205 = vld [vmem:[%s1 + $0x284] sm:$0xf]
  %v206 = vld [vmem:[%s1 + $0x288] sm:$0xf]
  %v207 = vld [vmem:[%s1 + $0x28c] sm:$0xf]
  %v208 = vld [vmem:[%s1 + $0x290] sm:$0xf]
  %v209 = vld [vmem:[%s1 + $0x294] sm:$0xf]
  %v210 = vld [vmem:[%s1 + $0x298] sm:$0xf]
  %v211 = vld [vmem:[%s1 + $0x29c] sm:$0xf]
  %v212 = vld [vmem:[%s1 + $0x2a0] sm:$0xf]
  %v213 = vld [vmem:[%s1 + $0x2a4] sm:$0xf]
  %v214 = vld [vmem:[%s1 + $0x2a8] sm:$0xf]
  %v215 = vld [vmem:[%s1 + $0x2ac] sm:$0xf]
  %v216 = vld [vmem:[%s1 + $0x2b0] sm:$0xf]
  %v217 = vld [vmem:[%s1 + $0x2b4] sm:$0xf]
  %v218 = vld [vmem:[%s1 + $0x2b8] sm:$0xf]
  %v219 = vld [vmem:[%s1 + $0x2bc] sm:$0xf]
  %v220 = vld [vmem:[%s1 + $0x2c0] sm:$0xf]
  %v221 = vld [vmem:[%s1 + $0x2c4] sm:$0xf]
  %v222 = vld [vmem:[%s1 + $0x2c8] sm:$0xf]
  %v223 = vld [vmem:[%s1 + $0x2cc] sm:$0xf]
  %v224 = vld [vmem:[%s1 + $0x2d0] sm:$0xf]
  %v225 = vld [vmem:[%s1 + $0x2d4] sm:$0xf]
  %v226 = vld [vmem:[%s1 + $0x2d8] sm:$0xf]
  %v227 = vld [vmem:[%s1 + $0x2dc] sm:$0xf]
  %v228 = vld [vmem:[%s1 + $0x2e0] sm:$0xf]
  %v229 = vld [vmem:[%s1 + $0x2e4] sm:$0xf]
  %v230 = vld [vmem:[%s1 + $0x2e8] sm:$0xf]
  %v231 = vld [vmem:[%s1 + $0x2ec] sm:$0xf]
  %v232 = vld [vmem:[%s1 + $0x2f0] sm:$0xf]
  %v233 = vld [vmem:[%s1 + $0x2f4] sm:$0xf]
  %v234 = vld [vmem:[%s1 + $0x2f8] sm:$0xf]
  %v235 = vld [vmem:[%s1 + $0x2fc] sm:$0xf]
  %v236 = vld [vmem:[%s1 + $0x300] sm:$0xf]
  %v237 = vld [vmem:[%s1 + $0x304] sm:$0xf]
  %v238 = vld [vmem:[%s1 + $0x308] sm:$0xf]
  %v239 = vld [vmem:[%s1 + $0x30c] sm:$0xf]
  %v240 = vld [vmem:[%s1 + $0x310] sm:$0xf]
  %v241 = vld [vmem:[%s1 + $0x314] sm:$0xf]
  %v242 = vld [vmem:[%s1 + $0x318] sm:$0xf]
  %v243 = vld [vmem:[%s1 + $0x31c] sm:$0xf]
  %v244 = vld [vmem:[%s1 + $0x320] sm:$0xf]
  %v245 = vld [vmem:[%s1 + $0x324] sm:$0xf]
  %v246 = vld [vmem:[%s1 + $0x328] sm:$0xf]
  %v247 = vld [vmem:[%s1 + $0x32c] sm:$0xf]
  %v248 = vld [vmem:[%s1 + $0x330] sm:$0xf]
  %v249 = vld [vmem:[%s1 + $0x334] sm:$0xf]
  %v250 = vld [vmem:[%s1 + $0x338] sm:$0xf]
  %v251 = vld [vmem:[%s1 + $0x33c] sm:$0xf]
  %v252 = vld [vmem:[%s1 + $0x340] sm:$0xf]
  %v253 = vld [vmem:[%s1 + $0x344] sm:$0xf]
  %v254 = vld [vmem:[%s1 + $0x348] sm:$0xf]
  %v255 = vld [vmem:[%s1 + $0x34c] sm:$0xf]
  %v256 = vld [vmem:[%s1 + $0x350] sm:$0xf]
  %v257 = vld [vmem:[%s1 + $0x354] sm:$0xf]
  %v258 = vld [vmem:[%s1 + $0x358] sm:$0xf]
  %v259 = vld [vmem:[%s1 + $0x35c] sm:$0xf]
  %v260 = vld [vmem:[%s1 + $0x360] sm:$0xf]
  %v261 = vld [vmem:[%s1 + $0x364] sm:$0xf]
  %v262 = vld [vmem:[%s1 + $0x368] sm:$0xf]
  %v263 = vld [vmem:[%s1 + $0x36c] sm:$0xf]
  %v264 = vld [vmem:[%s1 + $0x370] sm:$0xf]
  %v265 = vld [vmem:[%s1 + $0x374] sm:$0xf]
  %v266 = vld [vmem:[%s1 + $0x378] sm:$0xf]
  %v267 = vld [vmem:[%s1 + $0x37c] sm:$0xf]
  %v268 = vld [vmem:[%s1 + $0x380] sm:$0xf]
  %v269 = vld [vmem:[%s1 + $0x384] sm:$0xf]
  %v270 = vld [vmem:[%s1 + $0x388] sm:$0xf]
  %v271 = vld [vmem:[%s1 + $0x38c] sm:$0xf]
  %v272 = vld [vmem:[%s1 + $0x390] sm:$0xf]
  %v273 = vld [vmem:[%s1 + $0x394] sm:$0xf]
  %v274 = vld [vmem:[%s1 + $0x398] sm:$0xf]
  %v275 = vld [vmem:[%s1 + $0x39c] sm:$0xf]
  %v276 = vld [vmem:[%s1 + $0x3a0] sm:$0xf]
  %v277 = vld [vmem:[%s1 + $0x3a4] sm:$0xf]
  %v278 = vld [vmem:[%s1 + $0x3a8] sm:$0xf]
  %v279 = vld [vmem:[%s1 + $0x3ac] sm:$0xf]
  %v280 = vld [vmem:[%s1 + $0x3b0] sm:$0xf]
  %v281 = vld [vmem:[%s1 + $0x3b4] sm:$0xf]
  %v282 = vld [vmem:[%s1 + $0x3b8] sm:$0xf]
  %v283 = vld [vmem:[%s1 + $0x3bc] sm:$0xf]
  %v284 = vld [vmem:[%s1 + $0x3c0] sm:$0xf]
  %v285 = vld [vmem:[%s1 + $0x3c4] sm:$0xf]
  %v286 = vld [vmem:[%s1 + $0x3c8] sm:$0xf]
  %v287 = vld [vmem:[%s1 + $0x3cc] sm:$0xf]
  %v288 = vld [vmem:[%s1 + $0x3d0] sm:$0xf]
  %v289 = vld [vmem:[%s1 + $0x3d4] sm:$0xf]
  %v290 = vld [vmem:[%s1 + $0x3d8] sm:$0xf]
  %v291 = vld [vmem:[%s1 + $0x3dc] sm:$0xf]
  %v292 = vld [vmem:[%s1 + $0x3e0] sm:$0xf]
  %v293 = vld [vmem:[%s1 + $0x3e4] sm:$0xf]
  %v294 = vld [vmem:[%s1 + $0x3e8] sm:$0xf]
  %v295 = vld [vmem:[%s1 + $0x3ec] sm:$0xf]
  %v296 = vld [vmem:[%s1 + $0x3f0] sm:$0xf]
  %v297 = vld [vmem:[%s1 + $0x3f4] sm:$0xf]
  %v298 = vld [vmem:[%s1 + $0x3f8] sm:$0xf]
  %v299 = vld [vmem:[%s1 + $0x3fc] sm:$0xf]
  %v300 = vld [vmem:[%s1 + $0x400] sm:$0xf]
  %v301 = vld [vmem:[%s1 + $0x404] sm:$0xf]
  %v302 = vld [vmem:[%s1 + $0x408] sm:$0xf]
  %v303 = vld [vmem:[%s1 + $0x40c] sm:$0xf]
  %v304 = vld [vmem:[%s1 + $0x410] sm:$0xf]
  %v305 = vld [vmem:[%s1 + $0x414] sm:$0xf]
  %v306 = vld [vmem:[%s1 + $0x418] sm:$0xf]
  %v307 = vld [vmem:[%s1 + $0x41c] sm:$0xf]
  %v308 = vld [vmem:[%s1 + $0x420] sm:$0xf]
  %v309 = vld [vmem:[%s1 + $0x424] sm:$0xf]
  %v310 = vld [vmem:[%s1 + $0x428] sm:$0xf]
  %v311 = vld [vmem:[%s1 + $0x42c] sm:$0xf]
  %v312 = vld [vmem:[%s1 + $0x430] sm:$0xf]
  %v313 = vld [vmem:[%s1 + $0x434] sm:$0xf]
  %v314 = vld [vmem:[%s1 + $0x438] sm:$0xf]
  %v315 = vld [vmem:[%s1 + $0x43c] sm:$0xf]
  %v316 = vld [vmem:[%s1 + $0x440] sm:$0xf]
  %v317 = vld [vmem:[%s1 + $0x444] sm:$0xf]
  %v318 = vld [vmem:[%s1 + $0x448] sm:$0xf]
  %v319 = vld [vmem:[%s1 + $0x44c] sm:$0xf]
  %v320 = vld [vmem:[%s1 + $0x450] sm:$0xf]
  %v321 = vld [vmem:[%s1 + $0x454] sm:$0xf]
  %v322 = vld [vmem:[%s1 + $0x458] sm:$0xf]
  %v323 = vld [vmem:[%s1 + $0x45c] sm:$0xf]
  %v324 = vld [vmem:[%s1 + $0x460] sm:$0xf]
  %v325 = vld [vmem:[%s1 + $0x464] sm:$0xf]
  %v326 = vld [vmem:[%s1 + $0x468] sm:$0xf]
  %v327 = vld [vmem:[%s1 + $0x46c] sm:$0xf]
  %v328 = vld [vmem:[%s1 + $0x470] sm:$0xf]
  %v329 = vld [vmem:[%s1 + $0x474] sm:$0xf]
  %v330 = vld [vmem:[%s1 + $0x478] sm:$0xf]
  %v331 = vld [vmem:[%s1 + $0x47c] sm:$0xf]
  %v332 = vld [vmem:[%s1 + $0x480] sm:$0xf]
  %v333 = vld [vmem:[%s1 + $0x484] sm:$0xf]
  %v334 = vld [vmem:[%s1 + $0x488] sm:$0xf]
  %v335 = vld [vmem:[%s1 + $0x48c] sm:$0xf]
  %v336 = vld [vmem:[%s1 + $0x490] sm:$0xf]
  %v337 = vld [vmem:[%s1 + $0x494] sm:$0xf]
  %v338 = vld [vmem:[%s1 + $0x498] sm:$0xf]
  %v339 = vld [vmem:[%s1 + $0x49c] sm:$0xf]
  %v340 = vld [vmem:[%s1 + $0x4a0] sm:$0xf]
  %v341 = vld [vmem:[%s1 + $0x4a4] sm:$0xf]
  %v342 = vld [vmem:[%s1 + $0x4a8] sm:$0xf]
  %v343 = vld [vmem:[%s1 + $0x4ac] sm:$0xf]
  %v344 = vld [vmem:[%s1 + $0x4b0] sm:$0xf]
  %v345 = vld [vmem:[%s1 + $0x4b4] sm:$0xf]
  %v346 = vld [vmem:[%s1 + $0x4b8] sm:$0xf]
  %v347 = vld [vmem:[%s1 + $0x4bc] sm:$0xf]
  %v348 = vld [vmem:[%s1 + $0x4c0] sm:$0xf]
  %v349 = vld [vmem:[%s1 + $0x4c4] sm:$0xf]
  %v350 = vld [vmem:[%s1 + $0x4c8] sm:$0xf]
  %v351 = vld [vmem:[%s1 + $0x4cc] sm:$0xf]
  %v352 = vld [vmem:[%s1 + $0x4d0] sm:$0xf]
  %v353 = vld [vmem:[%s1 + $0x4d4] sm:$0xf]
  %v354 = vld [vmem:[%s1 + $0x4d8] sm:$0xf]
  %v355 = vld [vmem:[%s1 + $0x4dc] sm:$0xf]
  %v356 = vld [vmem:[%s1 + $0x4e0] sm:$0xf]
  %v357 = vld [vmem:[%s1 + $0x4e4] sm:$0xf]
  %v358 = vld [vmem:[%s1 + $0x4e8] sm:$0xf]
  %v359 = vld [vmem:[%s1 + $0x4ec] sm:$0xf]
  %v360 = vld [vmem:[%s1 + $0x4f0] sm:$0xf]
  %v361 = vld [vmem:[%s1 + $0x4f4] sm:$0xf]
  %v362 = vld [vmem:[%s1 + $0x4f8] sm:$0xf]
  %v363 = vld [vmem:[%s1 + $0x4fc] sm:$0xf]
  %v364 = vld [vmem:[%s1 + $0x500] sm:$0xf]
  %v365 = vld [vmem:[%s1 + $0x504] sm:$0xf]
  %v366 = vld [vmem:[%s1 + $0x508] sm:$0xf]
  %v367 = vld [vmem:[%s1 + $0x50c] sm:$0xf]
  %v368 = vld [vmem:[%s1 + $0x510] sm:$0xf]
  %v369 = vld [vmem:[%s1 + $0x514] sm:$0xf]
  %v370 = vld [vmem:[%s1 + $0x518] sm:$0xf]
  %v371 = vld [vmem:[%s1 + $0x51c] sm:$0xf]
  %v372 = vld [vmem:[%s1 + $0x520] sm:$0xf]
  %v373 = vld [vmem:[%s1 + $0x524] sm:$0xf]
  %v374 = vld [vmem:[%s1 + $0x528] sm:$0xf]
  %v375 = vld [vmem:[%s1 + $0x52c] sm:$0xf]
  %v376 = vld [vmem:[%s1 + $0x530] sm:$0xf]
  %v377 = vld [vmem:[%s1 + $0x534] sm:$0xf]
  %v378 = vld [vmem:[%s1 + $0x538] sm:$0xf]
  %v379 = vld [vmem:[%s1 + $0x53c] sm:$0xf]
  %v380 = vld [vmem:[%s1 + $0x540] sm:$0xf]
  %v381 = vld [vmem:[%s1 + $0x544] sm:$0xf]
  %v382 = vld [vmem:[%s1 + $0x548] sm:$0xf]
  %v383 = vld [vmem:[%s1 + $0x54c] sm:$0xf]
  %v384 = vld [vmem:[%s1 + $0x550] sm:$0xf]
  %v385 = vld [vmem:[%s1 + $0x554] sm:$0xf]
  %v386 = vld [vmem:[%s1 + $0x558] sm:$0xf]
  %v387 = vld [vmem:[%s1 + $0x55c] sm:$0xf]
  %v388 = vld [vmem:[%s1 + $0x560] sm:$0xf]
  %v389 = vld [vmem:[%s1 + $0x564] sm:$0xf]
  %v390 = vld [vmem:[%s1 + $0x568] sm:$0xf]
  %v391 = vld [vmem:[%s1 + $0x56c] sm:$0xf]
  %v392 = vld [vmem:[%s1 + $0x570] sm:$0xf]
  %v393 = vld [vmem:[%s1 + $0x574] sm:$0xf]
  %v394 = vld [vmem:[%s1 + $0x578] sm:$0xf]
  %v395 = vld [vmem:[%s1 + $0x57c] sm:$0xf]
  %v396 = vld [vmem:[%s1 + $0x580] sm:$0xf]
  %v397 = vld [vmem:[%s1 + $0x584] sm:$0xf]
  %v398 = vld [vmem:[%s1 + $0x588] sm:$0xf]
  %v399 = vld [vmem:[%s1 + $0x58c] sm:$0xf]
  %v400 = vld [vmem:[%s1 + $0x590] sm:$0xf]
  %v401 = vld [vmem:[%s1 + $0x594] sm:$0xf]
  %v402 = vld [vmem:[%s1 + $0x598] sm:$0xf]
  %v403 = vld [vmem:[%s1 + $0x59c] sm:$0xf]
  %v404 = vld [vmem:[%s1 + $0x5a0] sm:$0xf]
  %v405 = vld [vmem:[%s1 + $0x5a4] sm:$0xf]
  %v406 = vld [vmem:[%s1 + $0x5a8] sm:$0xf]
  %v407 = vld [vmem:[%s1 + $0x5ac] sm:$0xf]
  %v408 = vld [vmem:[%s1 + $0x5b0] sm:$0xf]
  %v409 = vld [vmem:[%s1 + $0x5b4] sm:$0xf]
  %v410 = vld [vmem:[%s1 + $0x5b8] sm:$0xf]
  %v411 = vld [vmem:[%s1 + $0x5bc] sm:$0xf]
  %v412 = vld [vmem:[%s1 + $0x5c0] sm:$0xf]
  %v413 = vld [vmem:[%s1 + $0x5c4] sm:$0xf]
  %v414 = vld [vmem:[%s1 + $0x5c8] sm:$0xf]
  %v415 = vld [vmem:[%s1 + $0x5cc] sm:$0xf]
  %v416 = vld [vmem:[%s1 + $0x5d0] sm:$0xf]
  %v417 = vld [vmem:[%s1 + $0x5d4] sm:$0xf]
  %v418 = vld [vmem:[%s1 + $0x5d8] sm:$0xf]
  %v419 = vld [vmem:[%s1 + $0x5dc] sm:$0xf]
  %v420 = vld [vmem:[%s1 + $0x5e0] sm:$0xf]
  %v421 = vld [vmem:[%s1 + $0x5e4] sm:$0xf]
  %v422 = vld [vmem:[%s1 + $0x5e8] sm:$0xf]
  %v423 = vld [vmem:[%s1 + $0x5ec] sm:$0xf]
  %v424 = vld [vmem:[%s1 + $0x5f0] sm:$0xf]
  %v425 = vld [vmem:[%s1 + $0x5f4] sm:$0xf]
  %v426 = vld [vmem:[%s1 + $0x5f8] sm:$0xf]
  %v427 = vld [vmem:[%s1 + $0x5fc] sm:$0xf]
  %v428 = vld [vmem:[%s1 + $0x600] sm:$0xf]
  %v429 = vld [vmem:[%s1 + $0x604] sm:$0xf]
  %v430 = vld [vmem:[%s1 + $0x608] sm:$0xf]
  %v431 = vld [vmem:[%s1 + $0x60c] sm:$0xf]
  %v432 = vld [vmem:[%s1 + $0x610] sm:$0xf]
  %v433 = vld [vmem:[%s1 + $0x614] sm:$0xf]
  %v434 = vld [vmem:[%s1 + $0x618] sm:$0xf]
  %v435 = vld [vmem:[%s1 + $0x61c] sm:$0xf]
  %v462 = vunpack.c.l.b16 %v18
  %v463 = vunpack.c.h.b16 %v18
  %v464 = vunpack.c.l.b16 %v19
  %v465 = vunpack.c.h.b16 %v19
  %v466 = vunpack.c.l.b16 %v20
  %v467 = vunpack.c.h.b16 %v20
  %v468 = vunpack.c.l.b16 %v21
  %v469 = vunpack.c.h.b16 %v21
  %v470 = vunpack.c.l.b16 %v22
  %v471 = vunpack.c.h.b16 %v22
  %v472 = vunpack.c.l.b16 %v23
  %v473 = vunpack.c.h.b16 %v23
  %v474 = vunpack.c.l.b16 %v24
  %v475 = vunpack.c.h.b16 %v24
  %v476 = vunpack.c.l.b16 %v25
  %v477 = vunpack.c.h.b16 %v25
  %v478 = vunpack.c.l.b16 %v26
  %v479 = vunpack.c.h.b16 %v26
  %v480 = vunpack.c.l.b16 %v27
  %v481 = vunpack.c.h.b16 %v27
  %v482 = vunpack.c.l.b16 %v28
  %v483 = vunpack.c.h.b16 %v28
  %v484 = vunpack.c.l.b16 %v29
  %v485 = vunpack.c.h.b16 %v29
  %v486 = vunpack.c.l.b16 %v30
  %v487 = vunpack.c.l.b16 %v31
  %v488 = vunpack.c.h.b16 %v31
  %v489 = vunpack.c.l.b16 %v32
  %v490 = vunpack.c.h.b16 %v32
  %v491 = vunpack.c.l.b16 %v33
  %v492 = vunpack.c.h.b16 %v33
  %v493 = vunpack.c.l.b16 %v34
  %v494 = vunpack.c.h.b16 %v34
  %v495 = vunpack.c.l.b16 %v35
  %v496 = vunpack.c.h.b16 %v35
  %v497 = vunpack.c.l.b16 %v36
  %v498 = vunpack.c.h.b16 %v36
  %v499 = vunpack.c.l.b16 %v37
  %v500 = vunpack.c.h.b16 %v37
  %v501 = vunpack.c.l.b16 %v38
  %v502 = vunpack.c.h.b16 %v38
  %v503 = vunpack.c.l.b16 %v39
  %v504 = vunpack.c.h.b16 %v39
  %v505 = vunpack.c.l.b16 %v40
  %v506 = vunpack.c.h.b16 %v40
  %v507 = vunpack.c.l.b16 %v41
  %v508 = vunpack.c.h.b16 %v41
  %v509 = vunpack.c.l.b16 %v42
  %v510 = vunpack.c.h.b16 %v42
  %v511 = vunpack.c.l.b16 %v43
  %v512 = vpack.c.b16 %v487, %v462
  %v513 = vpack.c.b16 %v488, %v463
  %v514 = vpack.c.b16 %v489, %v464
  %v515 = vpack.c.b16 %v490, %v465
  %v516 = vpack.c.b16 %v491, %v466
  %v517 = vpack.c.b16 %v492, %v467
  %v518 = vpack.c.b16 %v493, %v468
  %v519 = vpack.c.b16 %v494, %v469
  %v520 = vpack.c.b16 %v495, %v470
  %v521 = vpack.c.b16 %v496, %v471
  %v522 = vpack.c.b16 %v497, %v472
  %v523 = vpack.c.b16 %v498, %v473
  %v524 = vpack.c.b16 %v499, %v474
  %v525 = vpack.c.b16 %v500, %v475
  %v526 = vpack.c.b16 %v501, %v476
  %v527 = vpack.c.b16 %v502, %v477
  %v528 = vpack.c.b16 %v503, %v478
  %v529 = vpack.c.b16 %v504, %v479
  %v530 = vpack.c.b16 %v505, %v480
  %v531 = vpack.c.b16 %v506, %v481
  %v532 = vpack.c.b16 %v507, %v482
  %v533 = vpack.c.b16 %v508, %v483
  %v534 = vpack.c.b16 %v509, %v484
  %v535 = vpack.c.b16 %v510, %v485
  %v536 = vpack.c.b16 %v511, %v486
  %v953 = vunpack.c.l.b16 %v44
  %v954 = vunpack.c.l.b16 %v45
  %v955 = vunpack.c.l.b16 %v46
  %v956 = vunpack.c.l.b16 %v47
  %v957 = vunpack.c.l.b16 %v48
  %v958 = vunpack.c.l.b16 %v49
  %v959 = vunpack.c.l.b16 %v50
  %v960 = vunpack.c.l.b16 %v51
  %v961 = vunpack.c.l.b16 %v52
  %v962 = vunpack.c.l.b16 %v53
  %v963 = vunpack.c.l.b16 %v54
  %v964 = vunpack.c.l.b16 %v55
  %v965 = vunpack.c.l.b16 %v56
  %v966 = vunpack.c.l.b16 %v57
  %v967 = vunpack.c.l.b16 %v58
  %v968 = vunpack.c.l.b16 %v59
  %v969 = vunpack.c.l.b16 %v60
  %v970 = vunpack.c.l.b16 %v61
  %v971 = vunpack.c.l.b16 %v62
  %v972 = vunpack.c.l.b16 %v63
  %v973 = vunpack.c.l.b16 %v64
  %v974 = vunpack.c.l.b16 %v65
  %v975 = vunpack.c.l.b16 %v66
  %v976 = vunpack.c.l.b16 %v67
  %v977 = vunpack.c.l.b16 %v68
  %v978 = vunpack.c.l.b16 %v69
  %v979 = vunpack.c.l.b16 %v70
  %v980 = vunpack.c.l.b16 %v71
  %v981 = vunpack.c.l.b16 %v72
  %v982 = vunpack.c.l.b16 %v73
  %v983 = vunpack.c.l.b16 %v74
  %v984 = vunpack.c.l.b16 %v75
  %v985 = vunpack.c.l.b16 %v76
  %v986 = vunpack.c.l.b16 %v77
  %v987 = vunpack.c.l.b16 %v78
  %v988 = vunpack.c.l.b16 %v79
  %v989 = vunpack.c.l.b16 %v80
  %v990 = vunpack.c.l.b16 %v81
  %v991 = vunpack.c.l.b16 %v82
  %v992 = vunpack.c.l.b16 %v83
  %v993 = vunpack.c.l.b16 %v84
  %v994 = vunpack.c.l.b16 %v85
  %v995 = vunpack.c.l.b16 %v86
  %v996 = vunpack.c.l.b16 %v87
  %v997 = vunpack.c.l.b16 %v88
  %v998 = vunpack.c.l.b16 %v89
  %v999 = vunpack.c.l.b16 %v90
  %v1000 = vunpack.c.l.b16 %v91
  %v1001 = vunpack.c.l.b16 %v92
  %v1002 = vunpack.c.l.b16 %v93
  %v1003 = vunpack.c.l.b16 %v94
  %v1004 = vunpack.c.l.b16 %v95
  %v1005 = vunpack.c.l.b16 %v96
  %v1006 = vunpack.c.l.b16 %v97
  %v1007 = vunpack.c.l.b16 %v98
  %v1008 = vunpack.c.l.b16 %v99
  %v1009 = vunpack.c.l.b16 %v100
  %v1010 = vunpack.c.l.b16 %v101
  %v1011 = vunpack.c.l.b16 %v102
  %v1012 = vunpack.c.l.b16 %v103
  %v1013 = vunpack.c.l.b16 %v104
  %v1014 = vunpack.c.l.b16 %v105
  %v1015 = vunpack.c.l.b16 %v106
  %v1016 = vunpack.c.l.b16 %v107
  %v1017 = vunpack.c.l.b16 %v108
  %v1018 = vunpack.c.l.b16 %v109
  %v1019 = vunpack.c.l.b16 %v110
  %v1020 = vunpack.c.l.b16 %v111
  %v1021 = vunpack.c.l.b16 %v112
  %v1022 = vunpack.c.l.b16 %v113
  %v1023 = vunpack.c.l.b16 %v114
  %v1024 = vunpack.c.l.b16 %v115
  %v1025 = vunpack.c.l.b16 %v116
  %v1026 = vunpack.c.l.b16 %v117
  %v1027 = vunpack.c.l.b16 %v118
  %v1028 = vunpack.c.l.b16 %v119
  %v1029 = vunpack.c.l.b16 %v120
  %v1030 = vunpack.c.l.b16 %v121
  %v1031 = vunpack.c.l.b16 %v122
  %v1032 = vunpack.c.l.b16 %v123
  %v1033 = vunpack.c.l.b16 %v124
  %v1034 = vunpack.c.l.b16 %v125
  %v1035 = vunpack.c.l.b16 %v126
  %v1036 = vunpack.c.l.b16 %v127
  %v1037 = vunpack.c.l.b16 %v128
  %v1038 = vunpack.c.l.b16 %v129
  %v1039 = vunpack.c.l.b16 %v130
  %v1040 = vunpack.c.l.b16 %v131
  %v1041 = vunpack.c.l.b16 %v132
  %v1042 = vunpack.c.l.b16 %v133
  %v1043 = vunpack.c.l.b16 %v134
  %v1044 = vunpack.c.l.b16 %v135
  %v1045 = vunpack.c.l.b16 %v136
  %v1046 = vunpack.c.l.b16 %v137
  %v1047 = vunpack.c.l.b16 %v138
  %v1048 = vunpack.c.l.b16 %v139
  %v1049 = vunpack.c.l.b16 %v140
  %v1050 = vunpack.c.l.b16 %v141
  %v1051 = vunpack.c.l.b16 %v142
  %v1052 = vunpack.c.l.b16 %v143
  %v1053 = vunpack.c.l.b16 %v144
  %v1054 = vunpack.c.l.b16 %v145
  %v1055 = vunpack.c.l.b16 %v146
  %v1056 = vunpack.c.l.b16 %v147
  %v1057 = vunpack.c.l.b16 %v148
  %v1058 = vunpack.c.l.b16 %v149
  %v1059 = vunpack.c.l.b16 %v150
  %v1060 = vunpack.c.l.b16 %v151
  %v1061 = vunpack.c.l.b16 %v152
  %v1062 = vunpack.c.l.b16 %v153
  %v1063 = vunpack.c.l.b16 %v154
  %v1064 = vunpack.c.l.b16 %v155
  %v1065 = vunpack.c.l.b16 %v156
  %v1066 = vunpack.c.l.b16 %v157
  %v1067 = vunpack.c.l.b16 %v158
  %v1068 = vunpack.c.l.b16 %v159
  %v1069 = vunpack.c.l.b16 %v160
  %v1070 = vunpack.c.l.b16 %v161
  %v1071 = vunpack.c.l.b16 %v162
  %v1072 = vunpack.c.l.b16 %v163
  %v1073 = vunpack.c.l.b16 %v164
  %v1074 = vunpack.c.l.b16 %v165
  %v1075 = vunpack.c.l.b16 %v166
  %v1076 = vunpack.c.l.b16 %v167
  %v1077 = vunpack.c.l.b16 %v168
  %v1078 = vunpack.c.l.b16 %v169
  %v1079 = vunpack.c.l.b16 %v170
  %v1080 = vunpack.c.l.b16 %v171
  %v1081 = vunpack.c.l.b16 %v172
  %v1082 = vunpack.c.l.b16 %v173
  %v1083 = vunpack.c.l.b16 %v174
  %v1084 = vunpack.c.l.b16 %v175
  %v1085 = vunpack.c.l.b16 %v176
  %v1086 = vunpack.c.l.b16 %v177
  %v1087 = vunpack.c.l.b16 %v178
  %v1088 = vunpack.c.l.b16 %v179
  %v1089 = vunpack.c.l.b16 %v180
  %v1090 = vunpack.c.l.b16 %v181
  %v1091 = vunpack.c.l.b16 %v182
  %v1092 = vunpack.c.l.b16 %v183
  %v1093 = vunpack.c.l.b16 %v184
  %v1094 = vunpack.c.l.b16 %v185
  %v1095 = vunpack.c.l.b16 %v186
  %v1096 = vunpack.c.l.b16 %v187
  %v1097 = vunpack.c.l.b16 %v188
  %v1098 = vunpack.c.l.b16 %v189
  %v1099 = vunpack.c.l.b16 %v190
  %v1100 = vunpack.c.l.b16 %v191
  %v1101 = vunpack.c.l.b16 %v192
  %v1102 = vunpack.c.l.b16 %v193
  %v1103 = vunpack.c.l.b16 %v194
  %v1104 = vunpack.c.l.b16 %v195
  %v1105 = vunpack.c.l.b16 %v196
  %v1106 = vunpack.c.l.b16 %v197
  %v1107 = vunpack.c.l.b16 %v198
  %v1108 = vunpack.c.l.b16 %v199
  %v1109 = vunpack.c.l.b16 %v200
  %v1110 = vunpack.c.l.b16 %v201
  %v1111 = vunpack.c.l.b16 %v202
  %v1112 = vunpack.c.l.b16 %v203
  %v1113 = vunpack.c.l.b16 %v204
  %v1114 = vunpack.c.l.b16 %v205
  %v1115 = vunpack.c.l.b16 %v206
  %v1116 = vunpack.c.l.b16 %v207
  %v1117 = vunpack.c.l.b16 %v208
  %v1118 = vunpack.c.l.b16 %v209
  %v1119 = vunpack.c.l.b16 %v210
  %v1120 = vunpack.c.l.b16 %v211
  %v1121 = vunpack.c.l.b16 %v212
  %v1122 = vunpack.c.l.b16 %v213
  %v1123 = vunpack.c.l.b16 %v214
  %v1124 = vunpack.c.l.b16 %v215
  %v1125 = vunpack.c.l.b16 %v216
  %v1126 = vunpack.c.l.b16 %v217
  %v1127 = vunpack.c.l.b16 %v218
  %v1128 = vunpack.c.l.b16 %v219
  %v1129 = vunpack.c.l.b16 %v220
  %v1130 = vunpack.c.l.b16 %v221
  %v1131 = vunpack.c.l.b16 %v222
  %v1132 = vunpack.c.l.b16 %v223
  %v1133 = vunpack.c.l.b16 %v224
  %v1134 = vunpack.c.l.b16 %v225
  %v1135 = vunpack.c.l.b16 %v226
  %v1136 = vunpack.c.l.b16 %v227
  %v1137 = vunpack.c.l.b16 %v228
  %v1138 = vunpack.c.l.b16 %v229
  %v1139 = vunpack.c.l.b16 %v230
  %v1140 = vunpack.c.l.b16 %v231
  %v1141 = vunpack.c.l.b16 %v232
  %v1142 = vunpack.c.l.b16 %v233
  %v1143 = vunpack.c.l.b16 %v234
  %v1144 = vunpack.c.l.b16 %v235
  %v1145 = vunpack.c.l.b16 %v236
  %v1146 = vunpack.c.l.b16 %v237
  %v1147 = vunpack.c.l.b16 %v238
  %v1148 = vunpack.c.l.b16 %v239
  %v1149 = vunpack.c.l.b16 %v240
  %v1150 = vunpack.c.l.b16 %v241
  %v1151 = vunpack.c.l.b16 %v242
  %v1152 = vunpack.c.l.b16 %v243
  %v1153 = vunpack.c.l.b16 %v244
  %v1154 = vunpack.c.l.b16 %v245
  %v1155 = vunpack.c.l.b16 %v246
  %v1156 = vunpack.c.l.b16 %v247
  %v1157 = vunpack.c.l.b16 %v248
  %v1158 = vunpack.c.l.b16 %v249
  %v1159 = vunpack.c.l.b16 %v250
  %v1160 = vunpack.c.l.b16 %v251
  %v1161 = vunpack.c.l.b16 %v252
  %v1162 = vunpack.c.l.b16 %v253
  %v1163 = vunpack.c.l.b16 %v254
  %v1164 = vunpack.c.l.b16 %v255
  %v1165 = vunpack.c.l.b16 %v256
  %v1166 = vunpack.c.l.b16 %v257
  %v1167 = vunpack.c.l.b16 %v258
  %v1168 = vunpack.c.l.b16 %v259
  %v1169 = vunpack.c.l.b16 %v260
  %v1170 = vunpack.c.l.b16 %v261
  %v1171 = vunpack.c.l.b16 %v262
  %v1172 = vunpack.c.l.b16 %v263
  %v1173 = vunpack.c.l.b16 %v264
  %v1174 = vunpack.c.l.b16 %v265
  %v1175 = vunpack.c.l.b16 %v266
  %v1176 = vunpack.c.l.b16 %v267
  %v1177 = vunpack.c.l.b16 %v268
  %v1178 = vunpack.c.l.b16 %v269
  %v1179 = vunpack.c.l.b16 %v270
  %v1180 = vunpack.c.l.b16 %v271
  %v1181 = vunpack.c.l.b16 %v272
  %v1182 = vunpack.c.l.b16 %v273
  %v1183 = vunpack.c.l.b16 %v274
  %v1184 = vunpack.c.l.b16 %v275
  %v1185 = vunpack.c.l.b16 %v276
  %v1186 = vunpack.c.l.b16 %v277
  %v1187 = vunpack.c.l.b16 %v278
  %v1188 = vunpack.c.l.b16 %v279
  %v1189 = vunpack.c.l.b16 %v280
  %v1190 = vunpack.c.l.b16 %v281
  %v1191 = vunpack.c.l.b16 %v282
  %v1192 = vunpack.c.l.b16 %v283
  %v1193 = vunpack.c.l.b16 %v284
  %v1194 = vunpack.c.l.b16 %v285
  %v1195 = vunpack.c.l.b16 %v286
  %v1196 = vunpack.c.l.b16 %v287
  %v1197 = vunpack.c.l.b16 %v288
  %v1198 = vunpack.c.l.b16 %v289
  %v1199 = vunpack.c.l.b16 %v290
  %v1200 = vunpack.c.l.b16 %v291
  %v1201 = vunpack.c.l.b16 %v292
  %v1202 = vunpack.c.l.b16 %v293
  %v1203 = vunpack.c.l.b16 %v294
  %v1204 = vunpack.c.l.b16 %v295
  %v1205 = vunpack.c.l.b16 %v296
  %v1206 = vunpack.c.l.b16 %v297
  %v1207 = vunpack.c.l.b16 %v298
  %v1208 = vunpack.c.l.b16 %v299
  %v1209 = vunpack.c.l.b16 %v300
  %v1210 = vunpack.c.l.b16 %v301
  %v1211 = vunpack.c.l.b16 %v302
  %v1212 = vunpack.c.l.b16 %v303
  %v1213 = vunpack.c.l.b16 %v304
  %v1214 = vunpack.c.l.b16 %v305
  %v1215 = vunpack.c.l.b16 %v306
  %v1216 = vunpack.c.l.b16 %v307
  %v1217 = vunpack.c.l.b16 %v308
  %v1218 = vunpack.c.l.b16 %v309
  %v1219 = vunpack.c.l.b16 %v310
  %v1220 = vunpack.c.l.b16 %v311
  %v1221 = vunpack.c.l.b16 %v312
  %v1222 = vunpack.c.l.b16 %v313
  %v1223 = vunpack.c.l.b16 %v314
  %v1224 = vunpack.c.l.b16 %v315
  %v1225 = vunpack.c.l.b16 %v316
  %v1226 = vunpack.c.l.b16 %v317
  %v1227 = vunpack.c.l.b16 %v318
  %v1228 = vunpack.c.l.b16 %v319
  %v1229 = vunpack.c.l.b16 %v320
  %v1230 = vunpack.c.l.b16 %v321
  %v1231 = vunpack.c.l.b16 %v322
  %v1232 = vunpack.c.l.b16 %v323
  %v1233 = vunpack.c.l.b16 %v324
  %v1234 = vunpack.c.l.b16 %v325
  %v1235 = vunpack.c.l.b16 %v326
  %v1236 = vunpack.c.l.b16 %v327
  %v1237 = vunpack.c.l.b16 %v328
  %v1238 = vunpack.c.l.b16 %v329
  %v1239 = vunpack.c.l.b16 %v330
  %v1240 = vunpack.c.l.b16 %v331
  %v1241 = vunpack.c.l.b16 %v332
  %v1242 = vunpack.c.l.b16 %v333
  %v1243 = vunpack.c.l.b16 %v334
  %v1244 = vunpack.c.l.b16 %v335
  %v1245 = vunpack.c.l.b16 %v336
  %v1246 = vunpack.c.l.b16 %v337
  %v1247 = vunpack.c.l.b16 %v338
  %v1248 = vunpack.c.l.b16 %v339
  %v1249 = vunpack.c.l.b16 %v340
  %v1250 = vunpack.c.l.b16 %v341
  %v1251 = vunpack.c.l.b16 %v342
  %v1252 = vunpack.c.l.b16 %v343
  %v1253 = vunpack.c.l.b16 %v344
  %v1254 = vunpack.c.l.b16 %v345
  %v1255 = vunpack.c.l.b16 %v346
  %v1256 = vunpack.c.l.b16 %v347
  %v1257 = vunpack.c.l.b16 %v348
  %v1258 = vunpack.c.l.b16 %v349
  %v1259 = vunpack.c.l.b16 %v350
  %v1260 = vunpack.c.l.b16 %v351
  %v1261 = vunpack.c.l.b16 %v352
  %v1262 = vunpack.c.l.b16 %v353
  %v1263 = vunpack.c.l.b16 %v354
  %v1264 = vunpack.c.l.b16 %v355
  %v1265 = vunpack.c.l.b16 %v356
  %v1266 = vunpack.c.l.b16 %v357
  %v1267 = vunpack.c.l.b16 %v358
  %v1268 = vunpack.c.l.b16 %v359
  %v1269 = vunpack.c.l.b16 %v360
  %v1270 = vunpack.c.l.b16 %v361
  %v1271 = vunpack.c.l.b16 %v362
  %v1272 = vunpack.c.l.b16 %v363
  %v1273 = vunpack.c.l.b16 %v364
  %v1274 = vunpack.c.l.b16 %v365
  %v1275 = vunpack.c.l.b16 %v366
  %v1276 = vunpack.c.l.b16 %v367
  %v1277 = vunpack.c.l.b16 %v368
  %v1278 = vunpack.c.l.b16 %v369
  %v1279 = vunpack.c.l.b16 %v370
  %v1280 = vunpack.c.l.b16 %v371
  %v1281 = vunpack.c.l.b16 %v372
  %v1282 = vunpack.c.l.b16 %v373
  %v1283 = vunpack.c.l.b16 %v374
  %v1284 = vunpack.c.l.b16 %v375
  %v1285 = vunpack.c.l.b16 %v376
  %v1286 = vunpack.c.l.b16 %v377
  %v1287 = vunpack.c.l.b16 %v378
  %v1288 = vunpack.c.l.b16 %v379
  %v1289 = vunpack.c.l.b16 %v380
  %v1290 = vunpack.c.l.b16 %v381
  %v1291 = vunpack.c.l.b16 %v382
  %v1292 = vunpack.c.l.b16 %v383
  %v1293 = vunpack.c.l.b16 %v384
  %v1294 = vunpack.c.l.b16 %v385
  %v1295 = vunpack.c.l.b16 %v386
  %v1296 = vunpack.c.l.b16 %v387
  %v1297 = vunpack.c.l.b16 %v388
  %v1298 = vunpack.c.l.b16 %v389
  %v1299 = vunpack.c.l.b16 %v390
  %v1300 = vunpack.c.l.b16 %v391
  %v1301 = vunpack.c.l.b16 %v392
  %v1302 = vunpack.c.l.b16 %v393
  %v1303 = vunpack.c.l.b16 %v394
  %v1304 = vunpack.c.l.b16 %v395
  %v1305 = vunpack.c.l.b16 %v396
  %v1306 = vunpack.c.l.b16 %v397
  %v1307 = vunpack.c.l.b16 %v398
  %v1308 = vunpack.c.l.b16 %v399
  %v1309 = vunpack.c.l.b16 %v400
  %v1310 = vunpack.c.l.b16 %v401
  %v1311 = vunpack.c.l.b16 %v402
  %v1312 = vunpack.c.l.b16 %v403
  %v1313 = vunpack.c.l.b16 %v404
  %v1314 = vunpack.c.l.b16 %v405
  %v1315 = vunpack.c.l.b16 %v406
  %v1316 = vunpack.c.l.b16 %v407
  %v1317 = vunpack.c.l.b16 %v408
  %v1318 = vunpack.c.l.b16 %v409
  %v1319 = vunpack.c.l.b16 %v410
  %v1320 = vunpack.c.l.b16 %v411
  %v1321 = vunpack.c.l.b16 %v412
  %v1322 = vunpack.c.l.b16 %v413
  %v1323 = vunpack.c.l.b16 %v414
  %v1324 = vunpack.c.l.b16 %v415
  %v1325 = vunpack.c.l.b16 %v416
  %v1326 = vunpack.c.l.b16 %v417
  %v1327 = vunpack.c.l.b16 %v418
  %v1328 = vunpack.c.l.b16 %v419
  %v1329 = vunpack.c.l.b16 %v420
  %v1330 = vunpack.c.l.b16 %v421
  %v1331 = vunpack.c.l.b16 %v422
  %v1332 = vunpack.c.l.b16 %v423
  %v1333 = vunpack.c.l.b16 %v424
  %v1334 = vunpack.c.l.b16 %v425
  %v1335 = vunpack.c.l.b16 %v426
  %v1336 = vunpack.c.l.b16 %v427
  %v1337 = vunpack.c.l.b16 %v428
  %v1338 = vunpack.c.l.b16 %v429
  %v1339 = vunpack.c.l.b16 %v430
  %v1340 = vunpack.c.l.b16 %v431
  %v1341 = vunpack.c.l.b16 %v432
  %v1342 = vunpack.c.l.b16 %v433
  %v1343 = vunpack.c.l.b16 %v434
  %v1344 = vunpack.c.l.b16 %v435
  %v1345 = vpack.c.b16 %v954, %v953
  %v1346 = vpack.c.b16 %v956, %v955
  %v1347 = vpack.c.b16 %v958, %v957
  %v1348 = vpack.c.b16 %v960, %v959
  %v1349 = vpack.c.b16 %v962, %v961
  %v1350 = vpack.c.b16 %v964, %v963
  %v1351 = vpack.c.b16 %v966, %v965
  %v1352 = vpack.c.b16 %v968, %v967
  %v1353 = vpack.c.b16 %v970, %v969
  %v1354 = vpack.c.b16 %v972, %v971
  %v1355 = vpack.c.b16 %v974, %v973
  %v1356 = vpack.c.b16 %v976, %v975
  %v1357 = vpack.c.b16 %v978, %v977
  %v1358 = vpack.c.b16 %v980, %v979
  %v1359 = vpack.c.b16 %v982, %v981
  %v1360 = vpack.c.b16 %v984, %v983
  %v1361 = vpack.c.b16 %v986, %v985
  %v1362 = vpack.c.b16 %v988, %v987
  %v1363 = vpack.c.b16 %v990, %v989
  %v1364 = vpack.c.b16 %v992, %v991
  %v1365 = vpack.c.b16 %v994, %v993
  %v1366 = vpack.c.b16 %v996, %v995
  %v1367 = vpack.c.b16 %v998, %v997
  %v1368 = vpack.c.b16 %v1000, %v999
  %v1369 = vpack.c.b16 %v1002, %v1001
  %v1370 = vpack.c.b16 %v1004, %v1003
  %v1371 = vpack.c.b16 %v1006, %v1005
  %v1372 = vpack.c.b16 %v1008, %v1007
  %v1373 = vpack.c.b16 %v1010, %v1009
  %v1374 = vpack.c.b16 %v1012, %v1011
  %v1375 = vpack.c.b16 %v1014, %v1013
  %v1376 = vpack.c.b16 %v1016, %v1015
  %v1377 = vpack.c.b16 %v1018, %v1017
  %v1378 = vpack.c.b16 %v1020, %v1019
  %v1379 = vpack.c.b16 %v1022, %v1021
  %v1380 = vpack.c.b16 %v1024, %v1023
  %v1381 = vpack.c.b16 %v1026, %v1025
  %v1382 = vpack.c.b16 %v1028, %v1027
  %v1383 = vpack.c.b16 %v1030, %v1029
  %v1384 = vpack.c.b16 %v1032, %v1031
  %v1385 = vpack.c.b16 %v1034, %v1033
  %v1386 = vpack.c.b16 %v1036, %v1035
  %v1387 = vpack.c.b16 %v1038, %v1037
  %v1388 = vpack.c.b16 %v1040, %v1039
  %v1389 = vpack.c.b16 %v1042, %v1041
  %v1390 = vpack.c.b16 %v1044, %v1043
  %v1391 = vpack.c.b16 %v1046, %v1045
  %v1392 = vpack.c.b16 %v1048, %v1047
  %v1393 = vpack.c.b16 %v1050, %v1049
  %v1394 = vpack.c.b16 %v1052, %v1051
  %v1395 = vpack.c.b16 %v1054, %v1053
  %v1396 = vpack.c.b16 %v1056, %v1055
  %v1397 = vpack.c.b16 %v1058, %v1057
  %v1398 = vpack.c.b16 %v1060, %v1059
  %v1399 = vpack.c.b16 %v1062, %v1061
  %v1400 = vpack.c.b16 %v1064, %v1063
  %v1401 = vpack.c.b16 %v1066, %v1065
  %v1402 = vpack.c.b16 %v1068, %v1067
  %v1403 = vpack.c.b16 %v1070, %v1069
  %v1404 = vpack.c.b16 %v1072, %v1071
  %v1405 = vpack.c.b16 %v1074, %v1073
  %v1406 = vpack.c.b16 %v1076, %v1075
  %v1407 = vpack.c.b16 %v1078, %v1077
  %v1408 = vpack.c.b16 %v1080, %v1079
  %v1409 = vpack.c.b16 %v1082, %v1081
  %v1410 = vpack.c.b16 %v1084, %v1083
  %v1411 = vpack.c.b16 %v1086, %v1085
  %v1412 = vpack.c.b16 %v1088, %v1087
  %v1413 = vpack.c.b16 %v1090, %v1089
  %v1414 = vpack.c.b16 %v1092, %v1091
  %v1415 = vpack.c.b16 %v1094, %v1093
  %v1416 = vpack.c.b16 %v1096, %v1095
  %v1417 = vpack.c.b16 %v1098, %v1097
  %v1418 = vpack.c.b16 %v1100, %v1099
  %v1419 = vpack.c.b16 %v1102, %v1101
  %v1420 = vpack.c.b16 %v1104, %v1103
  %v1421 = vpack.c.b16 %v1106, %v1105
  %v1422 = vpack.c.b16 %v1108, %v1107
  %v1423 = vpack.c.b16 %v1110, %v1109
  %v1424 = vpack.c.b16 %v1112, %v1111
  %v1425 = vpack.c.b16 %v1114, %v1113
  %v1426 = vpack.c.b16 %v1116, %v1115
  %v1427 = vpack.c.b16 %v1118, %v1117
  %v1428 = vpack.c.b16 %v1120, %v1119
  %v1429 = vpack.c.b16 %v1122, %v1121
  %v1430 = vpack.c.b16 %v1124, %v1123
  %v1431 = vpack.c.b16 %v1126, %v1125
  %v1432 = vpack.c.b16 %v1128, %v1127
  %v1433 = vpack.c.b16 %v1130, %v1129
  %v1434 = vpack.c.b16 %v1132, %v1131
  %v1435 = vpack.c.b16 %v1134, %v1133
  %v1436 = vpack.c.b16 %v1136, %v1135
  %v1437 = vpack.c.b16 %v1138, %v1137
  %v1438 = vpack.c.b16 %v1140, %v1139
  %v1439 = vpack.c.b16 %v1142, %v1141
  %v1440 = vpack.c.b16 %v1144, %v1143
  %v1441 = vpack.c.b16 %v1146, %v1145
  %v1442 = vpack.c.b16 %v1148, %v1147
  %v1443 = vpack.c.b16 %v1150, %v1149
  %v1444 = vpack.c.b16 %v1152, %v1151
  %v1445 = vpack.c.b16 %v1154, %v1153
  %v1446 = vpack.c.b16 %v1156, %v1155
  %v1447 = vpack.c.b16 %v1158, %v1157
  %v1448 = vpack.c.b16 %v1160, %v1159
  %v1449 = vpack.c.b16 %v1162, %v1161
  %v1450 = vpack.c.b16 %v1164, %v1163
  %v1451 = vpack.c.b16 %v1166, %v1165
  %v1452 = vpack.c.b16 %v1168, %v1167
  %v1453 = vpack.c.b16 %v1170, %v1169
  %v1454 = vpack.c.b16 %v1172, %v1171
  %v1455 = vpack.c.b16 %v1174, %v1173
  %v1456 = vpack.c.b16 %v1176, %v1175
  %v1457 = vpack.c.b16 %v1178, %v1177
  %v1458 = vpack.c.b16 %v1180, %v1179
  %v1459 = vpack.c.b16 %v1182, %v1181
  %v1460 = vpack.c.b16 %v1184, %v1183
  %v1461 = vpack.c.b16 %v1186, %v1185
  %v1462 = vpack.c.b16 %v1188, %v1187
  %v1463 = vpack.c.b16 %v1190, %v1189
  %v1464 = vpack.c.b16 %v1192, %v1191
  %v1465 = vpack.c.b16 %v1194, %v1193
  %v1466 = vpack.c.b16 %v1196, %v1195
  %v1467 = vpack.c.b16 %v1198, %v1197
  %v1468 = vpack.c.b16 %v1200, %v1199
  %v1469 = vpack.c.b16 %v1202, %v1201
  %v1470 = vpack.c.b16 %v1204, %v1203
  %v1471 = vpack.c.b16 %v1206, %v1205
  %v1472 = vpack.c.b16 %v1208, %v1207
  %v1473 = vpack.c.b16 %v1210, %v1209
  %v1474 = vpack.c.b16 %v1212, %v1211
  %v1475 = vpack.c.b16 %v1214, %v1213
  %v1476 = vpack.c.b16 %v1216, %v1215
  %v1477 = vpack.c.b16 %v1218, %v1217
  %v1478 = vpack.c.b16 %v1220, %v1219
  %v1479 = vpack.c.b16 %v1222, %v1221
  %v1480 = vpack.c.b16 %v1224, %v1223
  %v1481 = vpack.c.b16 %v1226, %v1225
  %v1482 = vpack.c.b16 %v1228, %v1227
  %v1483 = vpack.c.b16 %v1230, %v1229
  %v1484 = vpack.c.b16 %v1232, %v1231
  %v1485 = vpack.c.b16 %v1234, %v1233
  %v1486 = vpack.c.b16 %v1236, %v1235
  %v1487 = vpack.c.b16 %v1238, %v1237
  %v1488 = vpack.c.b16 %v1240, %v1239
  %v1489 = vpack.c.b16 %v1242, %v1241
  %v1490 = vpack.c.b16 %v1244, %v1243
  %v1491 = vpack.c.b16 %v1246, %v1245
  %v1492 = vpack.c.b16 %v1248, %v1247
  %v1493 = vpack.c.b16 %v1250, %v1249
  %v1494 = vpack.c.b16 %v1252, %v1251
  %v1495 = vpack.c.b16 %v1254, %v1253
  %v1496 = vpack.c.b16 %v1256, %v1255
  %v1497 = vpack.c.b16 %v1258, %v1257
  %v1498 = vpack.c.b16 %v1260, %v1259
  %v1499 = vpack.c.b16 %v1262, %v1261
  %v1500 = vpack.c.b16 %v1264, %v1263
  %v1501 = vpack.c.b16 %v1266, %v1265
  %v1502 = vpack.c.b16 %v1268, %v1267
  %v1503 = vpack.c.b16 %v1270, %v1269
  %v1504 = vpack.c.b16 %v1272, %v1271
  %v1505 = vpack.c.b16 %v1274, %v1273
  %v1506 = vpack.c.b16 %v1276, %v1275
  %v1507 = vpack.c.b16 %v1278, %v1277
  %v1508 = vpack.c.b16 %v1280, %v1279
  %v1509 = vpack.c.b16 %v1282, %v1281
  %v1510 = vpack.c.b16 %v1284, %v1283
  %v1511 = vpack.c.b16 %v1286, %v1285
  %v1512 = vpack.c.b16 %v1288, %v1287
  %v1513 = vpack.c.b16 %v1290, %v1289
  %v1514 = vpack.c.b16 %v1292, %v1291
  %v1515 = vpack.c.b16 %v1294, %v1293
  %v1516 = vpack.c.b16 %v1296, %v1295
  %v1517 = vpack.c.b16 %v1298, %v1297
  %v1518 = vpack.c.b16 %v1300, %v1299
  %v1519 = vpack.c.b16 %v1302, %v1301
  %v1520 = vpack.c.b16 %v1304, %v1303
  %v1521 = vpack.c.b16 %v1306, %v1305
  %v1522 = vpack.c.b16 %v1308, %v1307
  %v1523 = vpack.c.b16 %v1310, %v1309
  %v1524 = vpack.c.b16 %v1312, %v1311
  %v1525 = vpack.c.b16 %v1314, %v1313
  %v1526 = vpack.c.b16 %v1316, %v1315
  %v1527 = vpack.c.b16 %v1318, %v1317
  %v1528 = vpack.c.b16 %v1320, %v1319
  %v1529 = vpack.c.b16 %v1322, %v1321
  %v1530 = vpack.c.b16 %v1324, %v1323
  %v1531 = vpack.c.b16 %v1326, %v1325
  %v1532 = vpack.c.b16 %v1328, %v1327
  %v1533 = vpack.c.b16 %v1330, %v1329
  %v1534 = vpack.c.b16 %v1332, %v1331
  %v1535 = vpack.c.b16 %v1334, %v1333
  %v1536 = vpack.c.b16 %v1336, %v1335
  %v1537 = vpack.c.b16 %v1338, %v1337
  %v1538 = vpack.c.b16 %v1340, %v1339
  %v1539 = vpack.c.b16 %v1342, %v1341
  %v1540 = vpack.c.b16 %v1344, %v1343
  %vm1737 = vcmask 523264
  %v1739 = vsel %vm1737, %v536, 0
  %1741 = vmatprep.subr.bf16.mxu0 0
  %1742 = vmatpush1.bf16.msra.mxu0 %v1352
  %1743 = vmatprep.subr.bf16.mxu0 0
  %1744 = vmatpush1.bf16.msra.mxu0 %v1351
  %1745 = vmatprep.subr.bf16.mxu0 0
  %1746 = vmatpush1.bf16.msra.mxu0 %v1350
  %1747 = vmatprep.subr.bf16.mxu0 0
  %1748 = vmatpush1.bf16.msra.mxu0 %v1349
  %1749 = vmatprep.subr.bf16.mxu0 0
  %1750 = vmatpush1.bf16.msra.mxu0 %v1348
  %1751 = vmatprep.subr.bf16.mxu0 0
  %1752 = vmatpush1.bf16.msra.mxu0 %v1347
  %1753 = vmatprep.subr.bf16.mxu0 0
  %1754 = vmatpush1.bf16.msra.mxu0 %v1346
  %1755 = vmatprep.subr.bf16.mxu0 0
  %1756 = vmatpush1.bf16.msra.mxu0 %v1345
  %1757 = vmatprep.subr.bf16.mxu0 0
  %1758 = vmatpush2.bf16.msra.mxu0 %v1360
  %1759 = vmatprep.subr.bf16.mxu0 0
  %1760 = vmatpush2.bf16.msra.mxu0 %v1359
  %1761 = vmatprep.subr.bf16.mxu0 0
  %1762 = vmatpush2.bf16.msra.mxu0 %v1358
  %1763 = vmatprep.subr.bf16.mxu0 0
  %1764 = vmatpush2.bf16.msra.mxu0 %v1357
  %1765 = vmatprep.subr.bf16.mxu0 0
  %1766 = vmatpush2.bf16.msra.mxu0 %v1356
  %1767 = vmatprep.subr.bf16.mxu0 0
  %1768 = vmatpush2.bf16.msra.mxu0 %v1355
  %1769 = vmatprep.subr.bf16.mxu0 0
  %1770 = vmatpush2.bf16.msra.mxu0 %v1354
  %1771 = vmatprep.subr.bf16.mxu0 0
  %1772 = vmatpush2.bf16.msra.mxu0 %v1353
  %1773 = vmatprep.mubr.bf16.mxu0 %v513
  %1774 = vmatmul.mubr.bf16.gmra.mxu0 %v512
  %v1775 = vpop.f32.mrf.mxu0
  %v1776 = vadd.f32 0.0, %v1775
  %v1777 = vpop.f32.mrf.mxu0
  %v1778 = vpop.f32.mrf.mxu0
  %v1779 = vadd.f32 0.0, %v1778
  %v1780 = vpop.f32.mrf.mxu0
  %1781 = vdwg.mxu0
  %1782 = vmatprep.subr.bf16.mxu0 0
  %1783 = vmatpush1.bf16.msra.mxu0 %v1368
  %1784 = vmatprep.subr.bf16.mxu0 0
  %1785 = vmatpush1.bf16.msra.mxu0 %v1367
  %1786 = vmatprep.subr.bf16.mxu0 0
  %1787 = vmatpush1.bf16.msra.mxu0 %v1366
  %1788 = vmatprep.subr.bf16.mxu0 0
  %1789 = vmatpush1.bf16.msra.mxu0 %v1365
  %1790 = vmatprep.subr.bf16.mxu0 0
  %1791 = vmatpush1.bf16.msra.mxu0 %v1364
  %1792 = vmatprep.subr.bf16.mxu0 0
  %1793 = vmatpush1.bf16.msra.mxu0 %v1363
  %1794 = vmatprep.subr.bf16.mxu0 0
  %1795 = vmatpush1.bf16.msra.mxu0 %v1362
  %1796 = vmatprep.subr.bf16.mxu0 0
  %1797 = vmatpush1.bf16.msra.mxu0 %v1361
  %1798 = vmatprep.subr.bf16.mxu0 0
  %1799 = vmatpush2.bf16.msra.mxu0 %v1376
  %1800 = vmatprep.subr.bf16.mxu0 0
  %1801 = vmatpush2.bf16.msra.mxu0 %v1375
  %1802 = vmatprep.subr.bf16.mxu0 0
  %1803 = vmatpush2.bf16.msra.mxu0 %v1374
  %1804 = vmatprep.subr.bf16.mxu0 0
  %1805 = vmatpush2.bf16.msra.mxu0 %v1373
  %1806 = vmatprep.subr.bf16.mxu0 0
  %1807 = vmatpush2.bf16.msra.mxu0 %v1372
  %1808 = vmatprep.subr.bf16.mxu0 0
  %1809 = vmatpush2.bf16.msra.mxu0 %v1371
  %1810 = vmatprep.subr.bf16.mxu0 0
  %1811 = vmatpush2.bf16.msra.mxu0 %v1370
  %1812 = vmatprep.subr.bf16.mxu0 0
  %1813 = vmatpush2.bf16.msra.mxu0 %v1369
  %1814 = vmatprep.mubr.bf16.mxu0 %v515
  %1815 = vmatmul.mubr.bf16.gmra.mxu0 %v514
  %v1816 = vpop.f32.mrf.mxu0
  %v1817 = vadd.f32 %v1776, %v1816
  %v1818 = vpop.f32.mrf.mxu0
  %v1819 = vpop.f32.mrf.mxu0
  %v1820 = vadd.f32 %v1779, %v1819
  %v1821 = vpop.f32.mrf.mxu0
  %1822 = vdwg.mxu0
  %1823 = vmatprep.subr.bf16.mxu0 0
  %1824 = vmatpush1.bf16.msra.mxu0 %v1384
  %1825 = vmatprep.subr.bf16.mxu0 0
  %1826 = vmatpush1.bf16.msra.mxu0 %v1383
  %1827 = vmatprep.subr.bf16.mxu0 0
  %1828 = vmatpush1.bf16.msra.mxu0 %v1382
  %1829 = vmatprep.subr.bf16.mxu0 0
  %1830 = vmatpush1.bf16.msra.mxu0 %v1381
  %1831 = vmatprep.subr.bf16.mxu0 0
  %1832 = vmatpush1.bf16.msra.mxu0 %v1380
  %1833 = vmatprep.subr.bf16.mxu0 0
  %1834 = vmatpush1.bf16.msra.mxu0 %v1379
  %1835 = vmatprep.subr.bf16.mxu0 0
  %1836 = vmatpush1.bf16.msra.mxu0 %v1378
  %1837 = vmatprep.subr.bf16.mxu0 0
  %1838 = vmatpush1.bf16.msra.mxu0 %v1377
  %1839 = vmatprep.subr.bf16.mxu0 0
  %1840 = vmatpush2.bf16.msra.mxu0 %v1392
  %1841 = vmatprep.subr.bf16.mxu0 0
  %1842 = vmatpush2.bf16.msra.mxu0 %v1391
  %1843 = vmatprep.subr.bf16.mxu0 0
  %1844 = vmatpush2.bf16.msra.mxu0 %v1390
  %1845 = vmatprep.subr.bf16.mxu0 0
  %1846 = vmatpush2.bf16.msra.mxu0 %v1389
  %1847 = vmatprep.subr.bf16.mxu0 0
  %1848 = vmatpush2.bf16.msra.mxu0 %v1388
  %1849 = vmatprep.subr.bf16.mxu0 0
  %1850 = vmatpush2.bf16.msra.mxu0 %v1387
  %1851 = vmatprep.subr.bf16.mxu0 0
  %1852 = vmatpush2.bf16.msra.mxu0 %v1386
  %1853 = vmatprep.subr.bf16.mxu0 0
  %1854 = vmatpush2.bf16.msra.mxu0 %v1385
  %1855 = vmatprep.mubr.bf16.mxu0 %v517
  %1856 = vmatmul.mubr.bf16.gmra.mxu0 %v516
  %v1857 = vpop.f32.mrf.mxu0
  %v1858 = vadd.f32 %v1817, %v1857
  %v1859 = vpop.f32.mrf.mxu0
  %v1860 = vpop.f32.mrf.mxu0
  %v1861 = vadd.f32 %v1820, %v1860
  %v1862 = vpop.f32.mrf.mxu0
  %1863 = vdwg.mxu0
  %1864 = vmatprep.subr.bf16.mxu0 0
  %1865 = vmatpush1.bf16.msra.mxu0 %v1400
  %1866 = vmatprep.subr.bf16.mxu0 0
  %1867 = vmatpush1.bf16.msra.mxu0 %v1399
  %1868 = vmatprep.subr.bf16.mxu0 0
  %1869 = vmatpush1.bf16.msra.mxu0 %v1398
  %1870 = vmatprep.subr.bf16.mxu0 0
  %1871 = vmatpush1.bf16.msra.mxu0 %v1397
  %1872 = vmatprep.subr.bf16.mxu0 0
  %1873 = vmatpush1.bf16.msra.mxu0 %v1396
  %1874 = vmatprep.subr.bf16.mxu0 0
  %1875 = vmatpush1.bf16.msra.mxu0 %v1395
  %1876 = vmatprep.subr.bf16.mxu0 0
  %1877 = vmatpush1.bf16.msra.mxu0 %v1394
  %1878 = vmatprep.subr.bf16.mxu0 0
  %1879 = vmatpush1.bf16.msra.mxu0 %v1393
  %1880 = vmatprep.subr.bf16.mxu0 0
  %1881 = vmatpush2.bf16.msra.mxu0 %v1408
  %1882 = vmatprep.subr.bf16.mxu0 0
  %1883 = vmatpush2.bf16.msra.mxu0 %v1407
  %1884 = vmatprep.subr.bf16.mxu0 0
  %1885 = vmatpush2.bf16.msra.mxu0 %v1406
  %1886 = vmatprep.subr.bf16.mxu0 0
  %1887 = vmatpush2.bf16.msra.mxu0 %v1405
  %1888 = vmatprep.subr.bf16.mxu0 0
  %1889 = vmatpush2.bf16.msra.mxu0 %v1404
  %1890 = vmatprep.subr.bf16.mxu0 0
  %1891 = vmatpush2.bf16.msra.mxu0 %v1403
  %1892 = vmatprep.subr.bf16.mxu0 0
  %1893 = vmatpush2.bf16.msra.mxu0 %v1402
  %1894 = vmatprep.subr.bf16.mxu0 0
  %1895 = vmatpush2.bf16.msra.mxu0 %v1401
  %1896 = vmatprep.mubr.bf16.mxu0 %v519
  %1897 = vmatmul.mubr.bf16.gmra.mxu0 %v518
  %v1898 = vpop.f32.mrf.mxu0
  %v1899 = vadd.f32 %v1858, %v1898
  %v1900 = vpop.f32.mrf.mxu0
  %v1901 = vpop.f32.mrf.mxu0
  %v1902 = vadd.f32 %v1861, %v1901
  %v1903 = vpop.f32.mrf.mxu0
  %1904 = vdwg.mxu0
  %1905 = vmatprep.subr.bf16.mxu0 0
  %1906 = vmatpush1.bf16.msra.mxu0 %v1416
  %1907 = vmatprep.subr.bf16.mxu0 0
  %1908 = vmatpush1.bf16.msra.mxu0 %v1415
  %1909 = vmatprep.subr.bf16.mxu0 0
  %1910 = vmatpush1.bf16.msra.mxu0 %v1414
  %1911 = vmatprep.subr.bf16.mxu0 0
  %1912 = vmatpush1.bf16.msra.mxu0 %v1413
  %1913 = vmatprep.subr.bf16.mxu0 0
  %1914 = vmatpush1.bf16.msra.mxu0 %v1412
  %1915 = vmatprep.subr.bf16.mxu0 0
  %1916 = vmatpush1.bf16.msra.mxu0 %v1411
  %1917 = vmatprep.subr.bf16.mxu0 0
  %1918 = vmatpush1.bf16.msra.mxu0 %v1410
  %1919 = vmatprep.subr.bf16.mxu0 0
  %1920 = vmatpush1.bf16.msra.mxu0 %v1409
  %1921 = vmatprep.subr.bf16.mxu0 0
  %1922 = vmatpush2.bf16.msra.mxu0 %v1424
  %1923 = vmatprep.subr.bf16.mxu0 0
  %1924 = vmatpush2.bf16.msra.mxu0 %v1423
  %1925 = vmatprep.subr.bf16.mxu0 0
  %1926 = vmatpush2.bf16.msra.mxu0 %v1422
  %1927 = vmatprep.subr.bf16.mxu0 0
  %1928 = vmatpush2.bf16.msra.mxu0 %v1421
  %1929 = vmatprep.subr.bf16.mxu0 0
  %1930 = vmatpush2.bf16.msra.mxu0 %v1420
  %1931 = vmatprep.subr.bf16.mxu0 0
  %1932 = vmatpush2.bf16.msra.mxu0 %v1419
  %1933 = vmatprep.subr.bf16.mxu0 0
  %1934 = vmatpush2.bf16.msra.mxu0 %v1418
  %1935 = vmatprep.subr.bf16.mxu0 0
  %1936 = vmatpush2.bf16.msra.mxu0 %v1417
  %1937 = vmatprep.mubr.bf16.mxu0 %v521
  %1938 = vmatmul.mubr.bf16.gmra.mxu0 %v520
  %v1939 = vpop.f32.mrf.mxu0
  %v1940 = vadd.f32 %v1899, %v1939
  %v1941 = vpop.f32.mrf.mxu0
  %v1942 = vpop.f32.mrf.mxu0
  %v1943 = vadd.f32 %v1902, %v1942
  %v1944 = vpop.f32.mrf.mxu0
  %1945 = vdwg.mxu0
  %1946 = vmatprep.subr.bf16.mxu0 0
  %1947 = vmatpush1.bf16.msra.mxu0 %v1432
  %1948 = vmatprep.subr.bf16.mxu0 0
  %1949 = vmatpush1.bf16.msra.mxu0 %v1431
  %1950 = vmatprep.subr.bf16.mxu0 0
  %1951 = vmatpush1.bf16.msra.mxu0 %v1430
  %1952 = vmatprep.subr.bf16.mxu0 0
  %1953 = vmatpush1.bf16.msra.mxu0 %v1429
  %1954 = vmatprep.subr.bf16.mxu0 0
  %1955 = vmatpush1.bf16.msra.mxu0 %v1428
  %1956 = vmatprep.subr.bf16.mxu0 0
  %1957 = vmatpush1.bf16.msra.mxu0 %v1427
  %1958 = vmatprep.subr.bf16.mxu0 0
  %1959 = vmatpush1.bf16.msra.mxu0 %v1426
  %1960 = vmatprep.subr.bf16.mxu0 0
  %1961 = vmatpush1.bf16.msra.mxu0 %v1425
  %1962 = vmatprep.subr.bf16.mxu0 0
  %1963 = vmatpush2.bf16.msra.mxu0 %v1440
  %1964 = vmatprep.subr.bf16.mxu0 0
  %1965 = vmatpush2.bf16.msra.mxu0 %v1439
  %1966 = vmatprep.subr.bf16.mxu0 0
  %1967 = vmatpush2.bf16.msra.mxu0 %v1438
  %1968 = vmatprep.subr.bf16.mxu0 0
  %1969 = vmatpush2.bf16.msra.mxu0 %v1437
  %1970 = vmatprep.subr.bf16.mxu0 0
  %1971 = vmatpush2.bf16.msra.mxu0 %v1436
  %1972 = vmatprep.subr.bf16.mxu0 0
  %1973 = vmatpush2.bf16.msra.mxu0 %v1435
  %1974 = vmatprep.subr.bf16.mxu0 0
  %1975 = vmatpush2.bf16.msra.mxu0 %v1434
  %1976 = vmatprep.subr.bf16.mxu0 0
  %1977 = vmatpush2.bf16.msra.mxu0 %v1433
  %1978 = vmatprep.mubr.bf16.mxu0 %v523
  %1979 = vmatmul.mubr.bf16.gmra.mxu0 %v522
  %v1980 = vpop.f32.mrf.mxu0
  %v1981 = vadd.f32 %v1940, %v1980
  %v1982 = vpop.f32.mrf.mxu0
  %v1983 = vpop.f32.mrf.mxu0
  %v1984 = vadd.f32 %v1943, %v1983
  %v1985 = vpop.f32.mrf.mxu0
  %1986 = vdwg.mxu0
  %1987 = vmatprep.subr.bf16.mxu0 0
  %1988 = vmatpush1.bf16.msra.mxu0 %v1448
  %1989 = vmatprep.subr.bf16.mxu0 0
  %1990 = vmatpush1.bf16.msra.mxu0 %v1447
  %1991 = vmatprep.subr.bf16.mxu0 0
  %1992 = vmatpush1.bf16.msra.mxu0 %v1446
  %1993 = vmatprep.subr.bf16.mxu0 0
  %1994 = vmatpush1.bf16.msra.mxu0 %v1445
  %1995 = vmatprep.subr.bf16.mxu0 0
  %1996 = vmatpush1.bf16.msra.mxu0 %v1444
  %1997 = vmatprep.subr.bf16.mxu0 0
  %1998 = vmatpush1.bf16.msra.mxu0 %v1443
  %1999 = vmatprep.subr.bf16.mxu0 0
  %2000 = vmatpush1.bf16.msra.mxu0 %v1442
  %2001 = vmatprep.subr.bf16.mxu0 0
  %2002 = vmatpush1.bf16.msra.mxu0 %v1441
  %2003 = vmatprep.subr.bf16.mxu0 0
  %2004 = vmatpush2.bf16.msra.mxu0 %v1456
  %2005 = vmatprep.subr.bf16.mxu0 0
  %2006 = vmatpush2.bf16.msra.mxu0 %v1455
  %2007 = vmatprep.subr.bf16.mxu0 0
  %2008 = vmatpush2.bf16.msra.mxu0 %v1454
  %2009 = vmatprep.subr.bf16.mxu0 0
  %2010 = vmatpush2.bf16.msra.mxu0 %v1453
  %2011 = vmatprep.subr.bf16.mxu0 0
  %2012 = vmatpush2.bf16.msra.mxu0 %v1452
  %2013 = vmatprep.subr.bf16.mxu0 0
  %2014 = vmatpush2.bf16.msra.mxu0 %v1451
  %2015 = vmatprep.subr.bf16.mxu0 0
  %2016 = vmatpush2.bf16.msra.mxu0 %v1450
  %2017 = vmatprep.subr.bf16.mxu0 0
  %2018 = vmatpush2.bf16.msra.mxu0 %v1449
  %2019 = vmatprep.mubr.bf16.mxu0 %v525
  %2020 = vmatmul.mubr.bf16.gmra.mxu0 %v524
  %v2021 = vpop.f32.mrf.mxu0
  %v2022 = vadd.f32 %v1981, %v2021
  %v2023 = vpop.f32.mrf.mxu0
  %v2024 = vpop.f32.mrf.mxu0
  %v2025 = vadd.f32 %v1984, %v2024
  %v2026 = vpop.f32.mrf.mxu0
  %2027 = vdwg.mxu0
  %2028 = vmatprep.subr.bf16.mxu0 0
  %2029 = vmatpush1.bf16.msra.mxu0 %v1464
  %2030 = vmatprep.subr.bf16.mxu0 0
  %2031 = vmatpush1.bf16.msra.mxu0 %v1463
  %2032 = vmatprep.subr.bf16.mxu0 0
  %2033 = vmatpush1.bf16.msra.mxu0 %v1462
  %2034 = vmatprep.subr.bf16.mxu0 0
  %2035 = vmatpush1.bf16.msra.mxu0 %v1461
  %2036 = vmatprep.subr.bf16.mxu0 0
  %2037 = vmatpush1.bf16.msra.mxu0 %v1460
  %2038 = vmatprep.subr.bf16.mxu0 0
  %2039 = vmatpush1.bf16.msra.mxu0 %v1459
  %2040 = vmatprep.subr.bf16.mxu0 0
  %2041 = vmatpush1.bf16.msra.mxu0 %v1458
  %2042 = vmatprep.subr.bf16.mxu0 0
  %2043 = vmatpush1.bf16.msra.mxu0 %v1457
  %2044 = vmatprep.subr.bf16.mxu0 0
  %2045 = vmatpush2.bf16.msra.mxu0 %v1472
  %2046 = vmatprep.subr.bf16.mxu0 0
  %2047 = vmatpush2.bf16.msra.mxu0 %v1471
  %2048 = vmatprep.subr.bf16.mxu0 0
  %2049 = vmatpush2.bf16.msra.mxu0 %v1470
  %2050 = vmatprep.subr.bf16.mxu0 0
  %2051 = vmatpush2.bf16.msra.mxu0 %v1469
  %2052 = vmatprep.subr.bf16.mxu0 0
  %2053 = vmatpush2.bf16.msra.mxu0 %v1468
  %2054 = vmatprep.subr.bf16.mxu0 0
  %2055 = vmatpush2.bf16.msra.mxu0 %v1467
  %2056 = vmatprep.subr.bf16.mxu0 0
  %2057 = vmatpush2.bf16.msra.mxu0 %v1466
  %2058 = vmatprep.subr.bf16.mxu0 0
  %2059 = vmatpush2.bf16.msra.mxu0 %v1465
  %2060 = vmatprep.mubr.bf16.mxu0 %v527
  %2061 = vmatmul.mubr.bf16.gmra.mxu0 %v526
  %v2062 = vpop.f32.mrf.mxu0
  %v2063 = vadd.f32 %v2022, %v2062
  %v2064 = vpop.f32.mrf.mxu0
  %v2065 = vpop.f32.mrf.mxu0
  %v2066 = vadd.f32 %v2025, %v2065
  %v2067 = vpop.f32.mrf.mxu0
  %2068 = vdwg.mxu0
  %2069 = vmatprep.subr.bf16.mxu0 0
  %2070 = vmatpush1.bf16.msra.mxu0 %v1480
  %2071 = vmatprep.subr.bf16.mxu0 0
  %2072 = vmatpush1.bf16.msra.mxu0 %v1479
  %2073 = vmatprep.subr.bf16.mxu0 0
  %2074 = vmatpush1.bf16.msra.mxu0 %v1478
  %2075 = vmatprep.subr.bf16.mxu0 0
  %2076 = vmatpush1.bf16.msra.mxu0 %v1477
  %2077 = vmatprep.subr.bf16.mxu0 0
  %2078 = vmatpush1.bf16.msra.mxu0 %v1476
  %2079 = vmatprep.subr.bf16.mxu0 0
  %2080 = vmatpush1.bf16.msra.mxu0 %v1475
  %2081 = vmatprep.subr.bf16.mxu0 0
  %2082 = vmatpush1.bf16.msra.mxu0 %v1474
  %2083 = vmatprep.subr.bf16.mxu0 0
  %2084 = vmatpush1.bf16.msra.mxu0 %v1473
  %2085 = vmatprep.subr.bf16.mxu0 0
  %2086 = vmatpush2.bf16.msra.mxu0 %v1488
  %2087 = vmatprep.subr.bf16.mxu0 0
  %2088 = vmatpush2.bf16.msra.mxu0 %v1487
  %2089 = vmatprep.subr.bf16.mxu0 0
  %2090 = vmatpush2.bf16.msra.mxu0 %v1486
  %2091 = vmatprep.subr.bf16.mxu0 0
  %2092 = vmatpush2.bf16.msra.mxu0 %v1485
  %2093 = vmatprep.subr.bf16.mxu0 0
  %2094 = vmatpush2.bf16.msra.mxu0 %v1484
  %2095 = vmatprep.subr.bf16.mxu0 0
  %2096 = vmatpush2.bf16.msra.mxu0 %v1483
  %2097 = vmatprep.subr.bf16.mxu0 0
  %2098 = vmatpush2.bf16.msra.mxu0 %v1482
  %2099 = vmatprep.subr.bf16.mxu0 0
  %2100 = vmatpush2.bf16.msra.mxu0 %v1481
  %2101 = vmatprep.mubr.bf16.mxu0 %v529
  %2102 = vmatmul.mubr.bf16.gmra.mxu0 %v528
  %v2103 = vpop.f32.mrf.mxu0
  %v2104 = vadd.f32 %v2063, %v2103
  %v2105 = vpop.f32.mrf.mxu0
  %v2106 = vpop.f32.mrf.mxu0
  %v2107 = vadd.f32 %v2066, %v2106
  %v2108 = vpop.f32.mrf.mxu0
  %2109 = vdwg.mxu0
  %2110 = vmatprep.subr.bf16.mxu0 0
  %2111 = vmatpush1.bf16.msra.mxu0 %v1496
  %2112 = vmatprep.subr.bf16.mxu0 0
  %2113 = vmatpush1.bf16.msra.mxu0 %v1495
  %2114 = vmatprep.subr.bf16.mxu0 0
  %2115 = vmatpush1.bf16.msra.mxu0 %v1494
  %2116 = vmatprep.subr.bf16.mxu0 0
  %2117 = vmatpush1.bf16.msra.mxu0 %v1493
  %2118 = vmatprep.subr.bf16.mxu0 0
  %2119 = vmatpush1.bf16.msra.mxu0 %v1492
  %2120 = vmatprep.subr.bf16.mxu0 0
  %2121 = vmatpush1.bf16.msra.mxu0 %v1491
  %2122 = vmatprep.subr.bf16.mxu0 0
  %2123 = vmatpush1.bf16.msra.mxu0 %v1490
  %2124 = vmatprep.subr.bf16.mxu0 0
  %2125 = vmatpush1.bf16.msra.mxu0 %v1489
  %2126 = vmatprep.subr.bf16.mxu0 0
  %2127 = vmatpush2.bf16.msra.mxu0 %v1504
  %2128 = vmatprep.subr.bf16.mxu0 0
  %2129 = vmatpush2.bf16.msra.mxu0 %v1503
  %2130 = vmatprep.subr.bf16.mxu0 0
  %2131 = vmatpush2.bf16.msra.mxu0 %v1502
  %2132 = vmatprep.subr.bf16.mxu0 0
  %2133 = vmatpush2.bf16.msra.mxu0 %v1501
  %2134 = vmatprep.subr.bf16.mxu0 0
  %2135 = vmatpush2.bf16.msra.mxu0 %v1500
  %2136 = vmatprep.subr.bf16.mxu0 0
  %2137 = vmatpush2.bf16.msra.mxu0 %v1499
  %2138 = vmatprep.subr.bf16.mxu0 0
  %2139 = vmatpush2.bf16.msra.mxu0 %v1498
  %2140 = vmatprep.subr.bf16.mxu0 0
  %2141 = vmatpush2.bf16.msra.mxu0 %v1497
  %2142 = vmatprep.mubr.bf16.mxu0 %v531
  %2143 = vmatmul.mubr.bf16.gmra.mxu0 %v530
  %v2144 = vpop.f32.mrf.mxu0
  %v2145 = vadd.f32 %v2104, %v2144
  %v2146 = vpop.f32.mrf.mxu0
  %v2147 = vpop.f32.mrf.mxu0
  %v2148 = vadd.f32 %v2107, %v2147
  %v2149 = vpop.f32.mrf.mxu0
  %2150 = vdwg.mxu0
  %2151 = vmatprep.subr.bf16.mxu0 0
  %2152 = vmatpush1.bf16.msra.mxu0 %v1512
  %2153 = vmatprep.subr.bf16.mxu0 0
  %2154 = vmatpush1.bf16.msra.mxu0 %v1511
  %2155 = vmatprep.subr.bf16.mxu0 0
  %2156 = vmatpush1.bf16.msra.mxu0 %v1510
  %2157 = vmatprep.subr.bf16.mxu0 0
  %2158 = vmatpush1.bf16.msra.mxu0 %v1509
  %2159 = vmatprep.subr.bf16.mxu0 0
  %2160 = vmatpush1.bf16.msra.mxu0 %v1508
  %2161 = vmatprep.subr.bf16.mxu0 0
  %2162 = vmatpush1.bf16.msra.mxu0 %v1507
  %2163 = vmatprep.subr.bf16.mxu0 0
  %2164 = vmatpush1.bf16.msra.mxu0 %v1506
  %2165 = vmatprep.subr.bf16.mxu0 0
  %2166 = vmatpush1.bf16.msra.mxu0 %v1505
  %2167 = vmatprep.subr.bf16.mxu0 0
  %2168 = vmatpush2.bf16.msra.mxu0 %v1520
  %2169 = vmatprep.subr.bf16.mxu0 0
  %2170 = vmatpush2.bf16.msra.mxu0 %v1519
  %2171 = vmatprep.subr.bf16.mxu0 0
  %2172 = vmatpush2.bf16.msra.mxu0 %v1518
  %2173 = vmatprep.subr.bf16.mxu0 0
  %2174 = vmatpush2.bf16.msra.mxu0 %v1517
  %2175 = vmatprep.subr.bf16.mxu0 0
  %2176 = vmatpush2.bf16.msra.mxu0 %v1516
  %2177 = vmatprep.subr.bf16.mxu0 0
  %2178 = vmatpush2.bf16.msra.mxu0 %v1515
  %2179 = vmatprep.subr.bf16.mxu0 0
  %2180 = vmatpush2.bf16.msra.mxu0 %v1514
  %2181 = vmatprep.subr.bf16.mxu0 0
  %2182 = vmatpush2.bf16.msra.mxu0 %v1513
  %2183 = vmatprep.mubr.bf16.mxu0 %v533
  %2184 = vmatmul.mubr.bf16.gmra.mxu0 %v532
  %v2185 = vpop.f32.mrf.mxu0
  %v2186 = vadd.f32 %v2145, %v2185
  %v2187 = vpop.f32.mrf.mxu0
  %v2188 = vpop.f32.mrf.mxu0
  %v2189 = vadd.f32 %v2148, %v2188
  %v2190 = vpop.f32.mrf.mxu0
  %2191 = vdwg.mxu0
  %2192 = vmatprep.subr.bf16.mxu0 0
  %2193 = vmatpush1.bf16.msra.mxu0 %v1528
  %2194 = vmatprep.subr.bf16.mxu0 0
  %2195 = vmatpush1.bf16.msra.mxu0 %v1527
  %2196 = vmatprep.subr.bf16.mxu0 0
  %2197 = vmatpush1.bf16.msra.mxu0 %v1526
  %2198 = vmatprep.subr.bf16.mxu0 0
  %2199 = vmatpush1.bf16.msra.mxu0 %v1525
  %2200 = vmatprep.subr.bf16.mxu0 0
  %2201 = vmatpush1.bf16.msra.mxu0 %v1524
  %2202 = vmatprep.subr.bf16.mxu0 0
  %2203 = vmatpush1.bf16.msra.mxu0 %v1523
  %2204 = vmatprep.subr.bf16.mxu0 0
  %2205 = vmatpush1.bf16.msra.mxu0 %v1522
  %2206 = vmatprep.subr.bf16.mxu0 0
  %2207 = vmatpush1.bf16.msra.mxu0 %v1521
  %2208 = vmatprep.subr.bf16.mxu0 0
  %2209 = vmatpush2.bf16.msra.mxu0 %v1536
  %2210 = vmatprep.subr.bf16.mxu0 0
  %2211 = vmatpush2.bf16.msra.mxu0 %v1535
  %2212 = vmatprep.subr.bf16.mxu0 0
  %2213 = vmatpush2.bf16.msra.mxu0 %v1534
  %2214 = vmatprep.subr.bf16.mxu0 0
  %2215 = vmatpush2.bf16.msra.mxu0 %v1533
  %2216 = vmatprep.subr.bf16.mxu0 0
  %2217 = vmatpush2.bf16.msra.mxu0 %v1532
  %2218 = vmatprep.subr.bf16.mxu0 0
  %2219 = vmatpush2.bf16.msra.mxu0 %v1531
  %2220 = vmatprep.subr.bf16.mxu0 0
  %2221 = vmatpush2.bf16.msra.mxu0 %v1530
  %2222 = vmatprep.subr.bf16.mxu0 0
  %2223 = vmatpush2.bf16.msra.mxu0 %v1529
  %2224 = vmatprep.mubr.bf16.mxu0 %v535
  %2225 = vmatmul.mubr.bf16.gmra.mxu0 %v534
  %v2226 = vpop.f32.mrf.mxu0
  %v2227 = vadd.f32 %v2186, %v2226
  %v2228 = vpop.f32.mrf.mxu0
  %v2229 = vpop.f32.mrf.mxu0
  %v2230 = vadd.f32 %v2189, %v2229
  %v2231 = vpop.f32.mrf.mxu0
  %2232 = vdwg.mxu0
  %2233 = vmatprep.subr.bf16.mxu0 0
  %2234 = vmatpush1.bf16.msra.mxu0 0
  %2235 = vmatprep.subr.bf16.mxu0 0
  %2236 = vmatpush1.bf16.msra.mxu0 0
  %2237 = vmatprep.subr.bf16.mxu0 0
  %2238 = vmatpush1.bf16.msra.mxu0 0
  %2239 = vmatprep.subr.bf16.mxu0 0
  %2240 = vmatpush1.bf16.msra.mxu0 0
  %2241 = vmatprep.subr.bf16.mxu0 0
  %2242 = vmatpush1.bf16.msra.mxu0 %v1540
  %2243 = vmatprep.subr.bf16.mxu0 0
  %2244 = vmatpush1.bf16.msra.mxu0 %v1539
  %2245 = vmatprep.subr.bf16.mxu0 0
  %2246 = vmatpush1.bf16.msra.mxu0 %v1538
  %2247 = vmatprep.subr.bf16.mxu0 0
  %2248 = vmatpush1.bf16.msra.mxu0 %v1537
  %2249 = vmatprep.subr.bf16.mxu0 0
  %2250 = vmatpush2.bf16.msra.mxu0 0
  %2251 = vmatprep.subr.bf16.mxu0 0
  %2252 = vmatpush2.bf16.msra.mxu0 0
  %2253 = vmatprep.subr.bf16.mxu0 0
  %2254 = vmatpush2.bf16.msra.mxu0 0
  %2255 = vmatprep.subr.bf16.mxu0 0
  %2256 = vmatpush2.bf16.msra.mxu0 0
  %2257 = vmatprep.subr.bf16.mxu0 0
  %2258 = vmatpush2.bf16.msra.mxu0 0
  %2259 = vmatprep.subr.bf16.mxu0 0
  %2260 = vmatpush2.bf16.msra.mxu0 0
  %2261 = vmatprep.subr.bf16.mxu0 0
  %2262 = vmatpush2.bf16.msra.mxu0 0
  %2263 = vmatprep.subr.bf16.mxu0 0
  %2264 = vmatpush2.bf16.msra.mxu0 0
  %2265 = vmatprep.mubr.bf16.mxu0 0
  %2266 = vmatmul.mubr.bf16.gmra.mxu0 %v1739
  %v2267 = vpop.f32.mrf.mxu0
  %v2268 = vadd.f32 %v2227, %v2267
  %v2269 = vpop.f32.mrf.mxu0
  %v2270 = vpop.f32.mrf.mxu0
  %v2271 = vadd.f32 %v2230, %v2270
  %v2272 = vpop.f32.mrf.mxu0
  %2273 = vdwg.mxu0
  %v2274 = vld [vmem:[%s2] sm:$0x1]
  %v2276 = vlaneseq
  %v2277 = vshrl.u32 %v2276, 7
  %v2278 = vsub.s32 0, %v2277
  %v2279 = vrot.slane %v2274, %v2278
  %v2281 = vmul.f32 %v2268, %v2279
  %v2282 = vmul.f32 %v2271, %v2279
  %v2283 = vld [vmem:[%s3] sm:$0x1]
  %v2285 = vlaneseq
  %v2286 = vshrl.u32 %v2285, 7
  %v2287 = vsub.s32 0, %v2286
  %v2288 = vrot.slane %v2283, %v2287
  %v2290 = vadd.f32 %v2281, %v2288
  %v2291 = vadd.f32 %v2282, %v2288
  %2292 = vst [vmem:[%s4] sm:$0xff] %v2290
  %2293 = vst [vmem:[%s4 + $0x8] sm:$0xff] %v2291
  // Predicated region
  $region18: #{simple_model_forward.9} parent=0 // pred_check
    _
  $region19: #{simple_model_forward.9} parent=0 // pred_check_branch
    %2295 = sbr.rel (0) target = $region21
  $region20: #{simple_model_forward.9} parent=0 // pred_region
    _
  $region21: #{simple_model_forward.9} parent=0 // pred_fallthru
    _
  // Predicated region
  $region22: #{simple_model_forward.9} parent=0 // pred_check
    _
  $region23: #{simple_model_forward.9} parent=0 // pred_check_branch
    %2297 = sbr.rel (0) target = $region25
  $region24: #{simple_model_forward.9} parent=0 // pred_region
    _
  $region25: #{simple_model_forward.9} parent=0 // pred_fallthru
    _

</llo_original>
